<compile_context>
chip_gen: v7x
topology: tpu7x:2x2x1
jax: 0.10.0
libtpu: 0.0.40
codegen_flags: <defaults>
</compile_context>

<pallas_src>
import math
import functools

import jax
import jax.numpy as jnp
from jax import lax
from jax.experimental import pallas as pl
from jax.experimental.pallas import tpu as pltpu


def _vmem_limit_bytes():
    # Generation-aware VMEM budget: 3/4 of physical (96 MiB v5e/v6e, 48 MiB v7x).
    try:
        return int(pltpu.get_tpu_info().vmem_capacity_bytes * 3 // 4)
    except Exception:
        return 32 * 1024 * 1024  # conservative fallback


# ----------------------------------------------------------------------------
# Fused kernel: per batch element, QKV proj -> softmax(QK^T)V -> output proj.
# ----------------------------------------------------------------------------
def _mha_fused_kernel(q_ref, k_ref, v_ref, wqkv_ref, bqkv_ref, wo_ref, bo_ref,
                      o_ref, *, n_head):
    # q_ref/k_ref/v_ref/o_ref : (1, T, C) f32 blocks (one batch element).
    # wqkv_ref : (3, H, C, hd) bf16 resident  (Q weights pre-scaled by 1/sqrt(hd))
    # bqkv_ref : (3, H, 1, hd) f32  resident  (Q bias   pre-scaled by 1/sqrt(hd))
    # wo_ref   : (H, hd, C)    bf16 resident
    # bo_ref   : (1, C)        f32  resident
    T, C = q_ref.shape[1], q_ref.shape[2]
    H = n_head
    hd = C // H
    # Contract lhs dim 2 with rhs dim 1, batch over the leading head dim.
    bdims = (((2,), (1,)), ((0,), (0,)))

    def proj(x_ref, idx):
        # (T, C) -> per-head (H, T, hd): broadcast x along a NEW leading head dim
        # (cheap, no lane shuffles) and batch-matmul against per-head weights.
        xb = jnp.broadcast_to(x_ref[0].astype(jnp.bfloat16)[None], (H, T, C))
        y = lax.dot_general(xb, wqkv_ref[idx], bdims,
                            preferred_element_type=jnp.float32)
        return y + bqkv_ref[idx]                                   # (H, T, hd) f32

    qh = proj(q_ref, 0)                        # 1/sqrt(hd) already folded in
    kh = proj(k_ref, 1)
    vh = proj(v_ref, 2)

    # Scores (H, T, T): leading-batch matmul contracting the head-feature dim.
    s = lax.dot_general(qh.astype(jnp.bfloat16), kh.astype(jnp.bfloat16),
                        (((2,), (2,)), ((0,), (0,))),
                        preferred_element_type=jnp.float32)
    # Non-causal softmax in f32 (is_causal=False).
    m = jnp.max(s, axis=-1, keepdims=True)
    p = jnp.exp(s - m)
    l = jnp.sum(p, axis=-1, keepdims=True)
    p = p * pl.reciprocal(l, approx=True)                          # EUP slot
    # TODO(synk): attn_dropout omitted (dropout=0.0 / eval mode).

    # Attention output (H, T, hd).
    yh = lax.dot_general(p.astype(jnp.bfloat16), vh.astype(jnp.bfloat16),
                         bdims, preferred_element_type=jnp.float32)

    # Output projection: per-head (T, hd) @ (hd, C), summed over heads == y @ Wo.
    oz = lax.dot_general(yh.astype(jnp.bfloat16), wo_ref[...],
                         bdims, preferred_element_type=jnp.float32)  # (H, T, C)
    # TODO(synk): resid_dropout omitted (dropout=0.0 / eval mode).
    o_ref[0] = jnp.sum(oz, axis=0) + bo_ref[...]   # lane-dense (T, C) store


def _fused_forward(prep, query, key, value, *, single_buffer_weights):
    B, T, C = query.shape
    H = prep["n_head"]
    hd = C // H
    kern = functools.partial(_mha_fused_kernel, n_head=H)

    def const_spec(shape):
        nd = len(shape)
        kwargs = {}
        if single_buffer_weights:
            kwargs["pipeline_mode"] = pl.Buffered(1)   # constant block: no 2nd buffer
        return pl.BlockSpec(shape, lambda b, _nd=nd: (0,) * _nd, **kwargs)

    act_spec = pl.BlockSpec((1, T, C), lambda b: (b, 0, 0))

    cost = pl.CostEstimate(
        flops=B * (8 * T * C * C + 4 * T * T * C),   # qkv + out proj + scores + AV
        transcendentals=B * H * T * T,
        bytes_accessed=16 * B * T * C + 8 * C * C + 16 * C,
    )
    return pl.pallas_call(
        kern,
        out_shape=jax.ShapeDtypeStruct((B, T, C), jnp.float32),
        grid=(B,),
        in_specs=[
            act_spec, act_spec, act_spec,
            const_spec((3, H, C, hd)),    # wqkv (resident)
            const_spec((3, H, 1, hd)),    # bqkv (resident)
            const_spec((H, hd, C)),       # wo   (resident)
            const_spec((1, C)),           # bo   (resident)
        ],
        out_specs=act_spec,
        compiler_params=pltpu.CompilerParams(
            dimension_semantics=("parallel",),
            vmem_limit_bytes=_vmem_limit_bytes()),
        cost_estimate=cost,
    )(query, key, value, prep["wqkv"], prep["bqkv"], prep["wo"], prep["bo"])


def multi_head_attention(prep, query, key, value):
    # TODO(synk): for long T, switch the attention core to flash-style KV tiling
    # (online softmax, grid=(B, T//tq)) sized against v7x's 64 MiB VMEM.
    try:
        return _fused_forward(prep, query, key, value, single_buffer_weights=True)
    except Exception:
        # Fallback for Pallas versions without BlockSpec(pipeline_mode=...).
        return _fused_forward(prep, query, key, value, single_buffer_weights=False)


# ----------------------------------------------------------------------------
# One-time host-side parameter prep (hoisted out of the forward pass).
# ----------------------------------------------------------------------------
def prepare_params(params, n_head):
    C = params["wq"].shape[0]
    hd = C // n_head
    scale = 1.0 / math.sqrt(hd)

    def per_head(w):                       # (C, C) -> (H, C, hd)
        return jnp.transpose(w.reshape(C, n_head, hd), (1, 0, 2))

    wqkv = jnp.stack([per_head(params["wq"] * scale),   # fold 1/sqrt(hd) into Q
                      per_head(params["wk"]),
                      per_head(params["wv"])]).astype(jnp.bfloat16)
    bqkv = jnp.stack([(params["bq"] * scale).reshape(n_head, 1, hd),
                      params["bk"].reshape(n_head, 1, hd),
                      params["bv"].reshape(n_head, 1, hd)]).astype(jnp.float32)
    wo = params["wo"].reshape(n_head, hd, C).astype(jnp.bfloat16)
    bo = params["bo"].reshape(1, C).astype(jnp.float32)
    return {"wqkv": wqkv, "bqkv": bqkv, "wo": wo, "bo": bo, "n_head": n_head}


# ----------------------------------------------------------------------------
# Deterministic parameter init (PyTorch nn.Linear-style uniform) + f32 reference
# ----------------------------------------------------------------------------
def init_params(key, n_embd):
    bound = 1.0 / math.sqrt(n_embd)
    names = ["wq", "bq", "wk", "bk", "wv", "bv", "wo", "bo"]
    keys = jax.random.split(key, len(names))
    params = {}
    for name, k in zip(names, keys):
        shape = (n_embd, n_embd) if name.startswith("w") else (n_embd,)
        params[name] = jax.random.uniform(
            k, shape, jnp.float32, minval=-bound, maxval=bound)
    return params


def reference_mha(params, query, key, value, n_head):
    B, T, C = query.shape
    hd = C // n_head
    q = query @ params["wq"] + params["bq"]
    k = key @ params["wk"] + params["bk"]
    v = value @ params["wv"] + params["bv"]

    def split(x):
        return x.reshape(B, T, n_head, hd).transpose(0, 2, 1, 3)

    q, k, v = split(q), split(k), split(v)
    s = (q @ k.transpose(0, 1, 3, 2)) / math.sqrt(hd)
    p = jax.nn.softmax(s, axis=-1)
    y = (p @ v).transpose(0, 2, 1, 3).reshape(B, T, C)
    return y @ params["wo"] + params["bo"]


if __name__ == "__main__":
    # config: n_embd=32, n_head=4, bias=True, dropout=0.0, is_causal=False
    B, T, C, H = 2, 8, 32, 4

    root = jax.random.PRNGKey(0)
    kp, kq, kk, kv = jax.random.split(root, 4)
    params = init_params(kp, C)
    prep = prepare_params(params, n_head=H)   # one-time weight prep

    query = jax.random.normal(kq, (B, T, C), jnp.float32)
    key_in = jax.random.normal(kk, (B, T, C), jnp.float32)
    value = jax.random.normal(kv, (B, T, C), jnp.float32)

    out = multi_head_attention(prep, query, key_in, value)
    jax.block_until_ready(out)
    assert out.shape == (B, T, C)

    ref = reference_mha(params, query, key_in, value, n_head=H)
    max_err = float(jnp.max(jnp.abs(out - ref)))
    assert jnp.allclose(out, ref, atol=5e-2, rtol=5e-2), f"max abs err {max_err}"
    print("KERNEL_OK")
</pallas_src>

<mosaic_0001>
module attributes {stable_mosaic.version = 11 : i64} {
  func.func @_mha_fused_kernel(%arg0: i32, %arg1: memref<1x8x32xf32, #tpu.memory_space<vmem>>, %arg2: memref<1x8x32xf32, #tpu.memory_space<vmem>>, %arg3: memref<1x8x32xf32, #tpu.memory_space<vmem>>, %arg4: memref<3x4x32x8xbf16, #tpu.memory_space<vmem>>, %arg5: memref<3x4x1x8xf32, #tpu.memory_space<vmem>>, %arg6: memref<4x8x32xbf16, #tpu.memory_space<vmem>>, %arg7: memref<1x32xf32, #tpu.memory_space<vmem>>, %arg8: memref<1x8x32xf32, #tpu.memory_space<vmem>>) attributes {dimension_semantics = [#tpu.dimension_semantics<parallel>], iteration_bounds = array<i64: 2>, scalar_prefetch = 0 : i64, scratch_operands = 0 : i64, tpu.core_type = #tpu.core_type<tc>, window_params = [{transform_indices = @transform_0, window_bounds = array<i64: 1, 8, 32>}, {transform_indices = @transform_1, window_bounds = array<i64: 1, 8, 32>}, {transform_indices = @transform_2, window_bounds = array<i64: 1, 8, 32>}, {pipeline_mode = #tpu.pipeline_mode<synchronous>, transform_indices = @transform_3, window_bounds = array<i64: 3, 4, 32, 8>}, {pipeline_mode = #tpu.pipeline_mode<synchronous>, transform_indices = @transform_4, window_bounds = array<i64: 3, 4, 1, 8>}, {pipeline_mode = #tpu.pipeline_mode<synchronous>, transform_indices = @transform_5, window_bounds = array<i64: 4, 8, 32>}, {pipeline_mode = #tpu.pipeline_mode<synchronous>, transform_indices = @transform_6, window_bounds = array<i64: 1, 32>}, {transform_indices = @transform_7, window_bounds = array<i64: 1, 8, 32>}]} {
    %c0 = arith.constant 0 : index
    %c0_0 = arith.constant 0 : index
    %c0_1 = arith.constant 0 : index
    %0 = vector.load %arg1[%c0, %c0_0, %c0_1] : memref<1x8x32xf32, #tpu.memory_space<vmem>>, vector<1x8x32xf32>
    %1 = vector.shape_cast %0 : vector<1x8x32xf32> to vector<8x32xf32>
    %2 = arith.truncf %1 : vector<8x32xf32> to vector<8x32xbf16>
    %3 = vector.shape_cast %2 : vector<8x32xbf16> to vector<1x8x32xbf16>
    %4 = vector.shape_cast %3 : vector<1x8x32xbf16> to vector<1x8x32xbf16>
    %5 = vector.broadcast %4 : vector<1x8x32xbf16> to vector<4x8x32xbf16>
    %c0_2 = arith.constant 0 : index
    %c0_3 = arith.constant 0 : index
    %c0_4 = arith.constant 0 : index
    %c0_5 = arith.constant 0 : index
    %6 = vector.load %arg4[%c0_2, %c0_3, %c0_4, %c0_5] : memref<3x4x32x8xbf16, #tpu.memory_space<vmem>>, vector<1x4x32x8xbf16>
    %7 = vector.shape_cast %6 : vector<1x4x32x8xbf16> to vector<4x32x8xbf16>
    %cst = arith.constant dense<0.000000e+00> : vector<4x8x8xf32>
    %8 = tpu.matmul %5, %7, %cst {dimension_numbers = #tpu.dot_dimension_numbers<[2], [1], [1], [2], [0, 0, 0, 1, 1, 2], [0], [0]>} : vector<4x8x32xbf16>, vector<4x32x8xbf16>, vector<4x8x8xf32> -> vector<4x8x8xf32>
    %c0_6 = arith.constant 0 : index
    %c0_7 = arith.constant 0 : index
    %c0_8 = arith.constant 0 : index
    %c0_9 = arith.constant 0 : index
    %9 = vector.load %arg5[%c0_6, %c0_7, %c0_8, %c0_9] : memref<3x4x1x8xf32, #tpu.memory_space<vmem>>, vector<1x4x1x8xf32>
    %10 = vector.shape_cast %9 : vector<1x4x1x8xf32> to vector<4x1x8xf32>
    %11 = vector.broadcast %10 : vector<4x1x8xf32> to vector<4x8x8xf32>
    %12 = arith.addf %8, %11 : vector<4x8x8xf32>
    %c0_10 = arith.constant 0 : index
    %c0_11 = arith.constant 0 : index
    %c0_12 = arith.constant 0 : index
    %13 = vector.load %arg2[%c0_10, %c0_11, %c0_12] : memref<1x8x32xf32, #tpu.memory_space<vmem>>, vector<1x8x32xf32>
    %14 = vector.shape_cast %13 : vector<1x8x32xf32> to vector<8x32xf32>
    %15 = arith.truncf %14 : vector<8x32xf32> to vector<8x32xbf16>
    %16 = vector.shape_cast %15 : vector<8x32xbf16> to vector<1x8x32xbf16>
    %17 = vector.shape_cast %16 : vector<1x8x32xbf16> to vector<1x8x32xbf16>
    %18 = vector.broadcast %17 : vector<1x8x32xbf16> to vector<4x8x32xbf16>
    %c1 = arith.constant 1 : index
    %c0_13 = arith.constant 0 : index
    %c0_14 = arith.constant 0 : index
    %c0_15 = arith.constant 0 : index
    %19 = vector.load %arg4[%c1, %c0_13, %c0_14, %c0_15] : memref<3x4x32x8xbf16, #tpu.memory_space<vmem>>, vector<1x4x32x8xbf16>
    %20 = vector.shape_cast %19 : vector<1x4x32x8xbf16> to vector<4x32x8xbf16>
    %cst_16 = arith.constant dense<0.000000e+00> : vector<4x8x8xf32>
    %21 = tpu.matmul %18, %20, %cst_16 {dimension_numbers = #tpu.dot_dimension_numbers<[2], [1], [1], [2], [0, 0, 0, 1, 1, 2], [0], [0]>} : vector<4x8x32xbf16>, vector<4x32x8xbf16>, vector<4x8x8xf32> -> vector<4x8x8xf32>
    %c1_17 = arith.constant 1 : index
    %c0_18 = arith.constant 0 : index
    %c0_19 = arith.constant 0 : index
    %c0_20 = arith.constant 0 : index
    %22 = vector.load %arg5[%c1_17, %c0_18, %c0_19, %c0_20] : memref<3x4x1x8xf32, #tpu.memory_space<vmem>>, vector<1x4x1x8xf32>
    %23 = vector.shape_cast %22 : vector<1x4x1x8xf32> to vector<4x1x8xf32>
    %24 = vector.broadcast %23 : vector<4x1x8xf32> to vector<4x8x8xf32>
    %25 = arith.addf %21, %24 : vector<4x8x8xf32>
    %c0_21 = arith.constant 0 : index
    %c0_22 = arith.constant 0 : index
    %c0_23 = arith.constant 0 : index
    %26 = vector.load %arg3[%c0_21, %c0_22, %c0_23] : memref<1x8x32xf32, #tpu.memory_space<vmem>>, vector<1x8x32xf32>
    %27 = vector.shape_cast %26 : vector<1x8x32xf32> to vector<8x32xf32>
    %28 = arith.truncf %27 : vector<8x32xf32> to vector<8x32xbf16>
    %29 = vector.shape_cast %28 : vector<8x32xbf16> to vector<1x8x32xbf16>
    %30 = vector.shape_cast %29 : vector<1x8x32xbf16> to vector<1x8x32xbf16>
    %31 = vector.broadcast %30 : vector<1x8x32xbf16> to vector<4x8x32xbf16>
    %c2 = arith.constant 2 : index
    %c0_24 = arith.constant 0 : index
    %c0_25 = arith.constant 0 : index
    %c0_26 = arith.constant 0 : index
    %32 = vector.load %arg4[%c2, %c0_24, %c0_25, %c0_26] : memref<3x4x32x8xbf16, #tpu.memory_space<vmem>>, vector<1x4x32x8xbf16>
    %33 = vector.shape_cast %32 : vector<1x4x32x8xbf16> to vector<4x32x8xbf16>
    %cst_27 = arith.constant dense<0.000000e+00> : vector<4x8x8xf32>
    %34 = tpu.matmul %31, %33, %cst_27 {dimension_numbers = #tpu.dot_dimension_numbers<[2], [1], [1], [2], [0, 0, 0, 1, 1, 2], [0], [0]>} : vector<4x8x32xbf16>, vector<4x32x8xbf16>, vector<4x8x8xf32> -> vector<4x8x8xf32>
    %c2_28 = arith.constant 2 : index
    %c0_29 = arith.constant 0 : index
    %c0_30 = arith.constant 0 : index
    %c0_31 = arith.constant 0 : index
    %35 = vector.load %arg5[%c2_28, %c0_29, %c0_30, %c0_31] : memref<3x4x1x8xf32, #tpu.memory_space<vmem>>, vector<1x4x1x8xf32>
    %36 = vector.shape_cast %35 : vector<1x4x1x8xf32> to vector<4x1x8xf32>
    %37 = vector.broadcast %36 : vector<4x1x8xf32> to vector<4x8x8xf32>
    %38 = arith.addf %34, %37 : vector<4x8x8xf32>
    %39 = arith.truncf %12 : vector<4x8x8xf32> to vector<4x8x8xbf16>
    %40 = arith.truncf %25 : vector<4x8x8xf32> to vector<4x8x8xbf16>
    %cst_32 = arith.constant dense<0.000000e+00> : vector<4x8x8xf32>
    %41 = tpu.matmul %39, %40, %cst_32 {dimension_numbers = #tpu.dot_dimension_numbers<[2], [2], [1], [1], [0, 0, 0, 1, 1, 1], [0], [0]>} : vector<4x8x8xbf16>, vector<4x8x8xbf16>, vector<4x8x8xf32> -> vector<4x8x8xf32>
    %cst_33 = arith.constant dense<0xFF800000> : vector<4x8xf32>
    %42 = vector.multi_reduction <maximumf>, %41, %cst_33 [2] : vector<4x8x8xf32> to vector<4x8xf32>
    %43 = vector.shape_cast %42 : vector<4x8xf32> to vector<4x8x1xf32>
    %44 = vector.broadcast %43 : vector<4x8x1xf32> to vector<4x8x8xf32>
    %45 = arith.subf %41, %44 : vector<4x8x8xf32>
    %46 = math.exp %45 : vector<4x8x8xf32>
    %cst_34 = arith.constant dense<0.000000e+00> : vector<4x8xf32>
    %47 = vector.multi_reduction <add>, %46, %cst_34 [2] : vector<4x8x8xf32> to vector<4x8xf32>
    %48 = vector.shape_cast %47 : vector<4x8xf32> to vector<4x8x1xf32>
    %49 = tpu.reciprocal %48 {approx = true} : vector<4x8x1xf32> -> vector<4x8x1xf32>
    %50 = vector.broadcast %49 : vector<4x8x1xf32> to vector<4x8x8xf32>
    %51 = arith.mulf %46, %50 : vector<4x8x8xf32>
    %52 = arith.truncf %51 : vector<4x8x8xf32> to vector<4x8x8xbf16>
    %53 = arith.truncf %38 : vector<4x8x8xf32> to vector<4x8x8xbf16>
    %cst_35 = arith.constant dense<0.000000e+00> : vector<4x8x8xf32>
    %54 = tpu.matmul %52, %53, %cst_35 {dimension_numbers = #tpu.dot_dimension_numbers<[2], [1], [1], [2], [0, 0, 0, 1, 1, 2], [0], [0]>} : vector<4x8x8xbf16>, vector<4x8x8xbf16>, vector<4x8x8xf32> -> vector<4x8x8xf32>
    %55 = arith.truncf %54 : vector<4x8x8xf32> to vector<4x8x8xbf16>
    %c0_36 = arith.constant 0 : index
    %c0_37 = arith.constant 0 : index
    %c0_38 = arith.constant 0 : index
    %56 = vector.load %arg6[%c0_36, %c0_37, %c0_38] : memref<4x8x32xbf16, #tpu.memory_space<vmem>>, vector<4x8x32xbf16>
    %cst_39 = arith.constant dense<0.000000e+00> : vector<4x8x32xf32>
    %57 = tpu.matmul %55, %56, %cst_39 {dimension_numbers = #tpu.dot_dimension_numbers<[2], [1], [1], [2], [0, 0, 0, 1, 1, 2], [0], [0]>} : vector<4x8x8xbf16>, vector<4x8x32xbf16>, vector<4x8x32xf32> -> vector<4x8x32xf32>
    %cst_40 = arith.constant dense<0.000000e+00> : vector<8x32xf32>
    %58 = vector.multi_reduction <add>, %57, %cst_40 [0] : vector<4x8x32xf32> to vector<8x32xf32>
    %c0_41 = arith.constant 0 : index
    %c0_42 = arith.constant 0 : index
    %59 = vector.load %arg7[%c0_41, %c0_42] : memref<1x32xf32, #tpu.memory_space<vmem>>, vector<1x32xf32>
    %60 = vector.broadcast %59 : vector<1x32xf32> to vector<8x32xf32>
    %61 = arith.addf %58, %60 : vector<8x32xf32>
    %c0_43 = arith.constant 0 : index
    %c0_44 = arith.constant 0 : index
    %c0_45 = arith.constant 0 : index
    %62 = vector.load %arg8[%c0_43, %c0_44, %c0_45] : memref<1x8x32xf32, #tpu.memory_space<vmem>>, vector<1x8x32xf32>
    %63 = vector.shape_cast %62 : vector<1x8x32xf32> to vector<8x32xf32>
    %64 = vector.shape_cast %61 : vector<8x32xf32> to vector<1x8x32xf32>
    tpu.vector_store %arg8[%c0_43, %c0_44, %c0_45], %64 {strides = array<i32>} : memref<1x8x32xf32, #tpu.memory_space<vmem>>, vector<1x8x32xf32>,
    return
  }
  func.func @transform_0(%arg0: i32) -> (i32, i32, i32) {
    %c0_i32 = arith.constant 0 : i32
    %c0_i32_0 = arith.constant 0 : i32
    %c0_i32_1 = arith.constant 0 : i32
    return %arg0, %c0_i32, %c0_i32_0 : i32, i32, i32
  }
  func.func @transform_1(%arg0: i32) -> (i32, i32, i32) {
    %c0_i32 = arith.constant 0 : i32
    %c0_i32_0 = arith.constant 0 : i32
    %c0_i32_1 = arith.constant 0 : i32
    return %arg0, %c0_i32, %c0_i32_0 : i32, i32, i32
  }
  func.func @transform_2(%arg0: i32) -> (i32, i32, i32) {
    %c0_i32 = arith.constant 0 : i32
    %c0_i32_0 = arith.constant 0 : i32
    %c0_i32_1 = arith.constant 0 : i32
    return %arg0, %c0_i32, %c0_i32_0 : i32, i32, i32
  }
  func.func @transform_3(%arg0: i32) -> (i32, i32, i32, i32) {
    %c0_i32 = arith.constant 0 : i32
    %c0_i32_0 = arith.constant 0 : i32
    %c0_i32_1 = arith.constant 0 : i32
    %c0_i32_2 = arith.constant 0 : i32
    %c0_i32_3 = arith.constant 0 : i32
    return %c0_i32, %c0_i32_0, %c0_i32_1, %c0_i32_2 : i32, i32, i32, i32
  }
  func.func @transform_4(%arg0: i32) -> (i32, i32, i32, i32) {
    %c0_i32 = arith.constant 0 : i32
    %c0_i32_0 = arith.constant 0 : i32
    %c0_i32_1 = arith.constant 0 : i32
    %c0_i32_2 = arith.constant 0 : i32
    %c0_i32_3 = arith.constant 0 : i32
    return %c0_i32, %c0_i32_0, %c0_i32_1, %c0_i32_2 : i32, i32, i32, i32
  }
  func.func @transform_5(%arg0: i32) -> (i32, i32, i32) {
    %c0_i32 = arith.constant 0 : i32
    %c0_i32_0 = arith.constant 0 : i32
    %c0_i32_1 = arith.constant 0 : i32
    %c0_i32_2 = arith.constant 0 : i32
    return %c0_i32, %c0_i32_0, %c0_i32_1 : i32, i32, i32
  }
  func.func @transform_6(%arg0: i32) -> (i32, i32) {
    %c0_i32 = arith.constant 0 : i32
    %c0_i32_0 = arith.constant 0 : i32
    %c0_i32_1 = arith.constant 0 : i32
    return %c0_i32, %c0_i32_0 : i32, i32
  }
  func.func @transform_7(%arg0: i32) -> (i32, i32, i32) {
    %c0_i32 = arith.constant 0 : i32
    %c0_i32_0 = arith.constant 0 : i32
    %c0_i32_1 = arith.constant 0 : i32
    return %arg0, %c0_i32, %c0_i32_0 : i32, i32, i32
  }
}

module attributes {stable_mosaic.version = 11 : i64} {
  func.func @_mha_fused_kernel(%arg0: i32, %arg1: memref<1x8x32xf32, #tpu.memory_space<vmem>>, %arg2: memref<1x8x32xf32, #tpu.memory_space<vmem>>, %arg3: memref<1x8x32xf32, #tpu.memory_space<vmem>>, %arg4: memref<3x4x32x8xbf16, #tpu.memory_space<vmem>>, %arg5: memref<3x4x1x8xf32, #tpu.memory_space<vmem>>, %arg6: memref<4x8x32xbf16, #tpu.memory_space<vmem>>, %arg7: memref<1x32xf32, #tpu.memory_space<vmem>>, %arg8: memref<1x8x32xf32, #tpu.memory_space<vmem>>) attributes {dimension_semantics = [#tpu.dimension_semantics<parallel>], iteration_bounds = array<i64: 2>, scalar_prefetch = 0 : i64, scratch_operands = 0 : i64, tpu.core_type = #tpu.core_type<tc>, window_params = [{transform_indices = @transform_0, window_bounds = array<i64: 1, 8, 32>}, {transform_indices = @transform_1, window_bounds = array<i64: 1, 8, 32>}, {transform_indices = @transform_2, window_bounds = array<i64: 1, 8, 32>}, {pipeline_mode = #tpu.pipeline_mode<synchronous>, transform_indices = @transform_3, window_bounds = array<i64: 3, 4, 32, 8>}, {pipeline_mode = #tpu.pipeline_mode<synchronous>, transform_indices = @transform_4, window_bounds = array<i64: 3, 4, 1, 8>}, {pipeline_mode = #tpu.pipeline_mode<synchronous>, transform_indices = @transform_5, window_bounds = array<i64: 4, 8, 32>}, {pipeline_mode = #tpu.pipeline_mode<synchronous>, transform_indices = @transform_6, window_bounds = array<i64: 1, 32>}, {transform_indices = @transform_7, window_bounds = array<i64: 1, 8, 32>}]} {
    %c0 = arith.constant 0 : index
    %c0_0 = arith.constant 0 : index
    %c0_1 = arith.constant 0 : index
    %0 = vector.load %arg1[%c0, %c0_0, %c0_1] : memref<1x8x32xf32, #tpu.memory_space<vmem>>, vector<1x8x32xf32>
    %1 = vector.shape_cast %0 : vector<1x8x32xf32> to vector<8x32xf32>
    %2 = arith.truncf %1 : vector<8x32xf32> to vector<8x32xbf16>
    %3 = vector.shape_cast %2 : vector<8x32xbf16> to vector<1x8x32xbf16>
    %4 = vector.shape_cast %3 : vector<1x8x32xbf16> to vector<1x8x32xbf16>
    %5 = vector.broadcast %4 : vector<1x8x32xbf16> to vector<4x8x32xbf16>
    %c0_2 = arith.constant 0 : index
    %c0_3 = arith.constant 0 : index
    %c0_4 = arith.constant 0 : index
    %c0_5 = arith.constant 0 : index
    %6 = vector.load %arg4[%c0_2, %c0_3, %c0_4, %c0_5] : memref<3x4x32x8xbf16, #tpu.memory_space<vmem>>, vector<1x4x32x8xbf16>
    %7 = vector.shape_cast %6 : vector<1x4x32x8xbf16> to vector<4x32x8xbf16>
    %cst = arith.constant dense<0.000000e+00> : vector<4x8x8xf32>
    %8 = tpu.matmul %5, %7, %cst {dimension_numbers = #tpu.dot_dimension_numbers<[2], [1], [1], [2], [0, 0, 0, 1, 1, 2], [0], [0]>} : vector<4x8x32xbf16>, vector<4x32x8xbf16>, vector<4x8x8xf32> -> vector<4x8x8xf32>
    %c0_6 = arith.constant 0 : index
    %c0_7 = arith.constant 0 : index
    %c0_8 = arith.constant 0 : index
    %c0_9 = arith.constant 0 : index
    %9 = vector.load %arg5[%c0_6, %c0_7, %c0_8, %c0_9] : memref<3x4x1x8xf32, #tpu.memory_space<vmem>>, vector<1x4x1x8xf32>
    %10 = vector.shape_cast %9 : vector<1x4x1x8xf32> to vector<4x1x8xf32>
    %11 = vector.broadcast %10 : vector<4x1x8xf32> to vector<4x8x8xf32>
    %12 = arith.addf %8, %11 : vector<4x8x8xf32>
    %c0_10 = arith.constant 0 : index
    %c0_11 = arith.constant 0 : index
    %c0_12 = arith.constant 0 : index
    %13 = vector.load %arg2[%c0_10, %c0_11, %c0_12] : memref<1x8x32xf32, #tpu.memory_space<vmem>>, vector<1x8x32xf32>
    %14 = vector.shape_cast %13 : vector<1x8x32xf32> to vector<8x32xf32>
    %15 = arith.truncf %14 : vector<8x32xf32> to vector<8x32xbf16>
    %16 = vector.shape_cast %15 : vector<8x32xbf16> to vector<1x8x32xbf16>
    %17 = vector.shape_cast %16 : vector<1x8x32xbf16> to vector<1x8x32xbf16>
    %18 = vector.broadcast %17 : vector<1x8x32xbf16> to vector<4x8x32xbf16>
    %c1 = arith.constant 1 : index
    %c0_13 = arith.constant 0 : index
    %c0_14 = arith.constant 0 : index
    %c0_15 = arith.constant 0 : index
    %19 = vector.load %arg4[%c1, %c0_13, %c0_14, %c0_15] : memref<3x4x32x8xbf16, #tpu.memory_space<vmem>>, vector<1x4x32x8xbf16>
    %20 = vector.shape_cast %19 : vector<1x4x32x8xbf16> to vector<4x32x8xbf16>
    %cst_16 = arith.constant dense<0.000000e+00> : vector<4x8x8xf32>
    %21 = tpu.matmul %18, %20, %cst_16 {dimension_numbers = #tpu.dot_dimension_numbers<[2], [1], [1], [2], [0, 0, 0, 1, 1, 2], [0], [0]>} : vector<4x8x32xbf16>, vector<4x32x8xbf16>, vector<4x8x8xf32> -> vector<4x8x8xf32>
    %c1_17 = arith.constant 1 : index
    %c0_18 = arith.constant 0 : index
    %c0_19 = arith.constant 0 : index
    %c0_20 = arith.constant 0 : index
    %22 = vector.load %arg5[%c1_17, %c0_18, %c0_19, %c0_20] : memref<3x4x1x8xf32, #tpu.memory_space<vmem>>, vector<1x4x1x8xf32>
    %23 = vector.shape_cast %22 : vector<1x4x1x8xf32> to vector<4x1x8xf32>
    %24 = vector.broadcast %23 : vector<4x1x8xf32> to vector<4x8x8xf32>
    %25 = arith.addf %21, %24 : vector<4x8x8xf32>
    %c0_21 = arith.constant 0 : index
    %c0_22 = arith.constant 0 : index
    %c0_23 = arith.constant 0 : index
    %26 = vector.load %arg3[%c0_21, %c0_22, %c0_23] : memref<1x8x32xf32, #tpu.memory_space<vmem>>, vector<1x8x32xf32>
    %27 = vector.shape_cast %26 : vector<1x8x32xf32> to vector<8x32xf32>
    %28 = arith.truncf %27 : vector<8x32xf32> to vector<8x32xbf16>
    %29 = vector.shape_cast %28 : vector<8x32xbf16> to vector<1x8x32xbf16>
    %30 = vector.shape_cast %29 : vector<1x8x32xbf16> to vector<1x8x32xbf16>
    %31 = vector.broadcast %30 : vector<1x8x32xbf16> to vector<4x8x32xbf16>
    %c2 = arith.constant 2 : index
    %c0_24 = arith.constant 0 : index
    %c0_25 = arith.constant 0 : index
    %c0_26 = arith.constant 0 : index
    %32 = vector.load %arg4[%c2, %c0_24, %c0_25, %c0_26] : memref<3x4x32x8xbf16, #tpu.memory_space<vmem>>, vector<1x4x32x8xbf16>
    %33 = vector.shape_cast %32 : vector<1x4x32x8xbf16> to vector<4x32x8xbf16>
    %cst_27 = arith.constant dense<0.000000e+00> : vector<4x8x8xf32>
    %34 = tpu.matmul %31, %33, %cst_27 {dimension_numbers = #tpu.dot_dimension_numbers<[2], [1], [1], [2], [0, 0, 0, 1, 1, 2], [0], [0]>} : vector<4x8x32xbf16>, vector<4x32x8xbf16>, vector<4x8x8xf32> -> vector<4x8x8xf32>
    %c2_28 = arith.constant 2 : index
    %c0_29 = arith.constant 0 : index
    %c0_30 = arith.constant 0 : index
    %c0_31 = arith.constant 0 : index
    %35 = vector.load %arg5[%c2_28, %c0_29, %c0_30, %c0_31] : memref<3x4x1x8xf32, #tpu.memory_space<vmem>>, vector<1x4x1x8xf32>
    %36 = vector.shape_cast %35 : vector<1x4x1x8xf32> to vector<4x1x8xf32>
    %37 = vector.broadcast %36 : vector<4x1x8xf32> to vector<4x8x8xf32>
    %38 = arith.addf %34, %37 : vector<4x8x8xf32>
    %39 = arith.truncf %12 : vector<4x8x8xf32> to vector<4x8x8xbf16>
    %40 = arith.truncf %25 : vector<4x8x8xf32> to vector<4x8x8xbf16>
    %cst_32 = arith.constant dense<0.000000e+00> : vector<4x8x8xf32>
    %41 = tpu.matmul %39, %40, %cst_32 {dimension_numbers = #tpu.dot_dimension_numbers<[2], [2], [1], [1], [0, 0, 0, 1, 1, 1], [0], [0]>} : vector<4x8x8xbf16>, vector<4x8x8xbf16>, vector<4x8x8xf32> -> vector<4x8x8xf32>
    %cst_33 = arith.constant dense<0xFF800000> : vector<4x8xf32>
    %42 = vector.multi_reduction <maximumf>, %41, %cst_33 [2] : vector<4x8x8xf32> to vector<4x8xf32>
    %43 = vector.shape_cast %42 : vector<4x8xf32> to vector<4x8x1xf32>
    %44 = vector.broadcast %43 : vector<4x8x1xf32> to vector<4x8x8xf32>
    %45 = arith.subf %41, %44 : vector<4x8x8xf32>
    %46 = math.exp %45 : vector<4x8x8xf32>
    %cst_34 = arith.constant dense<0.000000e+00> : vector<4x8xf32>
    %47 = vector.multi_reduction <add>, %46, %cst_34 [2] : vector<4x8x8xf32> to vector<4x8xf32>
    %48 = vector.shape_cast %47 : vector<4x8xf32> to vector<4x8x1xf32>
    %49 = tpu.reciprocal %48 {approx = true} : vector<4x8x1xf32> -> vector<4x8x1xf32>
    %50 = vector.broadcast %49 : vector<4x8x1xf32> to vector<4x8x8xf32>
    %51 = arith.mulf %46, %50 : vector<4x8x8xf32>
    %52 = arith.truncf %51 : vector<4x8x8xf32> to vector<4x8x8xbf16>
    %53 = arith.truncf %38 : vector<4x8x8xf32> to vector<4x8x8xbf16>
    %cst_35 = arith.constant dense<0.000000e+00> : vector<4x8x8xf32>
    %54 = tpu.matmul %52, %53, %cst_35 {dimension_numbers = #tpu.dot_dimension_numbers<[2], [1], [1], [2], [0, 0, 0, 1, 1, 2], [0], [0]>} : vector<4x8x8xbf16>, vector<4x8x8xbf16>, vector<4x8x8xf32> -> vector<4x8x8xf32>
    %55 = arith.truncf %54 : vector<4x8x8xf32> to vector<4x8x8xbf16>
    %c0_36 = arith.constant 0 : index
    %c0_37 = arith.constant 0 : index
    %c0_38 = arith.constant 0 : index
    %56 = vector.load %arg6[%c0_36, %c0_37, %c0_38] : memref<4x8x32xbf16, #tpu.memory_space<vmem>>, vector<4x8x32xbf16>
    %cst_39 = arith.constant dense<0.000000e+00> : vector<4x8x32xf32>
    %57 = tpu.matmul %55, %56, %cst_39 {dimension_numbers = #tpu.dot_dimension_numbers<[2], [1], [1], [2], [0, 0, 0, 1, 1, 2], [0], [0]>} : vector<4x8x8xbf16>, vector<4x8x32xbf16>, vector<4x8x32xf32> -> vector<4x8x32xf32>
    %cst_40 = arith.constant dense<0.000000e+00> : vector<8x32xf32>
    %58 = vector.multi_reduction <add>, %57, %cst_40 [0] : vector<4x8x32xf32> to vector<8x32xf32>
    %c0_41 = arith.constant 0 : index
    %c0_42 = arith.constant 0 : index
    %59 = vector.load %arg7[%c0_41, %c0_42] : memref<1x32xf32, #tpu.memory_space<vmem>>, vector<1x32xf32>
    %60 = vector.broadcast %59 : vector<1x32xf32> to vector<8x32xf32>
    %61 = arith.addf %58, %60 : vector<8x32xf32>
    %c0_43 = arith.constant 0 : index
    %c0_44 = arith.constant 0 : index
    %c0_45 = arith.constant 0 : index
    %62 = vector.load %arg8[%c0_43, %c0_44, %c0_45] : memref<1x8x32xf32, #tpu.memory_space<vmem>>, vector<1x8x32xf32>
    %63 = vector.shape_cast %62 : vector<1x8x32xf32> to vector<8x32xf32>
    %64 = vector.shape_cast %61 : vector<8x32xf32> to vector<1x8x32xf32>
    tpu.vector_store %arg8[%c0_43, %c0_44, %c0_45], %64 {strides = array<i32>} : memref<1x8x32xf32, #tpu.memory_space<vmem>>, vector<1x8x32xf32>,
    return
  }
  func.func @transform_0(%arg0: i32) -> (i32, i32, i32) {
    %c0_i32 = arith.constant 0 : i32
    %c0_i32_0 = arith.constant 0 : i32
    %c0_i32_1 = arith.constant 0 : i32
    return %arg0, %c0_i32, %c0_i32_0 : i32, i32, i32
  }
  func.func @transform_1(%arg0: i32) -> (i32, i32, i32) {
    %c0_i32 = arith.constant 0 : i32
    %c0_i32_0 = arith.constant 0 : i32
    %c0_i32_1 = arith.constant 0 : i32
    return %arg0, %c0_i32, %c0_i32_0 : i32, i32, i32
  }
  func.func @transform_2(%arg0: i32) -> (i32, i32, i32) {
    %c0_i32 = arith.constant 0 : i32
    %c0_i32_0 = arith.constant 0 : i32
    %c0_i32_1 = arith.constant 0 : i32
    return %arg0, %c0_i32, %c0_i32_0 : i32, i32, i32
  }
  func.func @transform_3(%arg0: i32) -> (i32, i32, i32, i32) {
    %c0_i32 = arith.constant 0 : i32
    %c0_i32_0 = arith.constant 0 : i32
    %c0_i32_1 = arith.constant 0 : i32
    %c0_i32_2 = arith.constant 0 : i32
    %c0_i32_3 = arith.constant 0 : i32
    return %c0_i32, %c0_i32_0, %c0_i32_1, %c0_i32_2 : i32, i32, i32, i32
  }
  func.func @transform_4(%arg0: i32) -> (i32, i32, i32, i32) {
    %c0_i32 = arith.constant 0 : i32
    %c0_i32_0 = arith.constant 0 : i32
    %c0_i32_1 = arith.constant 0 : i32
    %c0_i32_2 = arith.constant 0 : i32
    %c0_i32_3 = arith.constant 0 : i32
    return %c0_i32, %c0_i32_0, %c0_i32_1, %c0_i32_2 : i32, i32, i32, i32
  }
  func.func @transform_5(%arg0: i32) -> (i32, i32, i32) {
    %c0_i32 = arith.constant 0 : i32
    %c0_i32_0 = arith.constant 0 : i32
    %c0_i32_1 = arith.constant 0 : i32
    %c0_i32_2 = arith.constant 0 : i32
    return %c0_i32, %c0_i32_0, %c0_i32_1 : i32, i32, i32
  }
  func.func @transform_6(%arg0: i32) -> (i32, i32) {
    %c0_i32 = arith.constant 0 : i32
    %c0_i32_0 = arith.constant 0 : i32
    %c0_i32_1 = arith.constant 0 : i32
    return %c0_i32, %c0_i32_0 : i32, i32
  }
  func.func @transform_7(%arg0: i32) -> (i32, i32, i32) {
    %c0_i32 = arith.constant 0 : i32
    %c0_i32_0 = arith.constant 0 : i32
    %c0_i32_1 = arith.constant 0 : i32
    return %arg0, %c0_i32, %c0_i32_0 : i32, i32, i32
  }
}

</mosaic_0001>

<llo_original>
// kernel: tpu_custom_call.1
$region0: #{tpu_custom_call.1}
  #allocation0 [shape = 'u32[]', space=smem, size = 0x4, offset = 0x4, fixed_abs, tag = 'smem constant byte address 0x4 - core index']
  #allocation1 [shape = 'u32[144,128]{1,0:T(1,128)}', space=vmem, size = 0x12000, scoped, tag = 'internal scratch']
  %s0 = inlined_call_operand.vmem [shape: f32[2,8,32], index: 0, kind: input, shape index: {}]
  %s1 = inlined_call_operand.vmem [shape: f32[2,8,32], index: 1, kind: input, shape index: {}]
  %s2 = inlined_call_operand.vmem [shape: f32[2,8,32], index: 2, kind: input, shape index: {}]
  %s3 = inlined_call_operand.vmem [shape: bf16[3,4,32,8], index: 3, kind: input, shape index: {}]
  %s4 = inlined_call_operand.vmem [shape: f32[3,4,1,8], index: 4, kind: input, shape index: {}]
  %s5 = inlined_call_operand.vmem [shape: bf16[4,8,32], index: 5, kind: input, shape index: {}]
  %s6 = inlined_call_operand.vmem [shape: f32[1,32], index: 6, kind: input, shape index: {}]
  %s7 = inlined_call_operand.hbm [shape: f32[2,8,32], index: 7, kind: output, shape index: {}]
  %s8 = sld [smem:[#allocation0]]
  $region61: #{tpu_custom_call.1} parent=0
    _
  %s10 = ssub.s32 1, %s8
  %s11 = scalar_select 0, %s10, %s8
  $region1: #{tpu_custom_call.1} parent=0
    #allocation2 [shape = 'u8[8192]{0}', space=vmem, size = 0x2000, scoped, tag = 'output window, operand 0']
    #allocation3 [shape = 's32[2]{0}', space=sflag, size = 0x8, scoped, tag = 'scoped memory for tpu_custom_call.1']
    %12 = vsyncpa [#allocation3], 0
    %s13 = scalar_lea.sflag [#allocation3], 1
    %14 = vsyncpa %s13, 0
    loop: start=0, step=1, limit=4
    $region2: #{tpu_custom_call.1} parent=1 // loop_pre_header
      _
    $region3: #{tpu_custom_call.1} parent=1 // loop_header
      %s16 = sphi 0, %s20
      %p17 = scmp.ge.s32.totalorder %s16, 4
      %s26 = sphi 0, %s28
      %s29 = sphi 0, %s26
      %s30 = sphi 0, %s29
      %s46 = sphi 0, %s30
      %s52 = sphi 0, %s54
      %s55 = sphi 0, %s52
      %s56 = sphi 0, %s55
      %s72 = sphi 0, %s56
      %s78 = sphi 0, %s80
      %s81 = sphi 0, %s78
      %s82 = sphi 0, %s81
      %s98 = sphi 0, %s82
      %s102 = sphi 0, %s102
      %s104 = sphi 0, %s102
      %s105 = sphi 0, %s104
      %s119 = sphi 0, %s105
      %s123 = sphi 0, %s123
      %s125 = sphi 0, %s123
      %s126 = sphi 0, %s125
      %s140 = sphi 0, %s126
      %s144 = sphi 0, %s144
      %s146 = sphi 0, %s144
      %s147 = sphi 0, %s146
      %s161 = sphi 0, %s147
      %s165 = sphi 0, %s165
      %s167 = sphi 0, %s165
      %s168 = sphi 0, %s167
      %s182 = sphi 0, %s168
      %s188 = sphi 0, %s190
      %s191 = sphi 0, %s188
      %s192 = sphi 0, %s191
      %s208 = sphi 0, %s192
    $region4: #{tpu_custom_call.1} parent=1 // loop_header_branch
      %19 = sbr.rel (%p17) target = $region8
    $region5: #{tpu_custom_call.1} parent=1 // loop_body
      %s21 = ssub.s32 %s16, 1
      %s22 = ssub.s32 %s16, 2
      %s23 = sadd.s32 %s16, 1
      %s24 = ssub.s32 %s16, %s23
      %p25 = scmp.eq.s32.totalorder %s24, 0
      %s27 = sadd.s32 %s26, 1
      %s28 = scalar_select %p25, %s26, %s27
      %p31 = pneg %p25
      %p32 = scmp.eq.s32.totalorder %s16, 1
      %p33 = por %p31, %p32
      %p34 = scmp.ne.s32.totalorder %s26, %s29
      %p35 = scmp.eq.s32.totalorder %s16, 0
      %p36 = por %p34, %p35
      %p37 = scmp.ne.s32.totalorder %s26, %s29
      %p38 = scmp.eq.s32.totalorder %s21, 1
      %p39 = por %p37, %p38
      %p40 = scmp.ne.s32.totalorder %s29, %s30
      %p41 = scmp.eq.s32.totalorder %s21, 0
      %p42 = por %p40, %p41
      %p43 = scmp.ne.s32.totalorder %s29, %s30
      %p44 = scmp.eq.s32.totalorder %s22, 1
      %p45 = por %p43, %p44
      %p47 = scmp.ne.s32.totalorder %s30, %s46
      %p48 = scmp.eq.s32.totalorder %s22, 0
      %p49 = por %p47, %p48
      %s50 = ssub.s32 %s16, %s23
      %p51 = scmp.eq.s32.totalorder %s50, 0
      %s53 = sadd.s32 %s52, 1
      %s54 = scalar_select %p51, %s52, %s53
      %p57 = pneg %p51
      %p58 = scmp.eq.s32.totalorder %s16, 1
      %p59 = por %p57, %p58
      %p60 = scmp.ne.s32.totalorder %s52, %s55
      %p61 = scmp.eq.s32.totalorder %s16, 0
      %p62 = por %p60, %p61
      %p63 = scmp.ne.s32.totalorder %s52, %s55
      %p64 = scmp.eq.s32.totalorder %s21, 1
      %p65 = por %p63, %p64
      %p66 = scmp.ne.s32.totalorder %s55, %s56
      %p67 = scmp.eq.s32.totalorder %s21, 0
      %p68 = por %p66, %p67
      %p69 = scmp.ne.s32.totalorder %s55, %s56
      %p70 = scmp.eq.s32.totalorder %s22, 1
      %p71 = por %p69, %p70
      %p73 = scmp.ne.s32.totalorder %s56, %s72
      %p74 = scmp.eq.s32.totalorder %s22, 0
      %p75 = por %p73, %p74
      %s76 = ssub.s32 %s16, %s23
      %p77 = scmp.eq.s32.totalorder %s76, 0
      %s79 = sadd.s32 %s78, 1
      %s80 = scalar_select %p77, %s78, %s79
      %p83 = pneg %p77
      %p84 = scmp.eq.s32.totalorder %s16, 1
      %p85 = por %p83, %p84
      %p86 = scmp.ne.s32.totalorder %s78, %s81
      %p87 = scmp.eq.s32.totalorder %s16, 0
      %p88 = por %p86, %p87
      %p89 = scmp.ne.s32.totalorder %s78, %s81
      %p90 = scmp.eq.s32.totalorder %s21, 1
      %p91 = por %p89, %p90
      %p92 = scmp.ne.s32.totalorder %s81, %s82
      %p93 = scmp.eq.s32.totalorder %s21, 0
      %p94 = por %p92, %p93
      %p95 = scmp.ne.s32.totalorder %s81, %s82
      %p96 = scmp.eq.s32.totalorder %s22, 1
      %p97 = por %p95, %p96
      %p99 = scmp.ne.s32.totalorder %s82, %s98
      %p100 = scmp.eq.s32.totalorder %s22, 0
      %p101 = por %p99, %p100
      %s103 = sadd.s32 %s102, 1
      %p106 = scmp.eq.s32.totalorder %s16, 1
      %p107 = scmp.ne.s32.totalorder %s102, %s104
      %p108 = scmp.eq.s32.totalorder %s16, 0
      %p109 = por %p107, %p108
      %p110 = scmp.ne.s32.totalorder %s102, %s104
      %p111 = scmp.eq.s32.totalorder %s21, 1
      %p112 = por %p110, %p111
      %p113 = scmp.ne.s32.totalorder %s104, %s105
      %p114 = scmp.eq.s32.totalorder %s21, 0
      %p115 = por %p113, %p114
      %p116 = scmp.ne.s32.totalorder %s104, %s105
      %p117 = scmp.eq.s32.totalorder %s22, 1
      %p118 = por %p116, %p117
      %p120 = scmp.ne.s32.totalorder %s105, %s119
      %p121 = scmp.eq.s32.totalorder %s22, 0
      %p122 = por %p120, %p121
      %s124 = sadd.s32 %s123, 1
      %p127 = scmp.eq.s32.totalorder %s16, 1
      %p128 = scmp.ne.s32.totalorder %s123, %s125
      %p129 = scmp.eq.s32.totalorder %s16, 0
      %p130 = por %p128, %p129
      %p131 = scmp.ne.s32.totalorder %s123, %s125
      %p132 = scmp.eq.s32.totalorder %s21, 1
      %p133 = por %p131, %p132
      %p134 = scmp.ne.s32.totalorder %s125, %s126
      %p135 = scmp.eq.s32.totalorder %s21, 0
      %p136 = por %p134, %p135
      %p137 = scmp.ne.s32.totalorder %s125, %s126
      %p138 = scmp.eq.s32.totalorder %s22, 1
      %p139 = por %p137, %p138
      %p141 = scmp.ne.s32.totalorder %s126, %s140
      %p142 = scmp.eq.s32.totalorder %s22, 0
      %p143 = por %p141, %p142
      %s145 = sadd.s32 %s144, 1
      %p148 = scmp.eq.s32.totalorder %s16, 1
      %p149 = scmp.ne.s32.totalorder %s144, %s146
      %p150 = scmp.eq.s32.totalorder %s16, 0
      %p151 = por %p149, %p150
      %p152 = scmp.ne.s32.totalorder %s144, %s146
      %p153 = scmp.eq.s32.totalorder %s21, 1
      %p154 = por %p152, %p153
      %p155 = scmp.ne.s32.totalorder %s146, %s147
      %p156 = scmp.eq.s32.totalorder %s21, 0
      %p157 = por %p155, %p156
      %p158 = scmp.ne.s32.totalorder %s146, %s147
      %p159 = scmp.eq.s32.totalorder %s22, 1
      %p160 = por %p158, %p159
      %p162 = scmp.ne.s32.totalorder %s147, %s161
      %p163 = scmp.eq.s32.totalorder %s22, 0
      %p164 = por %p162, %p163
      %s166 = sadd.s32 %s165, 1
      %p169 = scmp.eq.s32.totalorder %s16, 1
      %p170 = scmp.ne.s32.totalorder %s165, %s167
      %p171 = scmp.eq.s32.totalorder %s16, 0
      %p172 = por %p170, %p171
      %p173 = scmp.ne.s32.totalorder %s165, %s167
      %p174 = scmp.eq.s32.totalorder %s21, 1
      %p175 = por %p173, %p174
      %p176 = scmp.ne.s32.totalorder %s167, %s168
      %p177 = scmp.eq.s32.totalorder %s21, 0
      %p178 = por %p176, %p177
      %p179 = scmp.ne.s32.totalorder %s167, %s168
      %p180 = scmp.eq.s32.totalorder %s22, 1
      %p181 = por %p179, %p180
      %p183 = scmp.ne.s32.totalorder %s168, %s182
      %p184 = scmp.eq.s32.totalorder %s22, 0
      %p185 = por %p183, %p184
      %s186 = ssub.s32 %s16, %s23
      %p187 = scmp.eq.s32.totalorder %s186, 0
      %s189 = sadd.s32 %s188, 1
      %s190 = scalar_select %p187, %s188, %s189
      %p193 = pneg %p187
      %p194 = scmp.eq.s32.totalorder %s16, 1
      %p195 = por %p193, %p194
      %p196 = scmp.ne.s32.totalorder %s188, %s191
      %p197 = scmp.eq.s32.totalorder %s16, 0
      %p198 = por %p196, %p197
      %p199 = scmp.ne.s32.totalorder %s188, %s191
      %p200 = scmp.eq.s32.totalorder %s21, 1
      %p201 = por %p199, %p200
      %p202 = scmp.ne.s32.totalorder %s191, %s192
      %p203 = scmp.eq.s32.totalorder %s21, 0
      %p204 = por %p202, %p203
      %p205 = scmp.ne.s32.totalorder %s191, %s192
      %p206 = scmp.eq.s32.totalorder %s22, 1
      %p207 = por %p205, %p206
      %p209 = scmp.ne.s32.totalorder %s192, %s208
      %p210 = scmp.eq.s32.totalorder %s22, 0
      %p211 = por %p209, %p210
      %p212 = scmp.le.s32.totalorder 1, %s16
      %p213 = scmp.lt.s32.totalorder %s16, 3
      %p214 = pnand %p212, %p213
      %p215 = pneg %p214
      // Predicated region
      $region9: #{tpu_custom_call.1} parent=5 // pred_check
        _
      $region10: #{tpu_custom_call.1} parent=5 // pred_check_branch
        %217 = sbr.rel (%p214) target = $region12
      $region11: #{tpu_custom_call.1} parent=5 // pred_region
        %s218 = ssub.s32 %s16, 1
        // Predicated region
        $region13: #{tpu_custom_call.1} parent=11 // pred_check
          %p219 = pneg %p115
        $region14: #{tpu_custom_call.1} parent=11 // pred_check_branch
          %221 = sbr.rel (%p219) target = $region16
        $region15: #{tpu_custom_call.1} parent=11 // pred_region
          _
        $region16: #{tpu_custom_call.1} parent=11 // pred_fallthru
          _
        // Predicated region
        $region17: #{tpu_custom_call.1} parent=11 // pred_check
          %p222 = pneg %p136
        $region18: #{tpu_custom_call.1} parent=11 // pred_check_branch
          %224 = sbr.rel (%p222) target = $region20
        $region19: #{tpu_custom_call.1} parent=11 // pred_region
          _
        $region20: #{tpu_custom_call.1} parent=11 // pred_fallthru
          _
        // Predicated region
        $region21: #{tpu_custom_call.1} parent=11 // pred_check
          %p225 = pneg %p157
        $region22: #{tpu_custom_call.1} parent=11 // pred_check_branch
          %227 = sbr.rel (%p225) target = $region24
        $region23: #{tpu_custom_call.1} parent=11 // pred_region
          _
        $region24: #{tpu_custom_call.1} parent=11 // pred_fallthru
          _
        // Predicated region
        $region25: #{tpu_custom_call.1} parent=11 // pred_check
          %p228 = pneg %p178
        $region26: #{tpu_custom_call.1} parent=11 // pred_check_branch
          %230 = sbr.rel (%p228) target = $region28
        $region27: #{tpu_custom_call.1} parent=11 // pred_region
          _
        $region28: #{tpu_custom_call.1} parent=11 // pred_fallthru
          _
      $region12: #{tpu_custom_call.1} parent=5 // pred_fallthru
        _
      %p231 = scmp.lt.s32.totalorder %s16, 2
      // Predicated region
      $region29: #{tpu_custom_call.1} parent=5 // pred_check
        %p232 = pneg %p231
      $region30: #{tpu_custom_call.1} parent=5 // pred_check_branch
        %234 = sbr.rel (%p232) target = $region32
      $region31: #{tpu_custom_call.1} parent=5 // pred_region
        // Predicated region
        $region33: #{tpu_custom_call.1} parent=31 // pred_check
          %p235 = pneg %p36
        $region34: #{tpu_custom_call.1} parent=31 // pred_check_branch
          %237 = sbr.rel (%p235) target = $region36
        $region35: #{tpu_custom_call.1} parent=31 // pred_region
          %p238 = scmp.lt.s32.totalorder %s16, 1
          %s239 = scalar_select %p238, %s16, 1
          %s240 = smul.addr %s239, 8
          %s241 = scalar_lea.vmem %s0, %s240
        $region36: #{tpu_custom_call.1} parent=31 // pred_fallthru
          _
        // Predicated region
        $region37: #{tpu_custom_call.1} parent=31 // pred_check
          %p242 = pneg %p62
        $region38: #{tpu_custom_call.1} parent=31 // pred_check_branch
          %244 = sbr.rel (%p242) target = $region40
        $region39: #{tpu_custom_call.1} parent=31 // pred_region
          %p245 = scmp.lt.s32.totalorder %s16, 1
          %s246 = scalar_select %p245, %s16, 1
          %s247 = smul.addr %s246, 8
          %s248 = scalar_lea.vmem %s1, %s247
        $region40: #{tpu_custom_call.1} parent=31 // pred_fallthru
          _
        // Predicated region
        $region41: #{tpu_custom_call.1} parent=31 // pred_check
          %p249 = pneg %p88
        $region42: #{tpu_custom_call.1} parent=31 // pred_check_branch
          %251 = sbr.rel (%p249) target = $region44
        $region43: #{tpu_custom_call.1} parent=31 // pred_region
          %p252 = scmp.lt.s32.totalorder %s16, 1
          %s253 = scalar_select %p252, %s16, 1
          %s254 = smul.addr %s253, 8
          %s255 = scalar_lea.vmem %s2, %s254
        $region44: #{tpu_custom_call.1} parent=31 // pred_fallthru
          _
      $region32: #{tpu_custom_call.1} parent=5 // pred_fallthru
        _
      %p256 = scmp.le.s32.totalorder 1, %s16
      %p257 = scmp.lt.s32.totalorder %s16, 3
      %p258 = pnand %p256, %p257
      %p259 = pneg %p258
      // Predicated region
      $region45: #{tpu_custom_call.1} parent=5 // pred_check
        _
      $region46: #{tpu_custom_call.1} parent=5 // pred_check_branch
        %261 = sbr.rel (%p258) target = $region48
      $region47: #{tpu_custom_call.1} parent=5 // pred_region
        %s262 = ssub.s32 %s16, 1
        %p263 = scmp.lt.s32.totalorder %s21, 1
        %s264 = scalar_select %p263, %s21, 1
        %s265 = smul.addr %s264, 8
        %s266 = scalar_lea.vmem %s0, %s265
        %p267 = pneg %p42
        %p268 = pneg %p39
        %p269 = scmp.lt.s32.totalorder %s21, 1
        %s270 = scalar_select %p269, %s21, 1
        %s271 = smul.addr %s270, 8
        %s272 = scalar_lea.vmem %s1, %s271
        %p273 = pneg %p68
        %p274 = pneg %p65
        %p275 = scmp.lt.s32.totalorder %s21, 1
        %s276 = scalar_select %p275, %s21, 1
        %s277 = smul.addr %s276, 8
        %s278 = scalar_lea.vmem %s2, %s277
        %p279 = pneg %p94
        %p280 = pneg %p91
        %p281 = pneg %p115
        %p282 = pneg %p112
        %p283 = pneg %p136
        %p284 = pneg %p133
        %p285 = pneg %p157
        %p286 = pneg %p154
        %p287 = pneg %p178
        %p288 = pneg %p175
        %p289 = pneg %p204
        %p290 = pneg %p201
        %s291 = sand.u32 %s191, 1
        %s292 = scalar_lea.sflag [#allocation3], %s291
        %s293 = sand.u32 %s191, 1
        %s294 = smul.addr %s293, 8
        %s295 = scalar_lea.vmem [#allocation2], %s294
        %p296 = scmp.lt.s32.totalorder %s21, 1
        %s297 = scalar_select %p296, %s21, 1
        %s298 = smul.addr %s297, 8
        %s299 = scalar_lea.vmem %s0, %s298
        %p300 = scmp.lt.s32.totalorder %s21, 1
        %s301 = scalar_select %p300, %s21, 1
        %s302 = smul.addr %s301, 8
        %s303 = scalar_lea.vmem %s1, %s302
        %p304 = scmp.lt.s32.totalorder %s21, 1
        %s305 = scalar_select %p304, %s21, 1
        %s306 = smul.addr %s305, 8
        %s307 = scalar_lea.vmem %s2, %s306
        %v309 = vld [vmem:[%s299] sm:$0xff]
        %v310 = vpack.c.bf16 %v309, %v309
        %v311 = vld [vmem:[%s3] sm:$0xf]
        %v312 = vld [vmem:[%s3 + $0x4] sm:$0xf]
        %v313 = vld [vmem:[%s3 + $0x8] sm:$0xf]
        %v314 = vld [vmem:[%s3 + $0xc] sm:$0xf]
        %v315 = vld [vmem:[%s3 + $0x10] sm:$0xf]
        %v316 = vld [vmem:[%s3 + $0x14] sm:$0xf]
        %v317 = vld [vmem:[%s3 + $0x18] sm:$0xf]
        %v318 = vld [vmem:[%s3 + $0x1c] sm:$0xf]
        %v319 = vld [vmem:[%s3 + $0x20] sm:$0xf]
        %v320 = vld [vmem:[%s3 + $0x24] sm:$0xf]
        %v321 = vld [vmem:[%s3 + $0x28] sm:$0xf]
        %v322 = vld [vmem:[%s3 + $0x2c] sm:$0xf]
        %v323 = vld [vmem:[%s3 + $0x30] sm:$0xf]
        %v324 = vld [vmem:[%s3 + $0x34] sm:$0xf]
        %v325 = vld [vmem:[%s3 + $0x38] sm:$0xf]
        %v326 = vld [vmem:[%s3 + $0x3c] sm:$0xf]
        %v327 = vld [vmem:[%s4] sm:$0x1]
        %v328 = vld [vmem:[%s4 + $0x1] sm:$0x1]
        %v329 = vld [vmem:[%s4 + $0x2] sm:$0x1]
        %v330 = vld [vmem:[%s4 + $0x3] sm:$0x1]
        %v335 = vlaneseq
        %v336 = vshrl.u32 %v335, 7
        %v337 = vsub.s32 0, %v336
        %v338 = vrot.slane %v327, %v337
        %v339 = vlaneseq
        %v340 = vshrl.u32 %v339, 7
        %v341 = vsub.s32 0, %v340
        %v342 = vrot.slane %v328, %v341
        %v343 = vlaneseq
        %v344 = vshrl.u32 %v343, 7
        %v345 = vsub.s32 0, %v344
        %v346 = vrot.slane %v329, %v345
        %v347 = vlaneseq
        %v348 = vshrl.u32 %v347, 7
        %v349 = vsub.s32 0, %v348
        %v350 = vrot.slane %v330, %v349
        %v359 = vunpack.c.l.b16 %v311
        %v360 = vunpack.c.l.b16 %v312
        %v361 = vunpack.c.l.b16 %v313
        %v362 = vunpack.c.l.b16 %v314
        %v363 = vpack.c.b16 %v360, %v359
        %v364 = vpack.c.b16 %v362, %v361
        %vm367 = vcmask 261120
        %v369 = vsel %vm367, %v310, 0
        %371 = vmatprep.subr.bf16.mxu0 0
        %372 = vmatpush1.bf16.msra.mxu0 %v363
        %373 = vmatprep.subr.bf16.mxu0 0
        %374 = vmatpush1.bf16.msra.mxu0 %v364
        %375 = vmatprep.subr.bf16.mxu0 0
        %376 = vmatpush1.bf16.msra.mxu0 0
        %377 = vmatprep.subr.bf16.mxu0 0
        %378 = vmatpush1.bf16.msra.mxu0 0
        %379 = vmatprep.subr.bf16.mxu0 0
        %380 = vmatpush1.bf16.msra.mxu0 0
        %381 = vmatprep.subr.bf16.mxu0 0
        %382 = vmatpush1.bf16.msra.mxu0 0
        %383 = vmatprep.subr.bf16.mxu0 0
        %384 = vmatpush1.bf16.msra.mxu0 0
        %385 = vmatprep.subr.bf16.mxu0 0
        %386 = vmatpush1.bf16.msra.mxu0 0
        %387 = vmatprep.subr.bf16.mxu0 0
        %388 = vmatpush1.bf16.msra.mxu0 0
        %389 = vmatprep.subr.bf16.mxu0 0
        %390 = vmatpush1.bf16.msra.mxu0 0
        %391 = vmatprep.subr.bf16.mxu0 0
        %392 = vmatpush1.bf16.msra.mxu0 0
        %393 = vmatprep.subr.bf16.mxu0 0
        %394 = vmatpush1.bf16.msra.mxu0 0
        %395 = vmatprep.subr.bf16.mxu0 0
        %396 = vmatpush1.bf16.msra.mxu0 0
        %397 = vmatprep.subr.bf16.mxu0 0
        %398 = vmatpush1.bf16.msra.mxu0 0
        %399 = vmatprep.subr.bf16.mxu0 0
        %400 = vmatpush1.bf16.msra.mxu0 0
        %401 = vmatprep.subr.bf16.mxu0 0
        %402 = vmatpush1.bf16.msra.mxu0 0
        %403 = vmatprep.mubr.bf16.mxu0 0
        %404 = vmatmul.mubr.bf16.gmra.mrb[0].mxu0 %v369
        %v405 = vpop.f32.mrb[0].mxu0
        %v406 = vadd.f32 %v338, %v405
        %v407 = vpop.f32.mrb[0].mxu0
        %v408 = vpop.f32.mrb[0].mxu0
        %v409 = vpop.f32.mrb[0].mxu0
        %410 = vdwg.mxu0
        %v415 = vunpack.c.l.b16 %v315
        %v416 = vunpack.c.l.b16 %v316
        %v417 = vunpack.c.l.b16 %v317
        %v418 = vunpack.c.l.b16 %v318
        %v419 = vpack.c.b16 %v416, %v415
        %v420 = vpack.c.b16 %v418, %v417
        %423 = vmatprep.subr.bf16.mxu0 0
        %424 = vmatpush1.bf16.msra.mxu0 %v419
        %425 = vmatprep.subr.bf16.mxu0 0
        %426 = vmatpush1.bf16.msra.mxu0 %v420
        %427 = vmatprep.subr.bf16.mxu0 0
        %428 = vmatpush1.bf16.msra.mxu0 0
        %429 = vmatprep.subr.bf16.mxu0 0
        %430 = vmatpush1.bf16.msra.mxu0 0
        %431 = vmatprep.subr.bf16.mxu0 0
        %432 = vmatpush1.bf16.msra.mxu0 0
        %433 = vmatprep.subr.bf16.mxu0 0
        %434 = vmatpush1.bf16.msra.mxu0 0
        %435 = vmatprep.subr.bf16.mxu0 0
        %436 = vmatpush1.bf16.msra.mxu0 0
        %437 = vmatprep.subr.bf16.mxu0 0
        %438 = vmatpush1.bf16.msra.mxu0 0
        %439 = vmatprep.subr.bf16.mxu0 0
        %440 = vmatpush1.bf16.msra.mxu0 0
        %441 = vmatprep.subr.bf16.mxu0 0
        %442 = vmatpush1.bf16.msra.mxu0 0
        %443 = vmatprep.subr.bf16.mxu0 0
        %444 = vmatpush1.bf16.msra.mxu0 0
        %445 = vmatprep.subr.bf16.mxu0 0
        %446 = vmatpush1.bf16.msra.mxu0 0
        %447 = vmatprep.subr.bf16.mxu0 0
        %448 = vmatpush1.bf16.msra.mxu0 0
        %449 = vmatprep.subr.bf16.mxu0 0
        %450 = vmatpush1.bf16.msra.mxu0 0
        %451 = vmatprep.subr.bf16.mxu0 0
        %452 = vmatpush1.bf16.msra.mxu0 0
        %453 = vmatprep.subr.bf16.mxu0 0
        %454 = vmatpush1.bf16.msra.mxu0 0
        %455 = vmatprep.mubr.bf16.mxu0 0
        %456 = vmatmul.mubr.bf16.gmra.mrb[0].mxu0 %v369
        %v457 = vpop.f32.mrb[0].mxu0
        %v458 = vadd.f32 %v342, %v457
        %v459 = vpop.f32.mrb[0].mxu0
        %v460 = vpop.f32.mrb[0].mxu0
        %v461 = vpop.f32.mrb[0].mxu0
        %462 = vdwg.mxu0
        %v467 = vunpack.c.l.b16 %v319
        %v468 = vunpack.c.l.b16 %v320
        %v469 = vunpack.c.l.b16 %v321
        %v470 = vunpack.c.l.b16 %v322
        %v471 = vpack.c.b16 %v468, %v467
        %v472 = vpack.c.b16 %v470, %v469
        %475 = vmatprep.subr.bf16.mxu0 0
        %476 = vmatpush1.bf16.msra.mxu0 %v471
        %477 = vmatprep.subr.bf16.mxu0 0
        %478 = vmatpush1.bf16.msra.mxu0 %v472
        %479 = vmatprep.subr.bf16.mxu0 0
        %480 = vmatpush1.bf16.msra.mxu0 0
        %481 = vmatprep.subr.bf16.mxu0 0
        %482 = vmatpush1.bf16.msra.mxu0 0
        %483 = vmatprep.subr.bf16.mxu0 0
        %484 = vmatpush1.bf16.msra.mxu0 0
        %485 = vmatprep.subr.bf16.mxu0 0
        %486 = vmatpush1.bf16.msra.mxu0 0
        %487 = vmatprep.subr.bf16.mxu0 0
        %488 = vmatpush1.bf16.msra.mxu0 0
        %489 = vmatprep.subr.bf16.mxu0 0
        %490 = vmatpush1.bf16.msra.mxu0 0
        %491 = vmatprep.subr.bf16.mxu0 0
        %492 = vmatpush1.bf16.msra.mxu0 0
        %493 = vmatprep.subr.bf16.mxu0 0
        %494 = vmatpush1.bf16.msra.mxu0 0
        %495 = vmatprep.subr.bf16.mxu0 0
        %496 = vmatpush1.bf16.msra.mxu0 0
        %497 = vmatprep.subr.bf16.mxu0 0
        %498 = vmatpush1.bf16.msra.mxu0 0
        %499 = vmatprep.subr.bf16.mxu0 0
        %500 = vmatpush1.bf16.msra.mxu0 0
        %501 = vmatprep.subr.bf16.mxu0 0
        %502 = vmatpush1.bf16.msra.mxu0 0
        %503 = vmatprep.subr.bf16.mxu0 0
        %504 = vmatpush1.bf16.msra.mxu0 0
        %505 = vmatprep.subr.bf16.mxu0 0
        %506 = vmatpush1.bf16.msra.mxu0 0
        %507 = vmatprep.mubr.bf16.mxu0 0
        %508 = vmatmul.mubr.bf16.gmra.mrb[0].mxu0 %v369
        %v509 = vpop.f32.mrb[0].mxu0
        %v510 = vadd.f32 %v346, %v509
        %v511 = vpop.f32.mrb[0].mxu0
        %v512 = vpop.f32.mrb[0].mxu0
        %v513 = vpop.f32.mrb[0].mxu0
        %514 = vdwg.mxu0
        %v519 = vunpack.c.l.b16 %v323
        %v520 = vunpack.c.l.b16 %v324
        %v521 = vunpack.c.l.b16 %v325
        %v522 = vunpack.c.l.b16 %v326
        %v523 = vpack.c.b16 %v520, %v519
        %v524 = vpack.c.b16 %v522, %v521
        %527 = vmatprep.subr.bf16.mxu0 0
        %528 = vmatpush1.bf16.msra.mxu0 %v523
        %529 = vmatprep.subr.bf16.mxu0 0
        %530 = vmatpush1.bf16.msra.mxu0 %v524
        %531 = vmatprep.subr.bf16.mxu0 0
        %532 = vmatpush1.bf16.msra.mxu0 0
        %533 = vmatprep.subr.bf16.mxu0 0
        %534 = vmatpush1.bf16.msra.mxu0 0
        %535 = vmatprep.subr.bf16.mxu0 0
        %536 = vmatpush1.bf16.msra.mxu0 0
        %537 = vmatprep.subr.bf16.mxu0 0
        %538 = vmatpush1.bf16.msra.mxu0 0
        %539 = vmatprep.subr.bf16.mxu0 0
        %540 = vmatpush1.bf16.msra.mxu0 0
        %541 = vmatprep.subr.bf16.mxu0 0
        %542 = vmatpush1.bf16.msra.mxu0 0
        %543 = vmatprep.subr.bf16.mxu0 0
        %544 = vmatpush1.bf16.msra.mxu0 0
        %545 = vmatprep.subr.bf16.mxu0 0
        %546 = vmatpush1.bf16.msra.mxu0 0
        %547 = vmatprep.subr.bf16.mxu0 0
        %548 = vmatpush1.bf16.msra.mxu0 0
        %549 = vmatprep.subr.bf16.mxu0 0
        %550 = vmatpush1.bf16.msra.mxu0 0
        %551 = vmatprep.subr.bf16.mxu0 0
        %552 = vmatpush1.bf16.msra.mxu0 0
        %553 = vmatprep.subr.bf16.mxu0 0
        %554 = vmatpush1.bf16.msra.mxu0 0
        %555 = vmatprep.subr.bf16.mxu0 0
        %556 = vmatpush1.bf16.msra.mxu0 0
        %557 = vmatprep.subr.bf16.mxu0 0
        %558 = vmatpush1.bf16.msra.mxu0 0
        %559 = vmatprep.mubr.bf16.mxu0 0
        %560 = vmatmul.mubr.bf16.gmra.mrb[0].mxu0 %v369
        %v561 = vpop.f32.mrb[0].mxu0
        %v562 = vadd.f32 %v350, %v561
        %v563 = vpop.f32.mrb[0].mxu0
        %v564 = vpop.f32.mrb[0].mxu0
        %v565 = vpop.f32.mrb[0].mxu0
        %566 = vdwg.mxu0
        %v567 = vld [vmem:[%s303] sm:$0xff]
        %v568 = vpack.c.bf16 %v567, %v567
        %s569 = scalar_lea.vmem %s3, 64
        %v570 = vld [vmem:[%s569] sm:$0xf]
        %v571 = vld [vmem:[%s569 + $0x4] sm:$0xf]
        %v572 = vld [vmem:[%s569 + $0x8] sm:$0xf]
        %v573 = vld [vmem:[%s569 + $0xc] sm:$0xf]
        %v574 = vld [vmem:[%s569 + $0x10] sm:$0xf]
        %v575 = vld [vmem:[%s569 + $0x14] sm:$0xf]
        %v576 = vld [vmem:[%s569 + $0x18] sm:$0xf]
        %v577 = vld [vmem:[%s569 + $0x1c] sm:$0xf]
        %v578 = vld [vmem:[%s569 + $0x20] sm:$0xf]
        %v579 = vld [vmem:[%s569 + $0x24] sm:$0xf]
        %v580 = vld [vmem:[%s569 + $0x28] sm:$0xf]
        %v581 = vld [vmem:[%s569 + $0x2c] sm:$0xf]
        %v582 = vld [vmem:[%s569 + $0x30] sm:$0xf]
        %v583 = vld [vmem:[%s569 + $0x34] sm:$0xf]
        %v584 = vld [vmem:[%s569 + $0x38] sm:$0xf]
        %v585 = vld [vmem:[%s569 + $0x3c] sm:$0xf]
        %s586 = scalar_lea.vmem %s4, 4
        %v587 = vld [vmem:[%s586] sm:$0x1]
        %v588 = vld [vmem:[%s586 + $0x1] sm:$0x1]
        %v589 = vld [vmem:[%s586 + $0x2] sm:$0x1]
        %v590 = vld [vmem:[%s586 + $0x3] sm:$0x1]
        %v595 = vlaneseq
        %v596 = vshrl.u32 %v595, 7
        %v597 = vsub.s32 0, %v596
        %v598 = vrot.slane %v587, %v597
        %v599 = vlaneseq
        %v600 = vshrl.u32 %v599, 7
        %v601 = vsub.s32 0, %v600
        %v602 = vrot.slane %v588, %v601
        %v603 = vlaneseq
        %v604 = vshrl.u32 %v603, 7
        %v605 = vsub.s32 0, %v604
        %v606 = vrot.slane %v589, %v605
        %v607 = vlaneseq
        %v608 = vshrl.u32 %v607, 7
        %v609 = vsub.s32 0, %v608
        %v610 = vrot.slane %v590, %v609
        %v619 = vunpack.c.l.b16 %v570
        %v620 = vunpack.c.l.b16 %v571
        %v621 = vunpack.c.l.b16 %v572
        %v622 = vunpack.c.l.b16 %v573
        %v623 = vpack.c.b16 %v620, %v619
        %v624 = vpack.c.b16 %v622, %v621
        %v628 = vsel %vm367, %v568, 0
        %630 = vmatprep.subr.bf16.mxu0 0
        %631 = vmatpush1.bf16.msra.mxu0 %v623
        %632 = vmatprep.subr.bf16.mxu0 0
        %633 = vmatpush1.bf16.msra.mxu0 %v624
        %634 = vmatprep.subr.bf16.mxu0 0
        %635 = vmatpush1.bf16.msra.mxu0 0
        %636 = vmatprep.subr.bf16.mxu0 0
        %637 = vmatpush1.bf16.msra.mxu0 0
        %638 = vmatprep.subr.bf16.mxu0 0
        %639 = vmatpush1.bf16.msra.mxu0 0
        %640 = vmatprep.subr.bf16.mxu0 0
        %641 = vmatpush1.bf16.msra.mxu0 0
        %642 = vmatprep.subr.bf16.mxu0 0
        %643 = vmatpush1.bf16.msra.mxu0 0
        %644 = vmatprep.subr.bf16.mxu0 0
        %645 = vmatpush1.bf16.msra.mxu0 0
        %646 = vmatprep.subr.bf16.mxu0 0
        %647 = vmatpush1.bf16.msra.mxu0 0
        %648 = vmatprep.subr.bf16.mxu0 0
        %649 = vmatpush1.bf16.msra.mxu0 0
        %650 = vmatprep.subr.bf16.mxu0 0
        %651 = vmatpush1.bf16.msra.mxu0 0
        %652 = vmatprep.subr.bf16.mxu0 0
        %653 = vmatpush1.bf16.msra.mxu0 0
        %654 = vmatprep.subr.bf16.mxu0 0
        %655 = vmatpush1.bf16.msra.mxu0 0
        %656 = vmatprep.subr.bf16.mxu0 0
        %657 = vmatpush1.bf16.msra.mxu0 0
        %658 = vmatprep.subr.bf16.mxu0 0
        %659 = vmatpush1.bf16.msra.mxu0 0
        %660 = vmatprep.subr.bf16.mxu0 0
        %661 = vmatpush1.bf16.msra.mxu0 0
        %662 = vmatprep.mubr.bf16.mxu0 0
        %663 = vmatmul.mubr.bf16.gmra.mrb[0].mxu0 %v628
        %v664 = vpop.f32.mrb[0].mxu0
        %v665 = vadd.f32 %v598, %v664
        %v666 = vpop.f32.mrb[0].mxu0
        %v667 = vpop.f32.mrb[0].mxu0
        %v668 = vpop.f32.mrb[0].mxu0
        %669 = vdwg.mxu0
        %v674 = vunpack.c.l.b16 %v574
        %v675 = vunpack.c.l.b16 %v575
        %v676 = vunpack.c.l.b16 %v576
        %v677 = vunpack.c.l.b16 %v577
        %v678 = vpack.c.b16 %v675, %v674
        %v679 = vpack.c.b16 %v677, %v676
        %682 = vmatprep.subr.bf16.mxu0 0
        %683 = vmatpush1.bf16.msra.mxu0 %v678
        %684 = vmatprep.subr.bf16.mxu0 0
        %685 = vmatpush1.bf16.msra.mxu0 %v679
        %686 = vmatprep.subr.bf16.mxu0 0
        %687 = vmatpush1.bf16.msra.mxu0 0
        %688 = vmatprep.subr.bf16.mxu0 0
        %689 = vmatpush1.bf16.msra.mxu0 0
        %690 = vmatprep.subr.bf16.mxu0 0
        %691 = vmatpush1.bf16.msra.mxu0 0
        %692 = vmatprep.subr.bf16.mxu0 0
        %693 = vmatpush1.bf16.msra.mxu0 0
        %694 = vmatprep.subr.bf16.mxu0 0
        %695 = vmatpush1.bf16.msra.mxu0 0
        %696 = vmatprep.subr.bf16.mxu0 0
        %697 = vmatpush1.bf16.msra.mxu0 0
        %698 = vmatprep.subr.bf16.mxu0 0
        %699 = vmatpush1.bf16.msra.mxu0 0
        %700 = vmatprep.subr.bf16.mxu0 0
        %701 = vmatpush1.bf16.msra.mxu0 0
        %702 = vmatprep.subr.bf16.mxu0 0
        %703 = vmatpush1.bf16.msra.mxu0 0
        %704 = vmatprep.subr.bf16.mxu0 0
        %705 = vmatpush1.bf16.msra.mxu0 0
        %706 = vmatprep.subr.bf16.mxu0 0
        %707 = vmatpush1.bf16.msra.mxu0 0
        %708 = vmatprep.subr.bf16.mxu0 0
        %709 = vmatpush1.bf16.msra.mxu0 0
        %710 = vmatprep.subr.bf16.mxu0 0
        %711 = vmatpush1.bf16.msra.mxu0 0
        %712 = vmatprep.subr.bf16.mxu0 0
        %713 = vmatpush1.bf16.msra.mxu0 0
        %714 = vmatprep.mubr.bf16.mxu0 0
        %715 = vmatmul.mubr.bf16.gmra.mrb[0].mxu0 %v628
        %v716 = vpop.f32.mrb[0].mxu0
        %v717 = vadd.f32 %v602, %v716
        %v718 = vpop.f32.mrb[0].mxu0
        %v719 = vpop.f32.mrb[0].mxu0
        %v720 = vpop.f32.mrb[0].mxu0
        %721 = vdwg.mxu0
        %v726 = vunpack.c.l.b16 %v578
        %v727 = vunpack.c.l.b16 %v579
        %v728 = vunpack.c.l.b16 %v580
        %v729 = vunpack.c.l.b16 %v581
        %v730 = vpack.c.b16 %v727, %v726
        %v731 = vpack.c.b16 %v729, %v728
        %734 = vmatprep.subr.bf16.mxu0 0
        %735 = vmatpush1.bf16.msra.mxu0 %v730
        %736 = vmatprep.subr.bf16.mxu0 0
        %737 = vmatpush1.bf16.msra.mxu0 %v731
        %738 = vmatprep.subr.bf16.mxu0 0
        %739 = vmatpush1.bf16.msra.mxu0 0
        %740 = vmatprep.subr.bf16.mxu0 0
        %741 = vmatpush1.bf16.msra.mxu0 0
        %742 = vmatprep.subr.bf16.mxu0 0
        %743 = vmatpush1.bf16.msra.mxu0 0
        %744 = vmatprep.subr.bf16.mxu0 0
        %745 = vmatpush1.bf16.msra.mxu0 0
        %746 = vmatprep.subr.bf16.mxu0 0
        %747 = vmatpush1.bf16.msra.mxu0 0
        %748 = vmatprep.subr.bf16.mxu0 0
        %749 = vmatpush1.bf16.msra.mxu0 0
        %750 = vmatprep.subr.bf16.mxu0 0
        %751 = vmatpush1.bf16.msra.mxu0 0
        %752 = vmatprep.subr.bf16.mxu0 0
        %753 = vmatpush1.bf16.msra.mxu0 0
        %754 = vmatprep.subr.bf16.mxu0 0
        %755 = vmatpush1.bf16.msra.mxu0 0
        %756 = vmatprep.subr.bf16.mxu0 0
        %757 = vmatpush1.bf16.msra.mxu0 0
        %758 = vmatprep.subr.bf16.mxu0 0
        %759 = vmatpush1.bf16.msra.mxu0 0
        %760 = vmatprep.subr.bf16.mxu0 0
        %761 = vmatpush1.bf16.msra.mxu0 0
        %762 = vmatprep.subr.bf16.mxu0 0
        %763 = vmatpush1.bf16.msra.mxu0 0
        %764 = vmatprep.subr.bf16.mxu0 0
        %765 = vmatpush1.bf16.msra.mxu0 0
        %766 = vmatprep.mubr.bf16.mxu0 0
        %767 = vmatmul.mubr.bf16.gmra.mrb[0].mxu0 %v628
        %v768 = vpop.f32.mrb[0].mxu0
        %v769 = vadd.f32 %v606, %v768
        %v770 = vpop.f32.mrb[0].mxu0
        %v771 = vpop.f32.mrb[0].mxu0
        %v772 = vpop.f32.mrb[0].mxu0
        %773 = vdwg.mxu0
        %v778 = vunpack.c.l.b16 %v582
        %v779 = vunpack.c.l.b16 %v583
        %v780 = vunpack.c.l.b16 %v584
        %v781 = vunpack.c.l.b16 %v585
        %v782 = vpack.c.b16 %v779, %v778
        %v783 = vpack.c.b16 %v781, %v780
        %786 = vmatprep.subr.bf16.mxu0 0
        %787 = vmatpush1.bf16.msra.mxu0 %v782
        %788 = vmatprep.subr.bf16.mxu0 0
        %789 = vmatpush1.bf16.msra.mxu0 %v783
        %790 = vmatprep.subr.bf16.mxu0 0
        %791 = vmatpush1.bf16.msra.mxu0 0
        %792 = vmatprep.subr.bf16.mxu0 0
        %793 = vmatpush1.bf16.msra.mxu0 0
        %794 = vmatprep.subr.bf16.mxu0 0
        %795 = vmatpush1.bf16.msra.mxu0 0
        %796 = vmatprep.subr.bf16.mxu0 0
        %797 = vmatpush1.bf16.msra.mxu0 0
        %798 = vmatprep.subr.bf16.mxu0 0
        %799 = vmatpush1.bf16.msra.mxu0 0
        %800 = vmatprep.subr.bf16.mxu0 0
        %801 = vmatpush1.bf16.msra.mxu0 0
        %802 = vmatprep.subr.bf16.mxu0 0
        %803 = vmatpush1.bf16.msra.mxu0 0
        %804 = vmatprep.subr.bf16.mxu0 0
        %805 = vmatpush1.bf16.msra.mxu0 0
        %806 = vmatprep.subr.bf16.mxu0 0
        %807 = vmatpush1.bf16.msra.mxu0 0
        %808 = vmatprep.subr.bf16.mxu0 0
        %809 = vmatpush1.bf16.msra.mxu0 0
        %810 = vmatprep.subr.bf16.mxu0 0
        %811 = vmatpush1.bf16.msra.mxu0 0
        %812 = vmatprep.subr.bf16.mxu0 0
        %813 = vmatpush1.bf16.msra.mxu0 0
        %814 = vmatprep.subr.bf16.mxu0 0
        %815 = vmatpush1.bf16.msra.mxu0 0
        %816 = vmatprep.subr.bf16.mxu0 0
        %817 = vmatpush1.bf16.msra.mxu0 0
        %818 = vmatprep.mubr.bf16.mxu0 0
        %819 = vmatmul.mubr.bf16.gmra.mrb[0].mxu0 %v628
        %v820 = vpop.f32.mrb[0].mxu0
        %v821 = vadd.f32 %v610, %v820
        %v822 = vpop.f32.mrb[0].mxu0
        %v823 = vpop.f32.mrb[0].mxu0
        %v824 = vpop.f32.mrb[0].mxu0
        %825 = vdwg.mxu0
        %v826 = vld [vmem:[%s307] sm:$0xff]
        %v827 = vpack.c.bf16 %v826, %v826
        %s828 = scalar_lea.vmem %s3, 128
        %v829 = vld [vmem:[%s828] sm:$0xf]
        %v830 = vld [vmem:[%s828 + $0x4] sm:$0xf]
        %v831 = vld [vmem:[%s828 + $0x8] sm:$0xf]
        %v832 = vld [vmem:[%s828 + $0xc] sm:$0xf]
        %v833 = vld [vmem:[%s828 + $0x10] sm:$0xf]
        %v834 = vld [vmem:[%s828 + $0x14] sm:$0xf]
        %v835 = vld [vmem:[%s828 + $0x18] sm:$0xf]
        %v836 = vld [vmem:[%s828 + $0x1c] sm:$0xf]
        %v837 = vld [vmem:[%s828 + $0x20] sm:$0xf]
        %v838 = vld [vmem:[%s828 + $0x24] sm:$0xf]
        %v839 = vld [vmem:[%s828 + $0x28] sm:$0xf]
        %v840 = vld [vmem:[%s828 + $0x2c] sm:$0xf]
        %v841 = vld [vmem:[%s828 + $0x30] sm:$0xf]
        %v842 = vld [vmem:[%s828 + $0x34] sm:$0xf]
        %v843 = vld [vmem:[%s828 + $0x38] sm:$0xf]
        %v844 = vld [vmem:[%s828 + $0x3c] sm:$0xf]
        %s845 = scalar_lea.vmem %s4, 8
        %v846 = vld [vmem:[%s845] sm:$0x1]
        %v847 = vld [vmem:[%s845 + $0x1] sm:$0x1]
        %v848 = vld [vmem:[%s845 + $0x2] sm:$0x1]
        %v849 = vld [vmem:[%s845 + $0x3] sm:$0x1]
        %v854 = vlaneseq
        %v855 = vshrl.u32 %v854, 7
        %v856 = vsub.s32 0, %v855
        %v857 = vrot.slane %v846, %v856
        %v858 = vlaneseq
        %v859 = vshrl.u32 %v858, 7
        %v860 = vsub.s32 0, %v859
        %v861 = vrot.slane %v847, %v860
        %v862 = vlaneseq
        %v863 = vshrl.u32 %v862, 7
        %v864 = vsub.s32 0, %v863
        %v865 = vrot.slane %v848, %v864
        %v866 = vlaneseq
        %v867 = vshrl.u32 %v866, 7
        %v868 = vsub.s32 0, %v867
        %v869 = vrot.slane %v849, %v868
        %v878 = vunpack.c.l.b16 %v829
        %v879 = vunpack.c.l.b16 %v830
        %v880 = vunpack.c.l.b16 %v831
        %v881 = vunpack.c.l.b16 %v832
        %v882 = vpack.c.b16 %v879, %v878
        %v883 = vpack.c.b16 %v881, %v880
        %v887 = vsel %vm367, %v827, 0
        %889 = vmatprep.subr.bf16.mxu0 0
        %890 = vmatpush1.bf16.msra.mxu0 %v882
        %891 = vmatprep.subr.bf16.mxu0 0
        %892 = vmatpush1.bf16.msra.mxu0 %v883
        %893 = vmatprep.subr.bf16.mxu0 0
        %894 = vmatpush1.bf16.msra.mxu0 0
        %895 = vmatprep.subr.bf16.mxu0 0
        %896 = vmatpush1.bf16.msra.mxu0 0
        %897 = vmatprep.subr.bf16.mxu0 0
        %898 = vmatpush1.bf16.msra.mxu0 0
        %899 = vmatprep.subr.bf16.mxu0 0
        %900 = vmatpush1.bf16.msra.mxu0 0
        %901 = vmatprep.subr.bf16.mxu0 0
        %902 = vmatpush1.bf16.msra.mxu0 0
        %903 = vmatprep.subr.bf16.mxu0 0
        %904 = vmatpush1.bf16.msra.mxu0 0
        %905 = vmatprep.subr.bf16.mxu0 0
        %906 = vmatpush1.bf16.msra.mxu0 0
        %907 = vmatprep.subr.bf16.mxu0 0
        %908 = vmatpush1.bf16.msra.mxu0 0
        %909 = vmatprep.subr.bf16.mxu0 0
        %910 = vmatpush1.bf16.msra.mxu0 0
        %911 = vmatprep.subr.bf16.mxu0 0
        %912 = vmatpush1.bf16.msra.mxu0 0
        %913 = vmatprep.subr.bf16.mxu0 0
        %914 = vmatpush1.bf16.msra.mxu0 0
        %915 = vmatprep.subr.bf16.mxu0 0
        %916 = vmatpush1.bf16.msra.mxu0 0
        %917 = vmatprep.subr.bf16.mxu0 0
        %918 = vmatpush1.bf16.msra.mxu0 0
        %919 = vmatprep.subr.bf16.mxu0 0
        %920 = vmatpush1.bf16.msra.mxu0 0
        %921 = vmatprep.mubr.bf16.mxu0 0
        %922 = vmatmul.mubr.bf16.gmra.mrb[0].mxu0 %v887
        %v923 = vpop.f32.mrb[0].mxu0
        %v924 = vadd.f32 %v857, %v923
        %v925 = vpop.f32.mrb[0].mxu0
        %v926 = vpop.f32.mrb[0].mxu0
        %v927 = vpop.f32.mrb[0].mxu0
        %928 = vdwg.mxu0
        %v933 = vunpack.c.l.b16 %v833
        %v934 = vunpack.c.l.b16 %v834
        %v935 = vunpack.c.l.b16 %v835
        %v936 = vunpack.c.l.b16 %v836
        %v937 = vpack.c.b16 %v934, %v933
        %v938 = vpack.c.b16 %v936, %v935
        %941 = vmatprep.subr.bf16.mxu0 0
        %942 = vmatpush1.bf16.msra.mxu0 %v937
        %943 = vmatprep.subr.bf16.mxu0 0
        %944 = vmatpush1.bf16.msra.mxu0 %v938
        %945 = vmatprep.subr.bf16.mxu0 0
        %946 = vmatpush1.bf16.msra.mxu0 0
        %947 = vmatprep.subr.bf16.mxu0 0
        %948 = vmatpush1.bf16.msra.mxu0 0
        %949 = vmatprep.subr.bf16.mxu0 0
        %950 = vmatpush1.bf16.msra.mxu0 0
        %951 = vmatprep.subr.bf16.mxu0 0
        %952 = vmatpush1.bf16.msra.mxu0 0
        %953 = vmatprep.subr.bf16.mxu0 0
        %954 = vmatpush1.bf16.msra.mxu0 0
        %955 = vmatprep.subr.bf16.mxu0 0
        %956 = vmatpush1.bf16.msra.mxu0 0
        %957 = vmatprep.subr.bf16.mxu0 0
        %958 = vmatpush1.bf16.msra.mxu0 0
        %959 = vmatprep.subr.bf16.mxu0 0
        %960 = vmatpush1.bf16.msra.mxu0 0
        %961 = vmatprep.subr.bf16.mxu0 0
        %962 = vmatpush1.bf16.msra.mxu0 0
        %963 = vmatprep.subr.bf16.mxu0 0
        %964 = vmatpush1.bf16.msra.mxu0 0
        %965 = vmatprep.subr.bf16.mxu0 0
        %966 = vmatpush1.bf16.msra.mxu0 0
        %967 = vmatprep.subr.bf16.mxu0 0
        %968 = vmatpush1.bf16.msra.mxu0 0
        %969 = vmatprep.subr.bf16.mxu0 0
        %970 = vmatpush1.bf16.msra.mxu0 0
        %971 = vmatprep.subr.bf16.mxu0 0
        %972 = vmatpush1.bf16.msra.mxu0 0
        %973 = vmatprep.mubr.bf16.mxu0 0
        %974 = vmatmul.mubr.bf16.gmra.mrb[0].mxu0 %v887
        %v975 = vpop.f32.mrb[0].mxu0
        %v976 = vadd.f32 %v861, %v975
        %v977 = vpop.f32.mrb[0].mxu0
        %v978 = vpop.f32.mrb[0].mxu0
        %v979 = vpop.f32.mrb[0].mxu0
        %980 = vdwg.mxu0
        %v985 = vunpack.c.l.b16 %v837
        %v986 = vunpack.c.l.b16 %v838
        %v987 = vunpack.c.l.b16 %v839
        %v988 = vunpack.c.l.b16 %v840
        %v989 = vpack.c.b16 %v986, %v985
        %v990 = vpack.c.b16 %v988, %v987
        %993 = vmatprep.subr.bf16.mxu0 0
        %994 = vmatpush1.bf16.msra.mxu0 %v989
        %995 = vmatprep.subr.bf16.mxu0 0
        %996 = vmatpush1.bf16.msra.mxu0 %v990
        %997 = vmatprep.subr.bf16.mxu0 0
        %998 = vmatpush1.bf16.msra.mxu0 0
        %999 = vmatprep.subr.bf16.mxu0 0
        %1000 = vmatpush1.bf16.msra.mxu0 0
        %1001 = vmatprep.subr.bf16.mxu0 0
        %1002 = vmatpush1.bf16.msra.mxu0 0
        %1003 = vmatprep.subr.bf16.mxu0 0
        %1004 = vmatpush1.bf16.msra.mxu0 0
        %1005 = vmatprep.subr.bf16.mxu0 0
        %1006 = vmatpush1.bf16.msra.mxu0 0
        %1007 = vmatprep.subr.bf16.mxu0 0
        %1008 = vmatpush1.bf16.msra.mxu0 0
        %1009 = vmatprep.subr.bf16.mxu0 0
        %1010 = vmatpush1.bf16.msra.mxu0 0
        %1011 = vmatprep.subr.bf16.mxu0 0
        %1012 = vmatpush1.bf16.msra.mxu0 0
        %1013 = vmatprep.subr.bf16.mxu0 0
        %1014 = vmatpush1.bf16.msra.mxu0 0
        %1015 = vmatprep.subr.bf16.mxu0 0
        %1016 = vmatpush1.bf16.msra.mxu0 0
        %1017 = vmatprep.subr.bf16.mxu0 0
        %1018 = vmatpush1.bf16.msra.mxu0 0
        %1019 = vmatprep.subr.bf16.mxu0 0
        %1020 = vmatpush1.bf16.msra.mxu0 0
        %1021 = vmatprep.subr.bf16.mxu0 0
        %1022 = vmatpush1.bf16.msra.mxu0 0
        %1023 = vmatprep.subr.bf16.mxu0 0
        %1024 = vmatpush1.bf16.msra.mxu0 0
        %1025 = vmatprep.mubr.bf16.mxu0 0
        %1026 = vmatmul.mubr.bf16.gmra.mrb[0].mxu0 %v887
        %v1027 = vpop.f32.mrb[0].mxu0
        %v1028 = vadd.f32 %v865, %v1027
        %v1029 = vpop.f32.mrb[0].mxu0
        %v1030 = vpop.f32.mrb[0].mxu0
        %v1031 = vpop.f32.mrb[0].mxu0
        %1032 = vdwg.mxu0
        %v1037 = vunpack.c.l.b16 %v841
        %v1038 = vunpack.c.l.b16 %v842
        %v1039 = vunpack.c.l.b16 %v843
        %v1040 = vunpack.c.l.b16 %v844
        %v1041 = vpack.c.b16 %v1038, %v1037
        %v1042 = vpack.c.b16 %v1040, %v1039
        %1045 = vmatprep.subr.bf16.mxu0 0
        %1046 = vmatpush1.bf16.msra.mxu0 %v1041
        %1047 = vmatprep.subr.bf16.mxu0 0
        %1048 = vmatpush1.bf16.msra.mxu0 %v1042
        %1049 = vmatprep.subr.bf16.mxu0 0
        %1050 = vmatpush1.bf16.msra.mxu0 0
        %1051 = vmatprep.subr.bf16.mxu0 0
        %1052 = vmatpush1.bf16.msra.mxu0 0
        %1053 = vmatprep.subr.bf16.mxu0 0
        %1054 = vmatpush1.bf16.msra.mxu0 0
        %1055 = vmatprep.subr.bf16.mxu0 0
        %1056 = vmatpush1.bf16.msra.mxu0 0
        %1057 = vmatprep.subr.bf16.mxu0 0
        %1058 = vmatpush1.bf16.msra.mxu0 0
        %1059 = vmatprep.subr.bf16.mxu0 0
        %1060 = vmatpush1.bf16.msra.mxu0 0
        %1061 = vmatprep.subr.bf16.mxu0 0
        %1062 = vmatpush1.bf16.msra.mxu0 0
        %1063 = vmatprep.subr.bf16.mxu0 0
        %1064 = vmatpush1.bf16.msra.mxu0 0
        %1065 = vmatprep.subr.bf16.mxu0 0
        %1066 = vmatpush1.bf16.msra.mxu0 0
        %1067 = vmatprep.subr.bf16.mxu0 0
        %1068 = vmatpush1.bf16.msra.mxu0 0
        %1069 = vmatprep.subr.bf16.mxu0 0
        %1070 = vmatpush1.bf16.msra.mxu0 0
        %1071 = vmatprep.subr.bf16.mxu0 0
        %1072 = vmatpush1.bf16.msra.mxu0 0
        %1073 = vmatprep.subr.bf16.mxu0 0
        %1074 = vmatpush1.bf16.msra.mxu0 0
        %1075 = vmatprep.subr.bf16.mxu0 0
        %1076 = vmatpush1.bf16.msra.mxu0 0
        %1077 = vmatprep.mubr.bf16.mxu0 0
        %1078 = vmatmul.mubr.bf16.gmra.mrb[0].mxu0 %v887
        %v1079 = vpop.f32.mrb[0].mxu0
        %v1080 = vadd.f32 %v869, %v1079
        %v1081 = vpop.f32.mrb[0].mxu0
        %v1082 = vpop.f32.mrb[0].mxu0
        %v1083 = vpop.f32.mrb[0].mxu0
        %1084 = vdwg.mxu0
        %v1085 = vpack.c.bf16 %v406, %v406
        %v1086 = vpack.c.bf16 %v458, %v458
        %v1087 = vpack.c.bf16 %v510, %v510
        %v1088 = vpack.c.bf16 %v562, %v562
        %v1089 = vpack.c.bf16 %v665, %v665
        %v1090 = vpack.c.bf16 %v717, %v717
        %v1091 = vpack.c.bf16 %v769, %v769
        %v1092 = vpack.c.bf16 %v821, %v821
        %vm1093 = vcmask 64512
        %v1095 = vsel %vm1093, %v1085, 0
        %v1098 = vsel %vm1093, %v1089, 0
        %1100 = vmatprep.subr.bf16.mxu0 0
        %1101 = vmatpush1.bf16.xpose.msra.mxu0 %v1098
        %1102 = vmatprep.subr.bf16.mxu0 0
        %1103 = vmatpush1.bf16.xpose.msra.mxu0 0
        %1104 = vmatprep.subr.bf16.mxu0 0
        %1105 = vmatpush1.bf16.xpose.msra.mxu0 0
        %1106 = vmatprep.subr.bf16.mxu0 0
        %1107 = vmatpush1.bf16.xpose.msra.mxu0 0
        %1108 = vmatprep.subr.bf16.mxu0 0
        %1109 = vmatpush1.bf16.xpose.msra.mxu0 0
        %1110 = vmatprep.subr.bf16.mxu0 0
        %1111 = vmatpush1.bf16.xpose.msra.mxu0 0
        %1112 = vmatprep.subr.bf16.mxu0 0
        %1113 = vmatpush1.bf16.xpose.msra.mxu0 0
        %1114 = vmatprep.subr.bf16.mxu0 0
        %1115 = vmatpush1.bf16.xpose.msra.mxu0 0
        %1116 = vmatprep.subr.bf16.mxu0 0
        %1117 = vmatpush1.bf16.xpose.msra.mxu0 0
        %1118 = vmatprep.subr.bf16.mxu0 0
        %1119 = vmatpush1.bf16.xpose.msra.mxu0 0
        %1120 = vmatprep.subr.bf16.mxu0 0
        %1121 = vmatpush1.bf16.xpose.msra.mxu0 0
        %1122 = vmatprep.subr.bf16.mxu0 0
        %1123 = vmatpush1.bf16.xpose.msra.mxu0 0
        %1124 = vmatprep.subr.bf16.mxu0 0
        %1125 = vmatpush1.bf16.xpose.msra.mxu0 0
        %1126 = vmatprep.subr.bf16.mxu0 0
        %1127 = vmatpush1.bf16.xpose.msra.mxu0 0
        %1128 = vmatprep.subr.bf16.mxu0 0
        %1129 = vmatpush1.bf16.xpose.msra.mxu0 0
        %1130 = vmatprep.subr.bf16.mxu0 0
        %1131 = vmatpush1.bf16.xpose.msra.mxu0 0
        %1132 = vmatprep.mubr.bf16.mxu0 0
        %1133 = vmatmul.mubr.bf16.gmra.mrb[0].mxu0 %v1095
        %v1134 = vpop.f32.mrb[0].mxu0
        %v1135 = vadd.f32 0.0, %v1134
        %v1136 = vpop.f32.mrb[0].mxu0
        %v1137 = vpop.f32.mrb[0].mxu0
        %v1138 = vpop.f32.mrb[0].mxu0
        %1139 = vdwg.mxu0
        %v1141 = vsel %vm1093, %v1086, 0
        %v1144 = vsel %vm1093, %v1090, 0
        %1146 = vmatprep.subr.bf16.mxu0 0
        %1147 = vmatpush1.bf16.xpose.msra.mxu0 %v1144
        %1148 = vmatprep.subr.bf16.mxu0 0
        %1149 = vmatpush1.bf16.xpose.msra.mxu0 0
        %1150 = vmatprep.subr.bf16.mxu0 0
        %1151 = vmatpush1.bf16.xpose.msra.mxu0 0
        %1152 = vmatprep.subr.bf16.mxu0 0
        %1153 = vmatpush1.bf16.xpose.msra.mxu0 0
        %1154 = vmatprep.subr.bf16.mxu0 0
        %1155 = vmatpush1.bf16.xpose.msra.mxu0 0
        %1156 = vmatprep.subr.bf16.mxu0 0
        %1157 = vmatpush1.bf16.xpose.msra.mxu0 0
        %1158 = vmatprep.subr.bf16.mxu0 0
        %1159 = vmatpush1.bf16.xpose.msra.mxu0 0
        %1160 = vmatprep.subr.bf16.mxu0 0
        %1161 = vmatpush1.bf16.xpose.msra.mxu0 0
        %1162 = vmatprep.subr.bf16.mxu0 0
        %1163 = vmatpush1.bf16.xpose.msra.mxu0 0
        %1164 = vmatprep.subr.bf16.mxu0 0
        %1165 = vmatpush1.bf16.xpose.msra.mxu0 0
        %1166 = vmatprep.subr.bf16.mxu0 0
        %1167 = vmatpush1.bf16.xpose.msra.mxu0 0
        %1168 = vmatprep.subr.bf16.mxu0 0
        %1169 = vmatpush1.bf16.xpose.msra.mxu0 0
        %1170 = vmatprep.subr.bf16.mxu0 0
        %1171 = vmatpush1.bf16.xpose.msra.mxu0 0
        %1172 = vmatprep.subr.bf16.mxu0 0
        %1173 = vmatpush1.bf16.xpose.msra.mxu0 0
        %1174 = vmatprep.subr.bf16.mxu0 0
        %1175 = vmatpush1.bf16.xpose.msra.mxu0 0
        %1176 = vmatprep.subr.bf16.mxu0 0
        %1177 = vmatpush1.bf16.xpose.msra.mxu0 0
        %1178 = vmatprep.mubr.bf16.mxu0 0
        %1179 = vmatmul.mubr.bf16.gmra.mrb[0].mxu0 %v1141
        %v1180 = vpop.f32.mrb[0].mxu0
        %v1181 = vadd.f32 0.0, %v1180
        %v1182 = vpop.f32.mrb[0].mxu0
        %v1183 = vpop.f32.mrb[0].mxu0
        %v1184 = vpop.f32.mrb[0].mxu0
        %1185 = vdwg.mxu0
        %v1187 = vsel %vm1093, %v1087, 0
        %v1190 = vsel %vm1093, %v1091, 0
        %1192 = vmatprep.subr.bf16.mxu0 0
        %1193 = vmatpush1.bf16.xpose.msra.mxu0 %v1190
        %1194 = vmatprep.subr.bf16.mxu0 0
        %1195 = vmatpush1.bf16.xpose.msra.mxu0 0
        %1196 = vmatprep.subr.bf16.mxu0 0
        %1197 = vmatpush1.bf16.xpose.msra.mxu0 0
        %1198 = vmatprep.subr.bf16.mxu0 0
        %1199 = vmatpush1.bf16.xpose.msra.mxu0 0
        %1200 = vmatprep.subr.bf16.mxu0 0
        %1201 = vmatpush1.bf16.xpose.msra.mxu0 0
        %1202 = vmatprep.subr.bf16.mxu0 0
        %1203 = vmatpush1.bf16.xpose.msra.mxu0 0
        %1204 = vmatprep.subr.bf16.mxu0 0
        %1205 = vmatpush1.bf16.xpose.msra.mxu0 0
        %1206 = vmatprep.subr.bf16.mxu0 0
        %1207 = vmatpush1.bf16.xpose.msra.mxu0 0
        %1208 = vmatprep.subr.bf16.mxu0 0
        %1209 = vmatpush1.bf16.xpose.msra.mxu0 0
        %1210 = vmatprep.subr.bf16.mxu0 0
        %1211 = vmatpush1.bf16.xpose.msra.mxu0 0
        %1212 = vmatprep.subr.bf16.mxu0 0
        %1213 = vmatpush1.bf16.xpose.msra.mxu0 0
        %1214 = vmatprep.subr.bf16.mxu0 0
        %1215 = vmatpush1.bf16.xpose.msra.mxu0 0
        %1216 = vmatprep.subr.bf16.mxu0 0
        %1217 = vmatpush1.bf16.xpose.msra.mxu0 0
        %1218 = vmatprep.subr.bf16.mxu0 0
        %1219 = vmatpush1.bf16.xpose.msra.mxu0 0
        %1220 = vmatprep.subr.bf16.mxu0 0
        %1221 = vmatpush1.bf16.xpose.msra.mxu0 0
        %1222 = vmatprep.subr.bf16.mxu0 0
        %1223 = vmatpush1.bf16.xpose.msra.mxu0 0
        %1224 = vmatprep.mubr.bf16.mxu0 0
        %1225 = vmatmul.mubr.bf16.gmra.mrb[0].mxu0 %v1187
        %v1226 = vpop.f32.mrb[0].mxu0
        %v1227 = vadd.f32 0.0, %v1226
        %v1228 = vpop.f32.mrb[0].mxu0
        %v1229 = vpop.f32.mrb[0].mxu0
        %v1230 = vpop.f32.mrb[0].mxu0
        %1231 = vdwg.mxu0
        %v1233 = vsel %vm1093, %v1088, 0
        %v1236 = vsel %vm1093, %v1092, 0
        %1238 = vmatprep.subr.bf16.mxu0 0
        %1239 = vmatpush1.bf16.xpose.msra.mxu0 %v1236
        %1240 = vmatprep.subr.bf16.mxu0 0
        %1241 = vmatpush1.bf16.xpose.msra.mxu0 0
        %1242 = vmatprep.subr.bf16.mxu0 0
        %1243 = vmatpush1.bf16.xpose.msra.mxu0 0
        %1244 = vmatprep.subr.bf16.mxu0 0
        %1245 = vmatpush1.bf16.xpose.msra.mxu0 0
        %1246 = vmatprep.subr.bf16.mxu0 0
        %1247 = vmatpush1.bf16.xpose.msra.mxu0 0
        %1248 = vmatprep.subr.bf16.mxu0 0
        %1249 = vmatpush1.bf16.xpose.msra.mxu0 0
        %1250 = vmatprep.subr.bf16.mxu0 0
        %1251 = vmatpush1.bf16.xpose.msra.mxu0 0
        %1252 = vmatprep.subr.bf16.mxu0 0
        %1253 = vmatpush1.bf16.xpose.msra.mxu0 0
        %1254 = vmatprep.subr.bf16.mxu0 0
        %1255 = vmatpush1.bf16.xpose.msra.mxu0 0
        %1256 = vmatprep.subr.bf16.mxu0 0
        %1257 = vmatpush1.bf16.xpose.msra.mxu0 0
        %1258 = vmatprep.subr.bf16.mxu0 0
        %1259 = vmatpush1.bf16.xpose.msra.mxu0 0
        %1260 = vmatprep.subr.bf16.mxu0 0
        %1261 = vmatpush1.bf16.xpose.msra.mxu0 0
        %1262 = vmatprep.subr.bf16.mxu0 0
        %1263 = vmatpush1.bf16.xpose.msra.mxu0 0
        %1264 = vmatprep.subr.bf16.mxu0 0
        %1265 = vmatpush1.bf16.xpose.msra.mxu0 0
        %1266 = vmatprep.subr.bf16.mxu0 0
        %1267 = vmatpush1.bf16.xpose.msra.mxu0 0
        %1268 = vmatprep.subr.bf16.mxu0 0
        %1269 = vmatpush1.bf16.xpose.msra.mxu0 0
        %1270 = vmatprep.mubr.bf16.mxu0 0
        %1271 = vmatmul.mubr.bf16.gmra.mrb[0].mxu0 %v1233
        %v1272 = vpop.f32.mrb[0].mxu0
        %v1273 = vadd.f32 0.0, %v1272
        %v1274 = vpop.f32.mrb[0].mxu0
        %v1275 = vpop.f32.mrb[0].mxu0
        %v1276 = vpop.f32.mrb[0].mxu0
        %1277 = vdwg.mxu0
        %v1278 = vsel %vm1093, %v1135, -inf
        %1279 = vmax.xlane.f32.xlu0 %v1278
        %v1280 = vpop.xlane.xlu0 %1279
        %v1281 = vsel %vm1093, %v1181, -inf
        %1282 = vmax.xlane.f32.xlu0 %v1281
        %v1283 = vpop.xlane.xlu0 %1282
        %v1284 = vsel %vm1093, %v1227, -inf
        %1285 = vmax.xlane.f32.xlu0 %v1284
        %v1286 = vpop.xlane.xlu0 %1285
        %v1287 = vsel %vm1093, %v1273, -inf
        %1288 = vmax.xlane.f32.xlu0 %v1287
        %v1289 = vpop.xlane.xlu0 %1288
        %v1290 = vsub.f32 %v1135, %v1280
        %v1291 = vsub.f32 %v1181, %v1283
        %v1292 = vsub.f32 %v1227, %v1286
        %v1293 = vsub.f32 %v1273, %v1289
        %v1294 = vmul.f32 %v1290, 1.442695
        %v1295 = vpow.pop %v1294
        %v1296 = vmul.f32 %v1291, 1.442695
        %v1297 = vpow.pop %v1296
        %v1298 = vmul.f32 %v1292, 1.442695
        %v1299 = vpow.pop %v1298
        %v1300 = vmul.f32 %v1293, 1.442695
        %v1301 = vpow.pop %v1300
        %v1302 = vsel %vm1093, %v1295, 0.0
        %1303 = vadd.xlane.f32.xlu0 %v1302
        %v1304 = vpop.xlane.xlu0 %1303
        %v1305 = vsel %vm1093, %v1297, 0.0
        %1306 = vadd.xlane.f32.xlu0 %v1305
        %v1307 = vpop.xlane.xlu0 %1306
        %v1308 = vsel %vm1093, %v1299, 0.0
        %1309 = vadd.xlane.f32.xlu0 %v1308
        %v1310 = vpop.xlane.xlu0 %1309
        %v1311 = vsel %vm1093, %v1301, 0.0
        %1312 = vadd.xlane.f32.xlu0 %v1311
        %v1313 = vpop.xlane.xlu0 %1312
        %v1314 = vrcp.pop %v1304
        %v1315 = vrcp.pop %v1307
        %v1316 = vrcp.pop %v1310
        %v1317 = vrcp.pop %v1313
        %v1318 = vmul.f32 %v1295, %v1314
        %v1319 = vmul.f32 %v1297, %v1315
        %v1320 = vmul.f32 %v1299, %v1316
        %v1321 = vmul.f32 %v1301, %v1317
        %v1322 = vpack.c.bf16 %v1318, %v1318
        %v1323 = vpack.c.bf16 %v1319, %v1319
        %v1324 = vpack.c.bf16 %v1320, %v1320
        %v1325 = vpack.c.bf16 %v1321, %v1321
        %v1326 = vpack.c.bf16 %v924, %v924
        %v1327 = vpack.c.bf16 %v976, %v976
        %v1328 = vpack.c.bf16 %v1028, %v1028
        %v1329 = vpack.c.bf16 %v1080, %v1080
        %v1331 = vsel %vm1093, %v1322, 0
        %vm1333 = vcmask 1043456
        %v1335 = vsel %vm1333, %v1326, 0
        %1337 = vmatprep.subr.bf16.mxu0 0
        %1338 = vmatpush1.bf16.msra.mxu0 %v1335
        %1339 = vmatprep.subr.bf16.mxu0 0
        %1340 = vmatpush1.bf16.msra.mxu0 0
        %1341 = vmatprep.subr.bf16.mxu0 0
        %1342 = vmatpush1.bf16.msra.mxu0 0
        %1343 = vmatprep.subr.bf16.mxu0 0
        %1344 = vmatpush1.bf16.msra.mxu0 0
        %1345 = vmatprep.subr.bf16.mxu0 0
        %1346 = vmatpush1.bf16.msra.mxu0 0
        %1347 = vmatprep.subr.bf16.mxu0 0
        %1348 = vmatpush1.bf16.msra.mxu0 0
        %1349 = vmatprep.subr.bf16.mxu0 0
        %1350 = vmatpush1.bf16.msra.mxu0 0
        %1351 = vmatprep.subr.bf16.mxu0 0
        %1352 = vmatpush1.bf16.msra.mxu0 0
        %1353 = vmatprep.subr.bf16.mxu0 0
        %1354 = vmatpush1.bf16.msra.mxu0 0
        %1355 = vmatprep.subr.bf16.mxu0 0
        %1356 = vmatpush1.bf16.msra.mxu0 0
        %1357 = vmatprep.subr.bf16.mxu0 0
        %1358 = vmatpush1.bf16.msra.mxu0 0
        %1359 = vmatprep.subr.bf16.mxu0 0
        %1360 = vmatpush1.bf16.msra.mxu0 0
        %1361 = vmatprep.subr.bf16.mxu0 0
        %1362 = vmatpush1.bf16.msra.mxu0 0
        %1363 = vmatprep.subr.bf16.mxu0 0
        %1364 = vmatpush1.bf16.msra.mxu0 0
        %1365 = vmatprep.subr.bf16.mxu0 0
        %1366 = vmatpush1.bf16.msra.mxu0 0
        %1367 = vmatprep.subr.bf16.mxu0 0
        %1368 = vmatpush1.bf16.msra.mxu0 0
        %1369 = vmatprep.mubr.bf16.mxu0 0
        %1370 = vmatmul.mubr.bf16.gmra.mrb[0].mxu0 %v1331
        %v1371 = vpop.f32.mrb[0].mxu0
        %v1372 = vadd.f32 0.0, %v1371
        %v1373 = vpop.f32.mrb[0].mxu0
        %v1374 = vpop.f32.mrb[0].mxu0
        %v1375 = vpop.f32.mrb[0].mxu0
        %1376 = vdwg.mxu0
        %v1378 = vsel %vm1093, %v1323, 0
        %v1381 = vsel %vm1333, %v1327, 0
        %1383 = vmatprep.subr.bf16.mxu0 0
        %1384 = vmatpush1.bf16.msra.mxu0 %v1381
        %1385 = vmatprep.subr.bf16.mxu0 0
        %1386 = vmatpush1.bf16.msra.mxu0 0
        %1387 = vmatprep.subr.bf16.mxu0 0
        %1388 = vmatpush1.bf16.msra.mxu0 0
        %1389 = vmatprep.subr.bf16.mxu0 0
        %1390 = vmatpush1.bf16.msra.mxu0 0
        %1391 = vmatprep.subr.bf16.mxu0 0
        %1392 = vmatpush1.bf16.msra.mxu0 0
        %1393 = vmatprep.subr.bf16.mxu0 0
        %1394 = vmatpush1.bf16.msra.mxu0 0
        %1395 = vmatprep.subr.bf16.mxu0 0
        %1396 = vmatpush1.bf16.msra.mxu0 0
        %1397 = vmatprep.subr.bf16.mxu0 0
        %1398 = vmatpush1.bf16.msra.mxu0 0
        %1399 = vmatprep.subr.bf16.mxu0 0
        %1400 = vmatpush1.bf16.msra.mxu0 0
        %1401 = vmatprep.subr.bf16.mxu0 0
        %1402 = vmatpush1.bf16.msra.mxu0 0
        %1403 = vmatprep.subr.bf16.mxu0 0
        %1404 = vmatpush1.bf16.msra.mxu0 0
        %1405 = vmatprep.subr.bf16.mxu0 0
        %1406 = vmatpush1.bf16.msra.mxu0 0
        %1407 = vmatprep.subr.bf16.mxu0 0
        %1408 = vmatpush1.bf16.msra.mxu0 0
        %1409 = vmatprep.subr.bf16.mxu0 0
        %1410 = vmatpush1.bf16.msra.mxu0 0
        %1411 = vmatprep.subr.bf16.mxu0 0
        %1412 = vmatpush1.bf16.msra.mxu0 0
        %1413 = vmatprep.subr.bf16.mxu0 0
        %1414 = vmatpush1.bf16.msra.mxu0 0
        %1415 = vmatprep.mubr.bf16.mxu0 0
        %1416 = vmatmul.mubr.bf16.gmra.mrb[0].mxu0 %v1378
        %v1417 = vpop.f32.mrb[0].mxu0
        %v1418 = vadd.f32 0.0, %v1417
        %v1419 = vpop.f32.mrb[0].mxu0
        %v1420 = vpop.f32.mrb[0].mxu0
        %v1421 = vpop.f32.mrb[0].mxu0
        %1422 = vdwg.mxu0
        %v1424 = vsel %vm1093, %v1324, 0
        %v1427 = vsel %vm1333, %v1328, 0
        %1429 = vmatprep.subr.bf16.mxu0 0
        %1430 = vmatpush1.bf16.msra.mxu0 %v1427
        %1431 = vmatprep.subr.bf16.mxu0 0
        %1432 = vmatpush1.bf16.msra.mxu0 0
        %1433 = vmatprep.subr.bf16.mxu0 0
        %1434 = vmatpush1.bf16.msra.mxu0 0
        %1435 = vmatprep.subr.bf16.mxu0 0
        %1436 = vmatpush1.bf16.msra.mxu0 0
        %1437 = vmatprep.subr.bf16.mxu0 0
        %1438 = vmatpush1.bf16.msra.mxu0 0
        %1439 = vmatprep.subr.bf16.mxu0 0
        %1440 = vmatpush1.bf16.msra.mxu0 0
        %1441 = vmatprep.subr.bf16.mxu0 0
        %1442 = vmatpush1.bf16.msra.mxu0 0
        %1443 = vmatprep.subr.bf16.mxu0 0
        %1444 = vmatpush1.bf16.msra.mxu0 0
        %1445 = vmatprep.subr.bf16.mxu0 0
        %1446 = vmatpush1.bf16.msra.mxu0 0
        %1447 = vmatprep.subr.bf16.mxu0 0
        %1448 = vmatpush1.bf16.msra.mxu0 0
        %1449 = vmatprep.subr.bf16.mxu0 0
        %1450 = vmatpush1.bf16.msra.mxu0 0
        %1451 = vmatprep.subr.bf16.mxu0 0
        %1452 = vmatpush1.bf16.msra.mxu0 0
        %1453 = vmatprep.subr.bf16.mxu0 0
        %1454 = vmatpush1.bf16.msra.mxu0 0
        %1455 = vmatprep.subr.bf16.mxu0 0
        %1456 = vmatpush1.bf16.msra.mxu0 0
        %1457 = vmatprep.subr.bf16.mxu0 0
        %1458 = vmatpush1.bf16.msra.mxu0 0
        %1459 = vmatprep.subr.bf16.mxu0 0
        %1460 = vmatpush1.bf16.msra.mxu0 0
        %1461 = vmatprep.mubr.bf16.mxu0 0
        %1462 = vmatmul.mubr.bf16.gmra.mrb[0].mxu0 %v1424
        %v1463 = vpop.f32.mrb[0].mxu0
        %v1464 = vadd.f32 0.0, %v1463
        %v1465 = vpop.f32.mrb[0].mxu0
        %v1466 = vpop.f32.mrb[0].mxu0
        %v1467 = vpop.f32.mrb[0].mxu0
        %1468 = vdwg.mxu0
        %v1470 = vsel %vm1093, %v1325, 0
        %v1473 = vsel %vm1333, %v1329, 0
        %1475 = vmatprep.subr.bf16.mxu0 0
        %1476 = vmatpush1.bf16.msra.mxu0 %v1473
        %1477 = vmatprep.subr.bf16.mxu0 0
        %1478 = vmatpush1.bf16.msra.mxu0 0
        %1479 = vmatprep.subr.bf16.mxu0 0
        %1480 = vmatpush1.bf16.msra.mxu0 0
        %1481 = vmatprep.subr.bf16.mxu0 0
        %1482 = vmatpush1.bf16.msra.mxu0 0
        %1483 = vmatprep.subr.bf16.mxu0 0
        %1484 = vmatpush1.bf16.msra.mxu0 0
        %1485 = vmatprep.subr.bf16.mxu0 0
        %1486 = vmatpush1.bf16.msra.mxu0 0
        %1487 = vmatprep.subr.bf16.mxu0 0
        %1488 = vmatpush1.bf16.msra.mxu0 0
        %1489 = vmatprep.subr.bf16.mxu0 0
        %1490 = vmatpush1.bf16.msra.mxu0 0
        %1491 = vmatprep.subr.bf16.mxu0 0
        %1492 = vmatpush1.bf16.msra.mxu0 0
        %1493 = vmatprep.subr.bf16.mxu0 0
        %1494 = vmatpush1.bf16.msra.mxu0 0
        %1495 = vmatprep.subr.bf16.mxu0 0
        %1496 = vmatpush1.bf16.msra.mxu0 0
        %1497 = vmatprep.subr.bf16.mxu0 0
        %1498 = vmatpush1.bf16.msra.mxu0 0
        %1499 = vmatprep.subr.bf16.mxu0 0
        %1500 = vmatpush1.bf16.msra.mxu0 0
        %1501 = vmatprep.subr.bf16.mxu0 0
        %1502 = vmatpush1.bf16.msra.mxu0 0
        %1503 = vmatprep.subr.bf16.mxu0 0
        %1504 = vmatpush1.bf16.msra.mxu0 0
        %1505 = vmatprep.subr.bf16.mxu0 0
        %1506 = vmatpush1.bf16.msra.mxu0 0
        %1507 = vmatprep.mubr.bf16.mxu0 0
        %1508 = vmatmul.mubr.bf16.gmra.mrb[0].mxu0 %v1470
        %v1509 = vpop.f32.mrb[0].mxu0
        %v1510 = vadd.f32 0.0, %v1509
        %v1511 = vpop.f32.mrb[0].mxu0
        %v1512 = vpop.f32.mrb[0].mxu0
        %v1513 = vpop.f32.mrb[0].mxu0
        %1514 = vdwg.mxu0
        %v1515 = vpack.c.bf16 %v1372, %v1372
        %v1516 = vpack.c.bf16 %v1418, %v1418
        %v1517 = vpack.c.bf16 %v1464, %v1464
        %v1518 = vpack.c.bf16 %v1510, %v1510
        %v1519 = vld [vmem:[%s5] sm:$0xf]
        %v1520 = vld [vmem:[%s5 + $0x4] sm:$0xf]
        %v1521 = vld [vmem:[%s5 + $0x8] sm:$0xf]
        %v1522 = vld [vmem:[%s5 + $0xc] sm:$0xf]
        %v1524 = vsel %vm1093, %v1515, 0
        %v1527 = vsel %vm1333, %v1519, 0
        %1529 = vmatprep.subr.bf16.mxu0 0
        %1530 = vmatpush1.bf16.msra.mxu0 %v1527
        %1531 = vmatprep.subr.bf16.mxu0 0
        %1532 = vmatpush1.bf16.msra.mxu0 0
        %1533 = vmatprep.subr.bf16.mxu0 0
        %1534 = vmatpush1.bf16.msra.mxu0 0
        %1535 = vmatprep.subr.bf16.mxu0 0
        %1536 = vmatpush1.bf16.msra.mxu0 0
        %1537 = vmatprep.subr.bf16.mxu0 0
        %1538 = vmatpush1.bf16.msra.mxu0 0
        %1539 = vmatprep.subr.bf16.mxu0 0
        %1540 = vmatpush1.bf16.msra.mxu0 0
        %1541 = vmatprep.subr.bf16.mxu0 0
        %1542 = vmatpush1.bf16.msra.mxu0 0
        %1543 = vmatprep.subr.bf16.mxu0 0
        %1544 = vmatpush1.bf16.msra.mxu0 0
        %1545 = vmatprep.subr.bf16.mxu0 0
        %1546 = vmatpush1.bf16.msra.mxu0 0
        %1547 = vmatprep.subr.bf16.mxu0 0
        %1548 = vmatpush1.bf16.msra.mxu0 0
        %1549 = vmatprep.subr.bf16.mxu0 0
        %1550 = vmatpush1.bf16.msra.mxu0 0
        %1551 = vmatprep.subr.bf16.mxu0 0
        %1552 = vmatpush1.bf16.msra.mxu0 0
        %1553 = vmatprep.subr.bf16.mxu0 0
        %1554 = vmatpush1.bf16.msra.mxu0 0
        %1555 = vmatprep.subr.bf16.mxu0 0
        %1556 = vmatpush1.bf16.msra.mxu0 0
        %1557 = vmatprep.subr.bf16.mxu0 0
        %1558 = vmatpush1.bf16.msra.mxu0 0
        %1559 = vmatprep.subr.bf16.mxu0 0
        %1560 = vmatpush1.bf16.msra.mxu0 0
        %1561 = vmatprep.mubr.bf16.mxu0 0
        %1562 = vmatmul.mubr.bf16.gmra.mrb[0].mxu0 %v1524
        %v1563 = vpop.f32.mrb[0].mxu0
        %v1564 = vadd.f32 0.0, %v1563
        %v1565 = vpop.f32.mrb[0].mxu0
        %v1566 = vpop.f32.mrb[0].mxu0
        %v1567 = vpop.f32.mrb[0].mxu0
        %1568 = vdwg.mxu0
        %v1570 = vsel %vm1093, %v1516, 0
        %v1573 = vsel %vm1333, %v1520, 0
        %1575 = vmatprep.subr.bf16.mxu0 0
        %1576 = vmatpush1.bf16.msra.mxu0 %v1573
        %1577 = vmatprep.subr.bf16.mxu0 0
        %1578 = vmatpush1.bf16.msra.mxu0 0
        %1579 = vmatprep.subr.bf16.mxu0 0
        %1580 = vmatpush1.bf16.msra.mxu0 0
        %1581 = vmatprep.subr.bf16.mxu0 0
        %1582 = vmatpush1.bf16.msra.mxu0 0
        %1583 = vmatprep.subr.bf16.mxu0 0
        %1584 = vmatpush1.bf16.msra.mxu0 0
        %1585 = vmatprep.subr.bf16.mxu0 0
        %1586 = vmatpush1.bf16.msra.mxu0 0
        %1587 = vmatprep.subr.bf16.mxu0 0
        %1588 = vmatpush1.bf16.msra.mxu0 0
        %1589 = vmatprep.subr.bf16.mxu0 0
        %1590 = vmatpush1.bf16.msra.mxu0 0
        %1591 = vmatprep.subr.bf16.mxu0 0
        %1592 = vmatpush1.bf16.msra.mxu0 0
        %1593 = vmatprep.subr.bf16.mxu0 0
        %1594 = vmatpush1.bf16.msra.mxu0 0
        %1595 = vmatprep.subr.bf16.mxu0 0
        %1596 = vmatpush1.bf16.msra.mxu0 0
        %1597 = vmatprep.subr.bf16.mxu0 0
        %1598 = vmatpush1.bf16.msra.mxu0 0
        %1599 = vmatprep.subr.bf16.mxu0 0
        %1600 = vmatpush1.bf16.msra.mxu0 0
        %1601 = vmatprep.subr.bf16.mxu0 0
        %1602 = vmatpush1.bf16.msra.mxu0 0
        %1603 = vmatprep.subr.bf16.mxu0 0
        %1604 = vmatpush1.bf16.msra.mxu0 0
        %1605 = vmatprep.subr.bf16.mxu0 0
        %1606 = vmatpush1.bf16.msra.mxu0 0
        %1607 = vmatprep.mubr.bf16.mxu0 0
        %1608 = vmatmul.mubr.bf16.gmra.mrb[0].mxu0 %v1570
        %v1609 = vpop.f32.mrb[0].mxu0
        %v1610 = vadd.f32 0.0, %v1609
        %v1611 = vpop.f32.mrb[0].mxu0
        %v1612 = vpop.f32.mrb[0].mxu0
        %v1613 = vpop.f32.mrb[0].mxu0
        %1614 = vdwg.mxu0
        %v1616 = vsel %vm1093, %v1517, 0
        %v1619 = vsel %vm1333, %v1521, 0
        %1621 = vmatprep.subr.bf16.mxu0 0
        %1622 = vmatpush1.bf16.msra.mxu0 %v1619
        %1623 = vmatprep.subr.bf16.mxu0 0
        %1624 = vmatpush1.bf16.msra.mxu0 0
        %1625 = vmatprep.subr.bf16.mxu0 0
        %1626 = vmatpush1.bf16.msra.mxu0 0
        %1627 = vmatprep.subr.bf16.mxu0 0
        %1628 = vmatpush1.bf16.msra.mxu0 0
        %1629 = vmatprep.subr.bf16.mxu0 0
        %1630 = vmatpush1.bf16.msra.mxu0 0
        %1631 = vmatprep.subr.bf16.mxu0 0
        %1632 = vmatpush1.bf16.msra.mxu0 0
        %1633 = vmatprep.subr.bf16.mxu0 0
        %1634 = vmatpush1.bf16.msra.mxu0 0
        %1635 = vmatprep.subr.bf16.mxu0 0
        %1636 = vmatpush1.bf16.msra.mxu0 0
        %1637 = vmatprep.subr.bf16.mxu0 0
        %1638 = vmatpush1.bf16.msra.mxu0 0
        %1639 = vmatprep.subr.bf16.mxu0 0
        %1640 = vmatpush1.bf16.msra.mxu0 0
        %1641 = vmatprep.subr.bf16.mxu0 0
        %1642 = vmatpush1.bf16.msra.mxu0 0
        %1643 = vmatprep.subr.bf16.mxu0 0
        %1644 = vmatpush1.bf16.msra.mxu0 0
        %1645 = vmatprep.subr.bf16.mxu0 0
        %1646 = vmatpush1.bf16.msra.mxu0 0
        %1647 = vmatprep.subr.bf16.mxu0 0
        %1648 = vmatpush1.bf16.msra.mxu0 0
        %1649 = vmatprep.subr.bf16.mxu0 0
        %1650 = vmatpush1.bf16.msra.mxu0 0
        %1651 = vmatprep.subr.bf16.mxu0 0
        %1652 = vmatpush1.bf16.msra.mxu0 0
        %1653 = vmatprep.mubr.bf16.mxu0 0
        %1654 = vmatmul.mubr.bf16.gmra.mrb[0].mxu0 %v1616
        %v1655 = vpop.f32.mrb[0].mxu0
        %v1656 = vadd.f32 0.0, %v1655
        %v1657 = vpop.f32.mrb[0].mxu0
        %v1658 = vpop.f32.mrb[0].mxu0
        %v1659 = vpop.f32.mrb[0].mxu0
        %1660 = vdwg.mxu0
        %v1662 = vsel %vm1093, %v1518, 0
        %v1665 = vsel %vm1333, %v1522, 0
        %1667 = vmatprep.subr.bf16.mxu0 0
        %1668 = vmatpush1.bf16.msra.mxu0 %v1665
        %1669 = vmatprep.subr.bf16.mxu0 0
        %1670 = vmatpush1.bf16.msra.mxu0 0
        %1671 = vmatprep.subr.bf16.mxu0 0
        %1672 = vmatpush1.bf16.msra.mxu0 0
        %1673 = vmatprep.subr.bf16.mxu0 0
        %1674 = vmatpush1.bf16.msra.mxu0 0
        %1675 = vmatprep.subr.bf16.mxu0 0
        %1676 = vmatpush1.bf16.msra.mxu0 0
        %1677 = vmatprep.subr.bf16.mxu0 0
        %1678 = vmatpush1.bf16.msra.mxu0 0
        %1679 = vmatprep.subr.bf16.mxu0 0
        %1680 = vmatpush1.bf16.msra.mxu0 0
        %1681 = vmatprep.subr.bf16.mxu0 0
        %1682 = vmatpush1.bf16.msra.mxu0 0
        %1683 = vmatprep.subr.bf16.mxu0 0
        %1684 = vmatpush1.bf16.msra.mxu0 0
        %1685 = vmatprep.subr.bf16.mxu0 0
        %1686 = vmatpush1.bf16.msra.mxu0 0
        %1687 = vmatprep.subr.bf16.mxu0 0
        %1688 = vmatpush1.bf16.msra.mxu0 0
        %1689 = vmatprep.subr.bf16.mxu0 0
        %1690 = vmatpush1.bf16.msra.mxu0 0
        %1691 = vmatprep.subr.bf16.mxu0 0
        %1692 = vmatpush1.bf16.msra.mxu0 0
        %1693 = vmatprep.subr.bf16.mxu0 0
        %1694 = vmatpush1.bf16.msra.mxu0 0
        %1695 = vmatprep.subr.bf16.mxu0 0
        %1696 = vmatpush1.bf16.msra.mxu0 0
        %1697 = vmatprep.subr.bf16.mxu0 0
        %1698 = vmatpush1.bf16.msra.mxu0 0
        %1699 = vmatprep.mubr.bf16.mxu0 0
        %1700 = vmatmul.mubr.bf16.gmra.mrb[0].mxu0 %v1662
        %v1701 = vpop.f32.mrb[0].mxu0
        %v1702 = vadd.f32 0.0, %v1701
        %v1703 = vpop.f32.mrb[0].mxu0
        %v1704 = vpop.f32.mrb[0].mxu0
        %v1705 = vpop.f32.mrb[0].mxu0
        %1706 = vdwg.mxu0
        %v1707 = vsel %vm367, %v1564, 0.0
        %v1708 = vsel %vm367, %v1610, 0.0
        %v1709 = vadd.f32 %v1707, %v1708
        %v1710 = vsel %vm367, %v1656, 0.0
        %v1711 = vadd.f32 %v1709, %v1710
        %v1712 = vsel %vm367, %v1702, 0.0
        %v1713 = vadd.f32 %v1711, %v1712
        %v1714 = vld [vmem:[%s6] sm:$0x1]
        %v1716 = vlaneseq
        %v1717 = vshrl.u32 %v1716, 7
        %v1718 = vsub.s32 0, %v1717
        %v1719 = vrot.slane %v1714, %v1718
        %v1721 = vadd.f32 %v1713, %v1719
        %1722 = vst.msk [vmem:[%s295] sm:$0xff] %vm367, %v1721
        %s1723 = sand.u32 %s191, 1
        %s1724 = scalar_lea.sflag [#allocation3], %s1723
        %s1725 = sand.u32 %s191, 1
        %s1726 = smul.addr %s1725, 8
        %s1727 = scalar_lea.vmem [#allocation2], %s1726
        // Predicated region
        $region49: #{tpu_custom_call.1} parent=47 // pred_check
          %p1728 = pneg %p201
        $region50: #{tpu_custom_call.1} parent=47 // pred_check_branch
          %1730 = sbr.rel (%p1728) target = $region52
        $region51: #{tpu_custom_call.1} parent=47 // pred_region
          %s1732 = ssub.s32 128, 128
          %1733 = vsyncadd %s1724, %s1732
          %s1734 = smul.addr %s21, 128
          %s1735 = scalar_lea.hbm %s7, %s1734
          %s1737 = sshll.u32 %s1727, 4
          %s1738 = int_to_ptr.vmem [resolvable:$true] %s1737
          %1740 = dma.vmem_to_hbm [thread:$0]  %s1738, 128, %s1735, %s1724
        $region52: #{tpu_custom_call.1} parent=47 // pred_fallthru
          _
      $region48: #{tpu_custom_call.1} parent=5 // pred_fallthru
        _
      %p1741 = scmp.le.s32.totalorder 2, %s16
      // Predicated region
      $region53: #{tpu_custom_call.1} parent=5 // pred_check
        %p1742 = pneg %p1741
      $region54: #{tpu_custom_call.1} parent=5 // pred_check_branch
        %1744 = sbr.rel (%p1742) target = $region56
      $region55: #{tpu_custom_call.1} parent=5 // pred_region
        %s1745 = ssub.s32 %s16, 2
        // Predicated region
        $region57: #{tpu_custom_call.1} parent=55 // pred_check
          %p1746 = pneg %p207
        $region58: #{tpu_custom_call.1} parent=55 // pred_check_branch
          %1748 = sbr.rel (%p1746) target = $region60
        $region59: #{tpu_custom_call.1} parent=55 // pred_region
          %s1749 = sand.u32 %s192, 1
          %s1750 = scalar_lea.sflag [#allocation3], %s1749
          %s1751 = sand.u32 %s192, 1
          %s1752 = smul.addr %s1751, 8
          %s1753 = scalar_lea.vmem [#allocation2], %s1752
          %1754 = dma.done %s1750, 128
        $region60: #{tpu_custom_call.1} parent=55 // pred_fallthru
          _
      $region56: #{tpu_custom_call.1} parent=5 // pred_fallthru
        _
    $region6: #{tpu_custom_call.1} parent=1 // loop_footer
      %s20 = sadd.s32 1, %s16
    $region7: #{tpu_custom_call.1} parent=1 // loop_footer_branch
      %15 = sbr.rel target = $region3
    $region8: #{tpu_custom_call.1} parent=1 // loop_exit
      _
    %1755 = vsyncpa [#allocation3], 1
    %s1756 = scalar_lea.sflag [#allocation3], 1
    %1757 = vsyncpa %s1756, 1

// kernel: tpu_custom_call.1
$region0: #{tpu_custom_call.1}
  #allocation0 [shape = 'u32[]', space=smem, size = 0x4, offset = 0x4, fixed_abs, tag = 'smem constant byte address 0x4 - core index']
  #allocation1 [shape = 'u32[144,128]{1,0:T(1,128)}', space=vmem, size = 0x12000, scoped, tag = 'internal scratch']
  %s0 = inlined_call_operand.vmem [shape: f32[2,8,32], index: 0, kind: input, shape index: {}]
  %s1 = inlined_call_operand.vmem [shape: f32[2,8,32], index: 1, kind: input, shape index: {}]
  %s2 = inlined_call_operand.vmem [shape: f32[2,8,32], index: 2, kind: input, shape index: {}]
  %s3 = inlined_call_operand.vmem [shape: bf16[3,4,32,8], index: 3, kind: input, shape index: {}]
  %s4 = inlined_call_operand.vmem [shape: f32[3,4,1,8], index: 4, kind: input, shape index: {}]
  %s5 = inlined_call_operand.vmem [shape: bf16[4,8,32], index: 5, kind: input, shape index: {}]
  %s6 = inlined_call_operand.vmem [shape: f32[1,32], index: 6, kind: input, shape index: {}]
  %s7 = inlined_call_operand.hbm [shape: f32[2,8,32], index: 7, kind: output, shape index: {}]
  %s8 = sld [smem:[#allocation0]]
  $region61: #{tpu_custom_call.1} parent=0
    _
  %s10 = ssub.s32 1, %s8
  %s11 = scalar_select 0, %s10, %s8
  $region1: #{tpu_custom_call.1} parent=0
    #allocation2 [shape = 'u8[8192]{0}', space=vmem, size = 0x2000, scoped, tag = 'output window, operand 0']
    #allocation3 [shape = 's32[2]{0}', space=sflag, size = 0x8, scoped, tag = 'scoped memory for tpu_custom_call.1']
    %12 = vsyncpa [#allocation3], 0
    %s13 = scalar_lea.sflag [#allocation3], 1
    %14 = vsyncpa %s13, 0
    loop: start=0, step=1, limit=4
    $region2: #{tpu_custom_call.1} parent=1 // loop_pre_header
      _
    $region3: #{tpu_custom_call.1} parent=1 // loop_header
      %s16 = sphi 0, %s20
      %p17 = scmp.ge.s32.totalorder %s16, 4
      %s26 = sphi 0, %s28
      %s29 = sphi 0, %s26
      %s30 = sphi 0, %s29
      %s46 = sphi 0, %s30
      %s52 = sphi 0, %s54
      %s55 = sphi 0, %s52
      %s56 = sphi 0, %s55
      %s72 = sphi 0, %s56
      %s78 = sphi 0, %s80
      %s81 = sphi 0, %s78
      %s82 = sphi 0, %s81
      %s98 = sphi 0, %s82
      %s102 = sphi 0, %s102
      %s104 = sphi 0, %s102
      %s105 = sphi 0, %s104
      %s119 = sphi 0, %s105
      %s123 = sphi 0, %s123
      %s125 = sphi 0, %s123
      %s126 = sphi 0, %s125
      %s140 = sphi 0, %s126
      %s144 = sphi 0, %s144
      %s146 = sphi 0, %s144
      %s147 = sphi 0, %s146
      %s161 = sphi 0, %s147
      %s165 = sphi 0, %s165
      %s167 = sphi 0, %s165
      %s168 = sphi 0, %s167
      %s182 = sphi 0, %s168
      %s188 = sphi 0, %s190
      %s191 = sphi 0, %s188
      %s192 = sphi 0, %s191
      %s208 = sphi 0, %s192
    $region4: #{tpu_custom_call.1} parent=1 // loop_header_branch
      %19 = sbr.rel (%p17) target = $region8
    $region5: #{tpu_custom_call.1} parent=1 // loop_body
      %s21 = ssub.s32 %s16, 1
      %s22 = ssub.s32 %s16, 2
      %s23 = sadd.s32 %s16, 1
      %s24 = ssub.s32 %s16, %s23
      %p25 = scmp.eq.s32.totalorder %s24, 0
      %s27 = sadd.s32 %s26, 1
      %s28 = scalar_select %p25, %s26, %s27
      %p31 = pneg %p25
      %p32 = scmp.eq.s32.totalorder %s16, 1
      %p33 = por %p31, %p32
      %p34 = scmp.ne.s32.totalorder %s26, %s29
      %p35 = scmp.eq.s32.totalorder %s16, 0
      %p36 = por %p34, %p35
      %p37 = scmp.ne.s32.totalorder %s26, %s29
      %p38 = scmp.eq.s32.totalorder %s21, 1
      %p39 = por %p37, %p38
      %p40 = scmp.ne.s32.totalorder %s29, %s30
      %p41 = scmp.eq.s32.totalorder %s21, 0
      %p42 = por %p40, %p41
      %p43 = scmp.ne.s32.totalorder %s29, %s30
      %p44 = scmp.eq.s32.totalorder %s22, 1
      %p45 = por %p43, %p44
      %p47 = scmp.ne.s32.totalorder %s30, %s46
      %p48 = scmp.eq.s32.totalorder %s22, 0
      %p49 = por %p47, %p48
      %s50 = ssub.s32 %s16, %s23
      %p51 = scmp.eq.s32.totalorder %s50, 0
      %s53 = sadd.s32 %s52, 1
      %s54 = scalar_select %p51, %s52, %s53
      %p57 = pneg %p51
      %p58 = scmp.eq.s32.totalorder %s16, 1
      %p59 = por %p57, %p58
      %p60 = scmp.ne.s32.totalorder %s52, %s55
      %p61 = scmp.eq.s32.totalorder %s16, 0
      %p62 = por %p60, %p61
      %p63 = scmp.ne.s32.totalorder %s52, %s55
      %p64 = scmp.eq.s32.totalorder %s21, 1
      %p65 = por %p63, %p64
      %p66 = scmp.ne.s32.totalorder %s55, %s56
      %p67 = scmp.eq.s32.totalorder %s21, 0
      %p68 = por %p66, %p67
      %p69 = scmp.ne.s32.totalorder %s55, %s56
      %p70 = scmp.eq.s32.totalorder %s22, 1
      %p71 = por %p69, %p70
      %p73 = scmp.ne.s32.totalorder %s56, %s72
      %p74 = scmp.eq.s32.totalorder %s22, 0
      %p75 = por %p73, %p74
      %s76 = ssub.s32 %s16, %s23
      %p77 = scmp.eq.s32.totalorder %s76, 0
      %s79 = sadd.s32 %s78, 1
      %s80 = scalar_select %p77, %s78, %s79
      %p83 = pneg %p77
      %p84 = scmp.eq.s32.totalorder %s16, 1
      %p85 = por %p83, %p84
      %p86 = scmp.ne.s32.totalorder %s78, %s81
      %p87 = scmp.eq.s32.totalorder %s16, 0
      %p88 = por %p86, %p87
      %p89 = scmp.ne.s32.totalorder %s78, %s81
      %p90 = scmp.eq.s32.totalorder %s21, 1
      %p91 = por %p89, %p90
      %p92 = scmp.ne.s32.totalorder %s81, %s82
      %p93 = scmp.eq.s32.totalorder %s21, 0
      %p94 = por %p92, %p93
      %p95 = scmp.ne.s32.totalorder %s81, %s82
      %p96 = scmp.eq.s32.totalorder %s22, 1
      %p97 = por %p95, %p96
      %p99 = scmp.ne.s32.totalorder %s82, %s98
      %p100 = scmp.eq.s32.totalorder %s22, 0
      %p101 = por %p99, %p100
      %s103 = sadd.s32 %s102, 1
      %p106 = scmp.eq.s32.totalorder %s16, 1
      %p107 = scmp.ne.s32.totalorder %s102, %s104
      %p108 = scmp.eq.s32.totalorder %s16, 0
      %p109 = por %p107, %p108
      %p110 = scmp.ne.s32.totalorder %s102, %s104
      %p111 = scmp.eq.s32.totalorder %s21, 1
      %p112 = por %p110, %p111
      %p113 = scmp.ne.s32.totalorder %s104, %s105
      %p114 = scmp.eq.s32.totalorder %s21, 0
      %p115 = por %p113, %p114
      %p116 = scmp.ne.s32.totalorder %s104, %s105
      %p117 = scmp.eq.s32.totalorder %s22, 1
      %p118 = por %p116, %p117
      %p120 = scmp.ne.s32.totalorder %s105, %s119
      %p121 = scmp.eq.s32.totalorder %s22, 0
      %p122 = por %p120, %p121
      %s124 = sadd.s32 %s123, 1
      %p127 = scmp.eq.s32.totalorder %s16, 1
      %p128 = scmp.ne.s32.totalorder %s123, %s125
      %p129 = scmp.eq.s32.totalorder %s16, 0
      %p130 = por %p128, %p129
      %p131 = scmp.ne.s32.totalorder %s123, %s125
      %p132 = scmp.eq.s32.totalorder %s21, 1
      %p133 = por %p131, %p132
      %p134 = scmp.ne.s32.totalorder %s125, %s126
      %p135 = scmp.eq.s32.totalorder %s21, 0
      %p136 = por %p134, %p135
      %p137 = scmp.ne.s32.totalorder %s125, %s126
      %p138 = scmp.eq.s32.totalorder %s22, 1
      %p139 = por %p137, %p138
      %p141 = scmp.ne.s32.totalorder %s126, %s140
      %p142 = scmp.eq.s32.totalorder %s22, 0
      %p143 = por %p141, %p142
      %s145 = sadd.s32 %s144, 1
      %p148 = scmp.eq.s32.totalorder %s16, 1
      %p149 = scmp.ne.s32.totalorder %s144, %s146
      %p150 = scmp.eq.s32.totalorder %s16, 0
      %p151 = por %p149, %p150
      %p152 = scmp.ne.s32.totalorder %s144, %s146
      %p153 = scmp.eq.s32.totalorder %s21, 1
      %p154 = por %p152, %p153
      %p155 = scmp.ne.s32.totalorder %s146, %s147
      %p156 = scmp.eq.s32.totalorder %s21, 0
      %p157 = por %p155, %p156
      %p158 = scmp.ne.s32.totalorder %s146, %s147
      %p159 = scmp.eq.s32.totalorder %s22, 1
      %p160 = por %p158, %p159
      %p162 = scmp.ne.s32.totalorder %s147, %s161
      %p163 = scmp.eq.s32.totalorder %s22, 0
      %p164 = por %p162, %p163
      %s166 = sadd.s32 %s165, 1
      %p169 = scmp.eq.s32.totalorder %s16, 1
      %p170 = scmp.ne.s32.totalorder %s165, %s167
      %p171 = scmp.eq.s32.totalorder %s16, 0
      %p172 = por %p170, %p171
      %p173 = scmp.ne.s32.totalorder %s165, %s167
      %p174 = scmp.eq.s32.totalorder %s21, 1
      %p175 = por %p173, %p174
      %p176 = scmp.ne.s32.totalorder %s167, %s168
      %p177 = scmp.eq.s32.totalorder %s21, 0
      %p178 = por %p176, %p177
      %p179 = scmp.ne.s32.totalorder %s167, %s168
      %p180 = scmp.eq.s32.totalorder %s22, 1
      %p181 = por %p179, %p180
      %p183 = scmp.ne.s32.totalorder %s168, %s182
      %p184 = scmp.eq.s32.totalorder %s22, 0
      %p185 = por %p183, %p184
      %s186 = ssub.s32 %s16, %s23
      %p187 = scmp.eq.s32.totalorder %s186, 0
      %s189 = sadd.s32 %s188, 1
      %s190 = scalar_select %p187, %s188, %s189
      %p193 = pneg %p187
      %p194 = scmp.eq.s32.totalorder %s16, 1
      %p195 = por %p193, %p194
      %p196 = scmp.ne.s32.totalorder %s188, %s191
      %p197 = scmp.eq.s32.totalorder %s16, 0
      %p198 = por %p196, %p197
      %p199 = scmp.ne.s32.totalorder %s188, %s191
      %p200 = scmp.eq.s32.totalorder %s21, 1
      %p201 = por %p199, %p200
      %p202 = scmp.ne.s32.totalorder %s191, %s192
      %p203 = scmp.eq.s32.totalorder %s21, 0
      %p204 = por %p202, %p203
      %p205 = scmp.ne.s32.totalorder %s191, %s192
      %p206 = scmp.eq.s32.totalorder %s22, 1
      %p207 = por %p205, %p206
      %p209 = scmp.ne.s32.totalorder %s192, %s208
      %p210 = scmp.eq.s32.totalorder %s22, 0
      %p211 = por %p209, %p210
      %p212 = scmp.le.s32.totalorder 1, %s16
      %p213 = scmp.lt.s32.totalorder %s16, 3
      %p214 = pnand %p212, %p213
      %p215 = pneg %p214
      // Predicated region
      $region9: #{tpu_custom_call.1} parent=5 // pred_check
        _
      $region10: #{tpu_custom_call.1} parent=5 // pred_check_branch
        %217 = sbr.rel (%p214) target = $region12
      $region11: #{tpu_custom_call.1} parent=5 // pred_region
        %s218 = ssub.s32 %s16, 1
        // Predicated region
        $region13: #{tpu_custom_call.1} parent=11 // pred_check
          %p219 = pneg %p115
        $region14: #{tpu_custom_call.1} parent=11 // pred_check_branch
          %221 = sbr.rel (%p219) target = $region16
        $region15: #{tpu_custom_call.1} parent=11 // pred_region
          _
        $region16: #{tpu_custom_call.1} parent=11 // pred_fallthru
          _
        // Predicated region
        $region17: #{tpu_custom_call.1} parent=11 // pred_check
          %p222 = pneg %p136
        $region18: #{tpu_custom_call.1} parent=11 // pred_check_branch
          %224 = sbr.rel (%p222) target = $region20
        $region19: #{tpu_custom_call.1} parent=11 // pred_region
          _
        $region20: #{tpu_custom_call.1} parent=11 // pred_fallthru
          _
        // Predicated region
        $region21: #{tpu_custom_call.1} parent=11 // pred_check
          %p225 = pneg %p157
        $region22: #{tpu_custom_call.1} parent=11 // pred_check_branch
          %227 = sbr.rel (%p225) target = $region24
        $region23: #{tpu_custom_call.1} parent=11 // pred_region
          _
        $region24: #{tpu_custom_call.1} parent=11 // pred_fallthru
          _
        // Predicated region
        $region25: #{tpu_custom_call.1} parent=11 // pred_check
          %p228 = pneg %p178
        $region26: #{tpu_custom_call.1} parent=11 // pred_check_branch
          %230 = sbr.rel (%p228) target = $region28
        $region27: #{tpu_custom_call.1} parent=11 // pred_region
          _
        $region28: #{tpu_custom_call.1} parent=11 // pred_fallthru
          _
      $region12: #{tpu_custom_call.1} parent=5 // pred_fallthru
        _
      %p231 = scmp.lt.s32.totalorder %s16, 2
      // Predicated region
      $region29: #{tpu_custom_call.1} parent=5 // pred_check
        %p232 = pneg %p231
      $region30: #{tpu_custom_call.1} parent=5 // pred_check_branch
        %234 = sbr.rel (%p232) target = $region32
      $region31: #{tpu_custom_call.1} parent=5 // pred_region
        // Predicated region
        $region33: #{tpu_custom_call.1} parent=31 // pred_check
          %p235 = pneg %p36
        $region34: #{tpu_custom_call.1} parent=31 // pred_check_branch
          %237 = sbr.rel (%p235) target = $region36
        $region35: #{tpu_custom_call.1} parent=31 // pred_region
          %p238 = scmp.lt.s32.totalorder %s16, 1
          %s239 = scalar_select %p238, %s16, 1
          %s240 = smul.addr %s239, 8
          %s241 = scalar_lea.vmem %s0, %s240
        $region36: #{tpu_custom_call.1} parent=31 // pred_fallthru
          _
        // Predicated region
        $region37: #{tpu_custom_call.1} parent=31 // pred_check
          %p242 = pneg %p62
        $region38: #{tpu_custom_call.1} parent=31 // pred_check_branch
          %244 = sbr.rel (%p242) target = $region40
        $region39: #{tpu_custom_call.1} parent=31 // pred_region
          %p245 = scmp.lt.s32.totalorder %s16, 1
          %s246 = scalar_select %p245, %s16, 1
          %s247 = smul.addr %s246, 8
          %s248 = scalar_lea.vmem %s1, %s247
        $region40: #{tpu_custom_call.1} parent=31 // pred_fallthru
          _
        // Predicated region
        $region41: #{tpu_custom_call.1} parent=31 // pred_check
          %p249 = pneg %p88
        $region42: #{tpu_custom_call.1} parent=31 // pred_check_branch
          %251 = sbr.rel (%p249) target = $region44
        $region43: #{tpu_custom_call.1} parent=31 // pred_region
          %p252 = scmp.lt.s32.totalorder %s16, 1
          %s253 = scalar_select %p252, %s16, 1
          %s254 = smul.addr %s253, 8
          %s255 = scalar_lea.vmem %s2, %s254
        $region44: #{tpu_custom_call.1} parent=31 // pred_fallthru
          _
      $region32: #{tpu_custom_call.1} parent=5 // pred_fallthru
        _
      %p256 = scmp.le.s32.totalorder 1, %s16
      %p257 = scmp.lt.s32.totalorder %s16, 3
      %p258 = pnand %p256, %p257
      %p259 = pneg %p258
      // Predicated region
      $region45: #{tpu_custom_call.1} parent=5 // pred_check
        _
      $region46: #{tpu_custom_call.1} parent=5 // pred_check_branch
        %261 = sbr.rel (%p258) target = $region48
      $region47: #{tpu_custom_call.1} parent=5 // pred_region
        %s262 = ssub.s32 %s16, 1
        %p263 = scmp.lt.s32.totalorder %s21, 1
        %s264 = scalar_select %p263, %s21, 1
        %s265 = smul.addr %s264, 8
        %s266 = scalar_lea.vmem %s0, %s265
        %p267 = pneg %p42
        %p268 = pneg %p39
        %p269 = scmp.lt.s32.totalorder %s21, 1
        %s270 = scalar_select %p269, %s21, 1
        %s271 = smul.addr %s270, 8
        %s272 = scalar_lea.vmem %s1, %s271
        %p273 = pneg %p68
        %p274 = pneg %p65
        %p275 = scmp.lt.s32.totalorder %s21, 1
        %s276 = scalar_select %p275, %s21, 1
        %s277 = smul.addr %s276, 8
        %s278 = scalar_lea.vmem %s2, %s277
        %p279 = pneg %p94
        %p280 = pneg %p91
        %p281 = pneg %p115
        %p282 = pneg %p112
        %p283 = pneg %p136
        %p284 = pneg %p133
        %p285 = pneg %p157
        %p286 = pneg %p154
        %p287 = pneg %p178
        %p288 = pneg %p175
        %p289 = pneg %p204
        %p290 = pneg %p201
        %s291 = sand.u32 %s191, 1
        %s292 = scalar_lea.sflag [#allocation3], %s291
        %s293 = sand.u32 %s191, 1
        %s294 = smul.addr %s293, 8
        %s295 = scalar_lea.vmem [#allocation2], %s294
        %p296 = scmp.lt.s32.totalorder %s21, 1
        %s297 = scalar_select %p296, %s21, 1
        %s298 = smul.addr %s297, 8
        %s299 = scalar_lea.vmem %s0, %s298
        %p300 = scmp.lt.s32.totalorder %s21, 1
        %s301 = scalar_select %p300, %s21, 1
        %s302 = smul.addr %s301, 8
        %s303 = scalar_lea.vmem %s1, %s302
        %p304 = scmp.lt.s32.totalorder %s21, 1
        %s305 = scalar_select %p304, %s21, 1
        %s306 = smul.addr %s305, 8
        %s307 = scalar_lea.vmem %s2, %s306
        %v309 = vld [vmem:[%s299] sm:$0xff]
        %v310 = vpack.c.bf16 %v309, %v309
        %v311 = vld [vmem:[%s3] sm:$0xf]
        %v312 = vld [vmem:[%s3 + $0x4] sm:$0xf]
        %v313 = vld [vmem:[%s3 + $0x8] sm:$0xf]
        %v314 = vld [vmem:[%s3 + $0xc] sm:$0xf]
        %v315 = vld [vmem:[%s3 + $0x10] sm:$0xf]
        %v316 = vld [vmem:[%s3 + $0x14] sm:$0xf]
        %v317 = vld [vmem:[%s3 + $0x18] sm:$0xf]
        %v318 = vld [vmem:[%s3 + $0x1c] sm:$0xf]
        %v319 = vld [vmem:[%s3 + $0x20] sm:$0xf]
        %v320 = vld [vmem:[%s3 + $0x24] sm:$0xf]
        %v321 = vld [vmem:[%s3 + $0x28] sm:$0xf]
        %v322 = vld [vmem:[%s3 + $0x2c] sm:$0xf]
        %v323 = vld [vmem:[%s3 + $0x30] sm:$0xf]
        %v324 = vld [vmem:[%s3 + $0x34] sm:$0xf]
        %v325 = vld [vmem:[%s3 + $0x38] sm:$0xf]
        %v326 = vld [vmem:[%s3 + $0x3c] sm:$0xf]
        %v327 = vld [vmem:[%s4] sm:$0x1]
        %v328 = vld [vmem:[%s4 + $0x1] sm:$0x1]
        %v329 = vld [vmem:[%s4 + $0x2] sm:$0x1]
        %v330 = vld [vmem:[%s4 + $0x3] sm:$0x1]
        %v335 = vlaneseq
        %v336 = vshrl.u32 %v335, 7
        %v337 = vsub.s32 0, %v336
        %v338 = vrot.slane %v327, %v337
        %v339 = vlaneseq
        %v340 = vshrl.u32 %v339, 7
        %v341 = vsub.s32 0, %v340
        %v342 = vrot.slane %v328, %v341
        %v343 = vlaneseq
        %v344 = vshrl.u32 %v343, 7
        %v345 = vsub.s32 0, %v344
        %v346 = vrot.slane %v329, %v345
        %v347 = vlaneseq
        %v348 = vshrl.u32 %v347, 7
        %v349 = vsub.s32 0, %v348
        %v350 = vrot.slane %v330, %v349
        %v359 = vunpack.c.l.b16 %v311
        %v360 = vunpack.c.l.b16 %v312
        %v361 = vunpack.c.l.b16 %v313
        %v362 = vunpack.c.l.b16 %v314
        %v363 = vpack.c.b16 %v360, %v359
        %v364 = vpack.c.b16 %v362, %v361
        %vm367 = vcmask 261120
        %v369 = vsel %vm367, %v310, 0
        %371 = vmatprep.subr.bf16.mxu0 0
        %372 = vmatpush1.bf16.msra.mxu0 %v363
        %373 = vmatprep.subr.bf16.mxu0 0
        %374 = vmatpush1.bf16.msra.mxu0 %v364
        %375 = vmatprep.subr.bf16.mxu0 0
        %376 = vmatpush1.bf16.msra.mxu0 0
        %377 = vmatprep.subr.bf16.mxu0 0
        %378 = vmatpush1.bf16.msra.mxu0 0
        %379 = vmatprep.subr.bf16.mxu0 0
        %380 = vmatpush1.bf16.msra.mxu0 0
        %381 = vmatprep.subr.bf16.mxu0 0
        %382 = vmatpush1.bf16.msra.mxu0 0
        %383 = vmatprep.subr.bf16.mxu0 0
        %384 = vmatpush1.bf16.msra.mxu0 0
        %385 = vmatprep.subr.bf16.mxu0 0
        %386 = vmatpush1.bf16.msra.mxu0 0
        %387 = vmatprep.subr.bf16.mxu0 0
        %388 = vmatpush1.bf16.msra.mxu0 0
        %389 = vmatprep.subr.bf16.mxu0 0
        %390 = vmatpush1.bf16.msra.mxu0 0
        %391 = vmatprep.subr.bf16.mxu0 0
        %392 = vmatpush1.bf16.msra.mxu0 0
        %393 = vmatprep.subr.bf16.mxu0 0
        %394 = vmatpush1.bf16.msra.mxu0 0
        %395 = vmatprep.subr.bf16.mxu0 0
        %396 = vmatpush1.bf16.msra.mxu0 0
        %397 = vmatprep.subr.bf16.mxu0 0
        %398 = vmatpush1.bf16.msra.mxu0 0
        %399 = vmatprep.subr.bf16.mxu0 0
        %400 = vmatpush1.bf16.msra.mxu0 0
        %401 = vmatprep.subr.bf16.mxu0 0
        %402 = vmatpush1.bf16.msra.mxu0 0
        %403 = vmatprep.mubr.bf16.mxu0 0
        %404 = vmatmul.mubr.bf16.gmra.mrb[0].mxu0 %v369
        %v405 = vpop.f32.mrb[0].mxu0
        %v406 = vadd.f32 %v338, %v405
        %v407 = vpop.f32.mrb[0].mxu0
        %v408 = vpop.f32.mrb[0].mxu0
        %v409 = vpop.f32.mrb[0].mxu0
        %410 = vdwg.mxu0
        %v415 = vunpack.c.l.b16 %v315
        %v416 = vunpack.c.l.b16 %v316
        %v417 = vunpack.c.l.b16 %v317
        %v418 = vunpack.c.l.b16 %v318
        %v419 = vpack.c.b16 %v416, %v415
        %v420 = vpack.c.b16 %v418, %v417
        %423 = vmatprep.subr.bf16.mxu0 0
        %424 = vmatpush1.bf16.msra.mxu0 %v419
        %425 = vmatprep.subr.bf16.mxu0 0
        %426 = vmatpush1.bf16.msra.mxu0 %v420
        %427 = vmatprep.subr.bf16.mxu0 0
        %428 = vmatpush1.bf16.msra.mxu0 0
        %429 = vmatprep.subr.bf16.mxu0 0
        %430 = vmatpush1.bf16.msra.mxu0 0
        %431 = vmatprep.subr.bf16.mxu0 0
        %432 = vmatpush1.bf16.msra.mxu0 0
        %433 = vmatprep.subr.bf16.mxu0 0
        %434 = vmatpush1.bf16.msra.mxu0 0
        %435 = vmatprep.subr.bf16.mxu0 0
        %436 = vmatpush1.bf16.msra.mxu0 0
        %437 = vmatprep.subr.bf16.mxu0 0
        %438 = vmatpush1.bf16.msra.mxu0 0
        %439 = vmatprep.subr.bf16.mxu0 0
        %440 = vmatpush1.bf16.msra.mxu0 0
        %441 = vmatprep.subr.bf16.mxu0 0
        %442 = vmatpush1.bf16.msra.mxu0 0
        %443 = vmatprep.subr.bf16.mxu0 0
        %444 = vmatpush1.bf16.msra.mxu0 0
        %445 = vmatprep.subr.bf16.mxu0 0
        %446 = vmatpush1.bf16.msra.mxu0 0
        %447 = vmatprep.subr.bf16.mxu0 0
        %448 = vmatpush1.bf16.msra.mxu0 0
        %449 = vmatprep.subr.bf16.mxu0 0
        %450 = vmatpush1.bf16.msra.mxu0 0
        %451 = vmatprep.subr.bf16.mxu0 0
        %452 = vmatpush1.bf16.msra.mxu0 0
        %453 = vmatprep.subr.bf16.mxu0 0
        %454 = vmatpush1.bf16.msra.mxu0 0
        %455 = vmatprep.mubr.bf16.mxu0 0
        %456 = vmatmul.mubr.bf16.gmra.mrb[0].mxu0 %v369
        %v457 = vpop.f32.mrb[0].mxu0
        %v458 = vadd.f32 %v342, %v457
        %v459 = vpop.f32.mrb[0].mxu0
        %v460 = vpop.f32.mrb[0].mxu0
        %v461 = vpop.f32.mrb[0].mxu0
        %462 = vdwg.mxu0
        %v467 = vunpack.c.l.b16 %v319
        %v468 = vunpack.c.l.b16 %v320
        %v469 = vunpack.c.l.b16 %v321
        %v470 = vunpack.c.l.b16 %v322
        %v471 = vpack.c.b16 %v468, %v467
        %v472 = vpack.c.b16 %v470, %v469
        %475 = vmatprep.subr.bf16.mxu0 0
        %476 = vmatpush1.bf16.msra.mxu0 %v471
        %477 = vmatprep.subr.bf16.mxu0 0
        %478 = vmatpush1.bf16.msra.mxu0 %v472
        %479 = vmatprep.subr.bf16.mxu0 0
        %480 = vmatpush1.bf16.msra.mxu0 0
        %481 = vmatprep.subr.bf16.mxu0 0
        %482 = vmatpush1.bf16.msra.mxu0 0
        %483 = vmatprep.subr.bf16.mxu0 0
        %484 = vmatpush1.bf16.msra.mxu0 0
        %485 = vmatprep.subr.bf16.mxu0 0
        %486 = vmatpush1.bf16.msra.mxu0 0
        %487 = vmatprep.subr.bf16.mxu0 0
        %488 = vmatpush1.bf16.msra.mxu0 0
        %489 = vmatprep.subr.bf16.mxu0 0
        %490 = vmatpush1.bf16.msra.mxu0 0
        %491 = vmatprep.subr.bf16.mxu0 0
        %492 = vmatpush1.bf16.msra.mxu0 0
        %493 = vmatprep.subr.bf16.mxu0 0
        %494 = vmatpush1.bf16.msra.mxu0 0
        %495 = vmatprep.subr.bf16.mxu0 0
        %496 = vmatpush1.bf16.msra.mxu0 0
        %497 = vmatprep.subr.bf16.mxu0 0
        %498 = vmatpush1.bf16.msra.mxu0 0
        %499 = vmatprep.subr.bf16.mxu0 0
        %500 = vmatpush1.bf16.msra.mxu0 0
        %501 = vmatprep.subr.bf16.mxu0 0
        %502 = vmatpush1.bf16.msra.mxu0 0
        %503 = vmatprep.subr.bf16.mxu0 0
        %504 = vmatpush1.bf16.msra.mxu0 0
        %505 = vmatprep.subr.bf16.mxu0 0
        %506 = vmatpush1.bf16.msra.mxu0 0
        %507 = vmatprep.mubr.bf16.mxu0 0
        %508 = vmatmul.mubr.bf16.gmra.mrb[0].mxu0 %v369
        %v509 = vpop.f32.mrb[0].mxu0
        %v510 = vadd.f32 %v346, %v509
        %v511 = vpop.f32.mrb[0].mxu0
        %v512 = vpop.f32.mrb[0].mxu0
        %v513 = vpop.f32.mrb[0].mxu0
        %514 = vdwg.mxu0
        %v519 = vunpack.c.l.b16 %v323
        %v520 = vunpack.c.l.b16 %v324
        %v521 = vunpack.c.l.b16 %v325
        %v522 = vunpack.c.l.b16 %v326
        %v523 = vpack.c.b16 %v520, %v519
        %v524 = vpack.c.b16 %v522, %v521
        %527 = vmatprep.subr.bf16.mxu0 0
        %528 = vmatpush1.bf16.msra.mxu0 %v523
        %529 = vmatprep.subr.bf16.mxu0 0
        %530 = vmatpush1.bf16.msra.mxu0 %v524
        %531 = vmatprep.subr.bf16.mxu0 0
        %532 = vmatpush1.bf16.msra.mxu0 0
        %533 = vmatprep.subr.bf16.mxu0 0
        %534 = vmatpush1.bf16.msra.mxu0 0
        %535 = vmatprep.subr.bf16.mxu0 0
        %536 = vmatpush1.bf16.msra.mxu0 0
        %537 = vmatprep.subr.bf16.mxu0 0
        %538 = vmatpush1.bf16.msra.mxu0 0
        %539 = vmatprep.subr.bf16.mxu0 0
        %540 = vmatpush1.bf16.msra.mxu0 0
        %541 = vmatprep.subr.bf16.mxu0 0
        %542 = vmatpush1.bf16.msra.mxu0 0
        %543 = vmatprep.subr.bf16.mxu0 0
        %544 = vmatpush1.bf16.msra.mxu0 0
        %545 = vmatprep.subr.bf16.mxu0 0
        %546 = vmatpush1.bf16.msra.mxu0 0
        %547 = vmatprep.subr.bf16.mxu0 0
        %548 = vmatpush1.bf16.msra.mxu0 0
        %549 = vmatprep.subr.bf16.mxu0 0
        %550 = vmatpush1.bf16.msra.mxu0 0
        %551 = vmatprep.subr.bf16.mxu0 0
        %552 = vmatpush1.bf16.msra.mxu0 0
        %553 = vmatprep.subr.bf16.mxu0 0
        %554 = vmatpush1.bf16.msra.mxu0 0
        %555 = vmatprep.subr.bf16.mxu0 0
        %556 = vmatpush1.bf16.msra.mxu0 0
        %557 = vmatprep.subr.bf16.mxu0 0
        %558 = vmatpush1.bf16.msra.mxu0 0
        %559 = vmatprep.mubr.bf16.mxu0 0
        %560 = vmatmul.mubr.bf16.gmra.mrb[0].mxu0 %v369
        %v561 = vpop.f32.mrb[0].mxu0
        %v562 = vadd.f32 %v350, %v561
        %v563 = vpop.f32.mrb[0].mxu0
        %v564 = vpop.f32.mrb[0].mxu0
        %v565 = vpop.f32.mrb[0].mxu0
        %566 = vdwg.mxu0
        %v567 = vld [vmem:[%s303] sm:$0xff]
        %v568 = vpack.c.bf16 %v567, %v567
        %s569 = scalar_lea.vmem %s3, 64
        %v570 = vld [vmem:[%s569] sm:$0xf]
        %v571 = vld [vmem:[%s569 + $0x4] sm:$0xf]
        %v572 = vld [vmem:[%s569 + $0x8] sm:$0xf]
        %v573 = vld [vmem:[%s569 + $0xc] sm:$0xf]
        %v574 = vld [vmem:[%s569 + $0x10] sm:$0xf]
        %v575 = vld [vmem:[%s569 + $0x14] sm:$0xf]
        %v576 = vld [vmem:[%s569 + $0x18] sm:$0xf]
        %v577 = vld [vmem:[%s569 + $0x1c] sm:$0xf]
        %v578 = vld [vmem:[%s569 + $0x20] sm:$0xf]
        %v579 = vld [vmem:[%s569 + $0x24] sm:$0xf]
        %v580 = vld [vmem:[%s569 + $0x28] sm:$0xf]
        %v581 = vld [vmem:[%s569 + $0x2c] sm:$0xf]
        %v582 = vld [vmem:[%s569 + $0x30] sm:$0xf]
        %v583 = vld [vmem:[%s569 + $0x34] sm:$0xf]
        %v584 = vld [vmem:[%s569 + $0x38] sm:$0xf]
        %v585 = vld [vmem:[%s569 + $0x3c] sm:$0xf]
        %s586 = scalar_lea.vmem %s4, 4
        %v587 = vld [vmem:[%s586] sm:$0x1]
        %v588 = vld [vmem:[%s586 + $0x1] sm:$0x1]
        %v589 = vld [vmem:[%s586 + $0x2] sm:$0x1]
        %v590 = vld [vmem:[%s586 + $0x3] sm:$0x1]
        %v595 = vlaneseq
        %v596 = vshrl.u32 %v595, 7
        %v597 = vsub.s32 0, %v596
        %v598 = vrot.slane %v587, %v597
        %v599 = vlaneseq
        %v600 = vshrl.u32 %v599, 7
        %v601 = vsub.s32 0, %v600
        %v602 = vrot.slane %v588, %v601
        %v603 = vlaneseq
        %v604 = vshrl.u32 %v603, 7
        %v605 = vsub.s32 0, %v604
        %v606 = vrot.slane %v589, %v605
        %v607 = vlaneseq
        %v608 = vshrl.u32 %v607, 7
        %v609 = vsub.s32 0, %v608
        %v610 = vrot.slane %v590, %v609
        %v619 = vunpack.c.l.b16 %v570
        %v620 = vunpack.c.l.b16 %v571
        %v621 = vunpack.c.l.b16 %v572
        %v622 = vunpack.c.l.b16 %v573
        %v623 = vpack.c.b16 %v620, %v619
        %v624 = vpack.c.b16 %v622, %v621
        %v628 = vsel %vm367, %v568, 0
        %630 = vmatprep.subr.bf16.mxu0 0
        %631 = vmatpush1.bf16.msra.mxu0 %v623
        %632 = vmatprep.subr.bf16.mxu0 0
        %633 = vmatpush1.bf16.msra.mxu0 %v624
        %634 = vmatprep.subr.bf16.mxu0 0
        %635 = vmatpush1.bf16.msra.mxu0 0
        %636 = vmatprep.subr.bf16.mxu0 0
        %637 = vmatpush1.bf16.msra.mxu0 0
        %638 = vmatprep.subr.bf16.mxu0 0
        %639 = vmatpush1.bf16.msra.mxu0 0
        %640 = vmatprep.subr.bf16.mxu0 0
        %641 = vmatpush1.bf16.msra.mxu0 0
        %642 = vmatprep.subr.bf16.mxu0 0
        %643 = vmatpush1.bf16.msra.mxu0 0
        %644 = vmatprep.subr.bf16.mxu0 0
        %645 = vmatpush1.bf16.msra.mxu0 0
        %646 = vmatprep.subr.bf16.mxu0 0
        %647 = vmatpush1.bf16.msra.mxu0 0
        %648 = vmatprep.subr.bf16.mxu0 0
        %649 = vmatpush1.bf16.msra.mxu0 0
        %650 = vmatprep.subr.bf16.mxu0 0
        %651 = vmatpush1.bf16.msra.mxu0 0
        %652 = vmatprep.subr.bf16.mxu0 0
        %653 = vmatpush1.bf16.msra.mxu0 0
        %654 = vmatprep.subr.bf16.mxu0 0
        %655 = vmatpush1.bf16.msra.mxu0 0
        %656 = vmatprep.subr.bf16.mxu0 0
        %657 = vmatpush1.bf16.msra.mxu0 0
        %658 = vmatprep.subr.bf16.mxu0 0
        %659 = vmatpush1.bf16.msra.mxu0 0
        %660 = vmatprep.subr.bf16.mxu0 0
        %661 = vmatpush1.bf16.msra.mxu0 0
        %662 = vmatprep.mubr.bf16.mxu0 0
        %663 = vmatmul.mubr.bf16.gmra.mrb[0].mxu0 %v628
        %v664 = vpop.f32.mrb[0].mxu0
        %v665 = vadd.f32 %v598, %v664
        %v666 = vpop.f32.mrb[0].mxu0
        %v667 = vpop.f32.mrb[0].mxu0
        %v668 = vpop.f32.mrb[0].mxu0
        %669 = vdwg.mxu0
        %v674 = vunpack.c.l.b16 %v574
        %v675 = vunpack.c.l.b16 %v575
        %v676 = vunpack.c.l.b16 %v576
        %v677 = vunpack.c.l.b16 %v577
        %v678 = vpack.c.b16 %v675, %v674
        %v679 = vpack.c.b16 %v677, %v676
        %682 = vmatprep.subr.bf16.mxu0 0
        %683 = vmatpush1.bf16.msra.mxu0 %v678
        %684 = vmatprep.subr.bf16.mxu0 0
        %685 = vmatpush1.bf16.msra.mxu0 %v679
        %686 = vmatprep.subr.bf16.mxu0 0
        %687 = vmatpush1.bf16.msra.mxu0 0
        %688 = vmatprep.subr.bf16.mxu0 0
        %689 = vmatpush1.bf16.msra.mxu0 0
        %690 = vmatprep.subr.bf16.mxu0 0
        %691 = vmatpush1.bf16.msra.mxu0 0
        %692 = vmatprep.subr.bf16.mxu0 0
        %693 = vmatpush1.bf16.msra.mxu0 0
        %694 = vmatprep.subr.bf16.mxu0 0
        %695 = vmatpush1.bf16.msra.mxu0 0
        %696 = vmatprep.subr.bf16.mxu0 0
        %697 = vmatpush1.bf16.msra.mxu0 0
        %698 = vmatprep.subr.bf16.mxu0 0
        %699 = vmatpush1.bf16.msra.mxu0 0
        %700 = vmatprep.subr.bf16.mxu0 0
        %701 = vmatpush1.bf16.msra.mxu0 0
        %702 = vmatprep.subr.bf16.mxu0 0
        %703 = vmatpush1.bf16.msra.mxu0 0
        %704 = vmatprep.subr.bf16.mxu0 0
        %705 = vmatpush1.bf16.msra.mxu0 0
        %706 = vmatprep.subr.bf16.mxu0 0
        %707 = vmatpush1.bf16.msra.mxu0 0
        %708 = vmatprep.subr.bf16.mxu0 0
        %709 = vmatpush1.bf16.msra.mxu0 0
        %710 = vmatprep.subr.bf16.mxu0 0
        %711 = vmatpush1.bf16.msra.mxu0 0
        %712 = vmatprep.subr.bf16.mxu0 0
        %713 = vmatpush1.bf16.msra.mxu0 0
        %714 = vmatprep.mubr.bf16.mxu0 0
        %715 = vmatmul.mubr.bf16.gmra.mrb[0].mxu0 %v628
        %v716 = vpop.f32.mrb[0].mxu0
        %v717 = vadd.f32 %v602, %v716
        %v718 = vpop.f32.mrb[0].mxu0
        %v719 = vpop.f32.mrb[0].mxu0
        %v720 = vpop.f32.mrb[0].mxu0
        %721 = vdwg.mxu0
        %v726 = vunpack.c.l.b16 %v578
        %v727 = vunpack.c.l.b16 %v579
        %v728 = vunpack.c.l.b16 %v580
        %v729 = vunpack.c.l.b16 %v581
        %v730 = vpack.c.b16 %v727, %v726
        %v731 = vpack.c.b16 %v729, %v728
        %734 = vmatprep.subr.bf16.mxu0 0
        %735 = vmatpush1.bf16.msra.mxu0 %v730
        %736 = vmatprep.subr.bf16.mxu0 0
        %737 = vmatpush1.bf16.msra.mxu0 %v731
        %738 = vmatprep.subr.bf16.mxu0 0
        %739 = vmatpush1.bf16.msra.mxu0 0
        %740 = vmatprep.subr.bf16.mxu0 0
        %741 = vmatpush1.bf16.msra.mxu0 0
        %742 = vmatprep.subr.bf16.mxu0 0
        %743 = vmatpush1.bf16.msra.mxu0 0
        %744 = vmatprep.subr.bf16.mxu0 0
        %745 = vmatpush1.bf16.msra.mxu0 0
        %746 = vmatprep.subr.bf16.mxu0 0
        %747 = vmatpush1.bf16.msra.mxu0 0
        %748 = vmatprep.subr.bf16.mxu0 0
        %749 = vmatpush1.bf16.msra.mxu0 0
        %750 = vmatprep.subr.bf16.mxu0 0
        %751 = vmatpush1.bf16.msra.mxu0 0
        %752 = vmatprep.subr.bf16.mxu0 0
        %753 = vmatpush1.bf16.msra.mxu0 0
        %754 = vmatprep.subr.bf16.mxu0 0
        %755 = vmatpush1.bf16.msra.mxu0 0
        %756 = vmatprep.subr.bf16.mxu0 0
        %757 = vmatpush1.bf16.msra.mxu0 0
        %758 = vmatprep.subr.bf16.mxu0 0
        %759 = vmatpush1.bf16.msra.mxu0 0
        %760 = vmatprep.subr.bf16.mxu0 0
        %761 = vmatpush1.bf16.msra.mxu0 0
        %762 = vmatprep.subr.bf16.mxu0 0
        %763 = vmatpush1.bf16.msra.mxu0 0
        %764 = vmatprep.subr.bf16.mxu0 0
        %765 = vmatpush1.bf16.msra.mxu0 0
        %766 = vmatprep.mubr.bf16.mxu0 0
        %767 = vmatmul.mubr.bf16.gmra.mrb[0].mxu0 %v628
        %v768 = vpop.f32.mrb[0].mxu0
        %v769 = vadd.f32 %v606, %v768
        %v770 = vpop.f32.mrb[0].mxu0
        %v771 = vpop.f32.mrb[0].mxu0
        %v772 = vpop.f32.mrb[0].mxu0
        %773 = vdwg.mxu0
        %v778 = vunpack.c.l.b16 %v582
        %v779 = vunpack.c.l.b16 %v583
        %v780 = vunpack.c.l.b16 %v584
        %v781 = vunpack.c.l.b16 %v585
        %v782 = vpack.c.b16 %v779, %v778
        %v783 = vpack.c.b16 %v781, %v780
        %786 = vmatprep.subr.bf16.mxu0 0
        %787 = vmatpush1.bf16.msra.mxu0 %v782
        %788 = vmatprep.subr.bf16.mxu0 0
        %789 = vmatpush1.bf16.msra.mxu0 %v783
        %790 = vmatprep.subr.bf16.mxu0 0
        %791 = vmatpush1.bf16.msra.mxu0 0
        %792 = vmatprep.subr.bf16.mxu0 0
        %793 = vmatpush1.bf16.msra.mxu0 0
        %794 = vmatprep.subr.bf16.mxu0 0
        %795 = vmatpush1.bf16.msra.mxu0 0
        %796 = vmatprep.subr.bf16.mxu0 0
        %797 = vmatpush1.bf16.msra.mxu0 0
        %798 = vmatprep.subr.bf16.mxu0 0
        %799 = vmatpush1.bf16.msra.mxu0 0
        %800 = vmatprep.subr.bf16.mxu0 0
        %801 = vmatpush1.bf16.msra.mxu0 0
        %802 = vmatprep.subr.bf16.mxu0 0
        %803 = vmatpush1.bf16.msra.mxu0 0
        %804 = vmatprep.subr.bf16.mxu0 0
        %805 = vmatpush1.bf16.msra.mxu0 0
        %806 = vmatprep.subr.bf16.mxu0 0
        %807 = vmatpush1.bf16.msra.mxu0 0
        %808 = vmatprep.subr.bf16.mxu0 0
        %809 = vmatpush1.bf16.msra.mxu0 0
        %810 = vmatprep.subr.bf16.mxu0 0
        %811 = vmatpush1.bf16.msra.mxu0 0
        %812 = vmatprep.subr.bf16.mxu0 0
        %813 = vmatpush1.bf16.msra.mxu0 0
        %814 = vmatprep.subr.bf16.mxu0 0
        %815 = vmatpush1.bf16.msra.mxu0 0
        %816 = vmatprep.subr.bf16.mxu0 0
        %817 = vmatpush1.bf16.msra.mxu0 0
        %818 = vmatprep.mubr.bf16.mxu0 0
        %819 = vmatmul.mubr.bf16.gmra.mrb[0].mxu0 %v628
        %v820 = vpop.f32.mrb[0].mxu0
        %v821 = vadd.f32 %v610, %v820
        %v822 = vpop.f32.mrb[0].mxu0
        %v823 = vpop.f32.mrb[0].mxu0
        %v824 = vpop.f32.mrb[0].mxu0
        %825 = vdwg.mxu0
        %v826 = vld [vmem:[%s307] sm:$0xff]
        %v827 = vpack.c.bf16 %v826, %v826
        %s828 = scalar_lea.vmem %s3, 128
        %v829 = vld [vmem:[%s828] sm:$0xf]
        %v830 = vld [vmem:[%s828 + $0x4] sm:$0xf]
        %v831 = vld [vmem:[%s828 + $0x8] sm:$0xf]
        %v832 = vld [vmem:[%s828 + $0xc] sm:$0xf]
        %v833 = vld [vmem:[%s828 + $0x10] sm:$0xf]
        %v834 = vld [vmem:[%s828 + $0x14] sm:$0xf]
        %v835 = vld [vmem:[%s828 + $0x18] sm:$0xf]
        %v836 = vld [vmem:[%s828 + $0x1c] sm:$0xf]
        %v837 = vld [vmem:[%s828 + $0x20] sm:$0xf]
        %v838 = vld [vmem:[%s828 + $0x24] sm:$0xf]
        %v839 = vld [vmem:[%s828 + $0x28] sm:$0xf]
        %v840 = vld [vmem:[%s828 + $0x2c] sm:$0xf]
        %v841 = vld [vmem:[%s828 + $0x30] sm:$0xf]
        %v842 = vld [vmem:[%s828 + $0x34] sm:$0xf]
        %v843 = vld [vmem:[%s828 + $0x38] sm:$0xf]
        %v844 = vld [vmem:[%s828 + $0x3c] sm:$0xf]
        %s845 = scalar_lea.vmem %s4, 8
        %v846 = vld [vmem:[%s845] sm:$0x1]
        %v847 = vld [vmem:[%s845 + $0x1] sm:$0x1]
        %v848 = vld [vmem:[%s845 + $0x2] sm:$0x1]
        %v849 = vld [vmem:[%s845 + $0x3] sm:$0x1]
        %v854 = vlaneseq
        %v855 = vshrl.u32 %v854, 7
        %v856 = vsub.s32 0, %v855
        %v857 = vrot.slane %v846, %v856
        %v858 = vlaneseq
        %v859 = vshrl.u32 %v858, 7
        %v860 = vsub.s32 0, %v859
        %v861 = vrot.slane %v847, %v860
        %v862 = vlaneseq
        %v863 = vshrl.u32 %v862, 7
        %v864 = vsub.s32 0, %v863
        %v865 = vrot.slane %v848, %v864
        %v866 = vlaneseq
        %v867 = vshrl.u32 %v866, 7
        %v868 = vsub.s32 0, %v867
        %v869 = vrot.slane %v849, %v868
        %v878 = vunpack.c.l.b16 %v829
        %v879 = vunpack.c.l.b16 %v830
        %v880 = vunpack.c.l.b16 %v831
        %v881 = vunpack.c.l.b16 %v832
        %v882 = vpack.c.b16 %v879, %v878
        %v883 = vpack.c.b16 %v881, %v880
        %v887 = vsel %vm367, %v827, 0
        %889 = vmatprep.subr.bf16.mxu0 0
        %890 = vmatpush1.bf16.msra.mxu0 %v882
        %891 = vmatprep.subr.bf16.mxu0 0
        %892 = vmatpush1.bf16.msra.mxu0 %v883
        %893 = vmatprep.subr.bf16.mxu0 0
        %894 = vmatpush1.bf16.msra.mxu0 0
        %895 = vmatprep.subr.bf16.mxu0 0
        %896 = vmatpush1.bf16.msra.mxu0 0
        %897 = vmatprep.subr.bf16.mxu0 0
        %898 = vmatpush1.bf16.msra.mxu0 0
        %899 = vmatprep.subr.bf16.mxu0 0
        %900 = vmatpush1.bf16.msra.mxu0 0
        %901 = vmatprep.subr.bf16.mxu0 0
        %902 = vmatpush1.bf16.msra.mxu0 0
        %903 = vmatprep.subr.bf16.mxu0 0
        %904 = vmatpush1.bf16.msra.mxu0 0
        %905 = vmatprep.subr.bf16.mxu0 0
        %906 = vmatpush1.bf16.msra.mxu0 0
        %907 = vmatprep.subr.bf16.mxu0 0
        %908 = vmatpush1.bf16.msra.mxu0 0
        %909 = vmatprep.subr.bf16.mxu0 0
        %910 = vmatpush1.bf16.msra.mxu0 0
        %911 = vmatprep.subr.bf16.mxu0 0
        %912 = vmatpush1.bf16.msra.mxu0 0
        %913 = vmatprep.subr.bf16.mxu0 0
        %914 = vmatpush1.bf16.msra.mxu0 0
        %915 = vmatprep.subr.bf16.mxu0 0
        %916 = vmatpush1.bf16.msra.mxu0 0
        %917 = vmatprep.subr.bf16.mxu0 0
        %918 = vmatpush1.bf16.msra.mxu0 0
        %919 = vmatprep.subr.bf16.mxu0 0
        %920 = vmatpush1.bf16.msra.mxu0 0
        %921 = vmatprep.mubr.bf16.mxu0 0
        %922 = vmatmul.mubr.bf16.gmra.mrb[0].mxu0 %v887
        %v923 = vpop.f32.mrb[0].mxu0
        %v924 = vadd.f32 %v857, %v923
        %v925 = vpop.f32.mrb[0].mxu0
        %v926 = vpop.f32.mrb[0].mxu0
        %v927 = vpop.f32.mrb[0].mxu0
        %928 = vdwg.mxu0
        %v933 = vunpack.c.l.b16 %v833
        %v934 = vunpack.c.l.b16 %v834
        %v935 = vunpack.c.l.b16 %v835
        %v936 = vunpack.c.l.b16 %v836
        %v937 = vpack.c.b16 %v934, %v933
        %v938 = vpack.c.b16 %v936, %v935
        %941 = vmatprep.subr.bf16.mxu0 0
        %942 = vmatpush1.bf16.msra.mxu0 %v937
        %943 = vmatprep.subr.bf16.mxu0 0
        %944 = vmatpush1.bf16.msra.mxu0 %v938
        %945 = vmatprep.subr.bf16.mxu0 0
        %946 = vmatpush1.bf16.msra.mxu0 0
        %947 = vmatprep.subr.bf16.mxu0 0
        %948 = vmatpush1.bf16.msra.mxu0 0
        %949 = vmatprep.subr.bf16.mxu0 0
        %950 = vmatpush1.bf16.msra.mxu0 0
        %951 = vmatprep.subr.bf16.mxu0 0
        %952 = vmatpush1.bf16.msra.mxu0 0
        %953 = vmatprep.subr.bf16.mxu0 0
        %954 = vmatpush1.bf16.msra.mxu0 0
        %955 = vmatprep.subr.bf16.mxu0 0
        %956 = vmatpush1.bf16.msra.mxu0 0
        %957 = vmatprep.subr.bf16.mxu0 0
        %958 = vmatpush1.bf16.msra.mxu0 0
        %959 = vmatprep.subr.bf16.mxu0 0
        %960 = vmatpush1.bf16.msra.mxu0 0
        %961 = vmatprep.subr.bf16.mxu0 0
        %962 = vmatpush1.bf16.msra.mxu0 0
        %963 = vmatprep.subr.bf16.mxu0 0
        %964 = vmatpush1.bf16.msra.mxu0 0
        %965 = vmatprep.subr.bf16.mxu0 0
        %966 = vmatpush1.bf16.msra.mxu0 0
        %967 = vmatprep.subr.bf16.mxu0 0
        %968 = vmatpush1.bf16.msra.mxu0 0
        %969 = vmatprep.subr.bf16.mxu0 0
        %970 = vmatpush1.bf16.msra.mxu0 0
        %971 = vmatprep.subr.bf16.mxu0 0
        %972 = vmatpush1.bf16.msra.mxu0 0
        %973 = vmatprep.mubr.bf16.mxu0 0
        %974 = vmatmul.mubr.bf16.gmra.mrb[0].mxu0 %v887
        %v975 = vpop.f32.mrb[0].mxu0
        %v976 = vadd.f32 %v861, %v975
        %v977 = vpop.f32.mrb[0].mxu0
        %v978 = vpop.f32.mrb[0].mxu0
        %v979 = vpop.f32.mrb[0].mxu0
        %980 = vdwg.mxu0
        %v985 = vunpack.c.l.b16 %v837
        %v986 = vunpack.c.l.b16 %v838
        %v987 = vunpack.c.l.b16 %v839
        %v988 = vunpack.c.l.b16 %v840
        %v989 = vpack.c.b16 %v986, %v985
        %v990 = vpack.c.b16 %v988, %v987
        %993 = vmatprep.subr.bf16.mxu0 0
        %994 = vmatpush1.bf16.msra.mxu0 %v989
        %995 = vmatprep.subr.bf16.mxu0 0
        %996 = vmatpush1.bf16.msra.mxu0 %v990
        %997 = vmatprep.subr.bf16.mxu0 0
        %998 = vmatpush1.bf16.msra.mxu0 0
        %999 = vmatprep.subr.bf16.mxu0 0
        %1000 = vmatpush1.bf16.msra.mxu0 0
        %1001 = vmatprep.subr.bf16.mxu0 0
        %1002 = vmatpush1.bf16.msra.mxu0 0
        %1003 = vmatprep.subr.bf16.mxu0 0
        %1004 = vmatpush1.bf16.msra.mxu0 0
        %1005 = vmatprep.subr.bf16.mxu0 0
        %1006 = vmatpush1.bf16.msra.mxu0 0
        %1007 = vmatprep.subr.bf16.mxu0 0
        %1008 = vmatpush1.bf16.msra.mxu0 0
        %1009 = vmatprep.subr.bf16.mxu0 0
        %1010 = vmatpush1.bf16.msra.mxu0 0
        %1011 = vmatprep.subr.bf16.mxu0 0
        %1012 = vmatpush1.bf16.msra.mxu0 0
        %1013 = vmatprep.subr.bf16.mxu0 0
        %1014 = vmatpush1.bf16.msra.mxu0 0
        %1015 = vmatprep.subr.bf16.mxu0 0
        %1016 = vmatpush1.bf16.msra.mxu0 0
        %1017 = vmatprep.subr.bf16.mxu0 0
        %1018 = vmatpush1.bf16.msra.mxu0 0
        %1019 = vmatprep.subr.bf16.mxu0 0
        %1020 = vmatpush1.bf16.msra.mxu0 0
        %1021 = vmatprep.subr.bf16.mxu0 0
        %1022 = vmatpush1.bf16.msra.mxu0 0
        %1023 = vmatprep.subr.bf16.mxu0 0
        %1024 = vmatpush1.bf16.msra.mxu0 0
        %1025 = vmatprep.mubr.bf16.mxu0 0
        %1026 = vmatmul.mubr.bf16.gmra.mrb[0].mxu0 %v887
        %v1027 = vpop.f32.mrb[0].mxu0
        %v1028 = vadd.f32 %v865, %v1027
        %v1029 = vpop.f32.mrb[0].mxu0
        %v1030 = vpop.f32.mrb[0].mxu0
        %v1031 = vpop.f32.mrb[0].mxu0
        %1032 = vdwg.mxu0
        %v1037 = vunpack.c.l.b16 %v841
        %v1038 = vunpack.c.l.b16 %v842
        %v1039 = vunpack.c.l.b16 %v843
        %v1040 = vunpack.c.l.b16 %v844
        %v1041 = vpack.c.b16 %v1038, %v1037
        %v1042 = vpack.c.b16 %v1040, %v1039
        %1045 = vmatprep.subr.bf16.mxu0 0
        %1046 = vmatpush1.bf16.msra.mxu0 %v1041
        %1047 = vmatprep.subr.bf16.mxu0 0
        %1048 = vmatpush1.bf16.msra.mxu0 %v1042
        %1049 = vmatprep.subr.bf16.mxu0 0
        %1050 = vmatpush1.bf16.msra.mxu0 0
        %1051 = vmatprep.subr.bf16.mxu0 0
        %1052 = vmatpush1.bf16.msra.mxu0 0
        %1053 = vmatprep.subr.bf16.mxu0 0
        %1054 = vmatpush1.bf16.msra.mxu0 0
        %1055 = vmatprep.subr.bf16.mxu0 0
        %1056 = vmatpush1.bf16.msra.mxu0 0
        %1057 = vmatprep.subr.bf16.mxu0 0
        %1058 = vmatpush1.bf16.msra.mxu0 0
        %1059 = vmatprep.subr.bf16.mxu0 0
        %1060 = vmatpush1.bf16.msra.mxu0 0
        %1061 = vmatprep.subr.bf16.mxu0 0
        %1062 = vmatpush1.bf16.msra.mxu0 0
        %1063 = vmatprep.subr.bf16.mxu0 0
        %1064 = vmatpush1.bf16.msra.mxu0 0
        %1065 = vmatprep.subr.bf16.mxu0 0
        %1066 = vmatpush1.bf16.msra.mxu0 0
        %1067 = vmatprep.subr.bf16.mxu0 0
        %1068 = vmatpush1.bf16.msra.mxu0 0
        %1069 = vmatprep.subr.bf16.mxu0 0
        %1070 = vmatpush1.bf16.msra.mxu0 0
        %1071 = vmatprep.subr.bf16.mxu0 0
        %1072 = vmatpush1.bf16.msra.mxu0 0
        %1073 = vmatprep.subr.bf16.mxu0 0
        %1074 = vmatpush1.bf16.msra.mxu0 0
        %1075 = vmatprep.subr.bf16.mxu0 0
        %1076 = vmatpush1.bf16.msra.mxu0 0
        %1077 = vmatprep.mubr.bf16.mxu0 0
        %1078 = vmatmul.mubr.bf16.gmra.mrb[0].mxu0 %v887
        %v1079 = vpop.f32.mrb[0].mxu0
        %v1080 = vadd.f32 %v869, %v1079
        %v1081 = vpop.f32.mrb[0].mxu0
        %v1082 = vpop.f32.mrb[0].mxu0
        %v1083 = vpop.f32.mrb[0].mxu0
        %1084 = vdwg.mxu0
        %v1085 = vpack.c.bf16 %v406, %v406
        %v1086 = vpack.c.bf16 %v458, %v458
        %v1087 = vpack.c.bf16 %v510, %v510
        %v1088 = vpack.c.bf16 %v562, %v562
        %v1089 = vpack.c.bf16 %v665, %v665
        %v1090 = vpack.c.bf16 %v717, %v717
        %v1091 = vpack.c.bf16 %v769, %v769
        %v1092 = vpack.c.bf16 %v821, %v821
        %vm1093 = vcmask 64512
        %v1095 = vsel %vm1093, %v1085, 0
        %v1098 = vsel %vm1093, %v1089, 0
        %1100 = vmatprep.subr.bf16.mxu0 0
        %1101 = vmatpush1.bf16.xpose.msra.mxu0 %v1098
        %1102 = vmatprep.subr.bf16.mxu0 0
        %1103 = vmatpush1.bf16.xpose.msra.mxu0 0
        %1104 = vmatprep.subr.bf16.mxu0 0
        %1105 = vmatpush1.bf16.xpose.msra.mxu0 0
        %1106 = vmatprep.subr.bf16.mxu0 0
        %1107 = vmatpush1.bf16.xpose.msra.mxu0 0
        %1108 = vmatprep.subr.bf16.mxu0 0
        %1109 = vmatpush1.bf16.xpose.msra.mxu0 0
        %1110 = vmatprep.subr.bf16.mxu0 0
        %1111 = vmatpush1.bf16.xpose.msra.mxu0 0
        %1112 = vmatprep.subr.bf16.mxu0 0
        %1113 = vmatpush1.bf16.xpose.msra.mxu0 0
        %1114 = vmatprep.subr.bf16.mxu0 0
        %1115 = vmatpush1.bf16.xpose.msra.mxu0 0
        %1116 = vmatprep.subr.bf16.mxu0 0
        %1117 = vmatpush1.bf16.xpose.msra.mxu0 0
        %1118 = vmatprep.subr.bf16.mxu0 0
        %1119 = vmatpush1.bf16.xpose.msra.mxu0 0
        %1120 = vmatprep.subr.bf16.mxu0 0
        %1121 = vmatpush1.bf16.xpose.msra.mxu0 0
        %1122 = vmatprep.subr.bf16.mxu0 0
        %1123 = vmatpush1.bf16.xpose.msra.mxu0 0
        %1124 = vmatprep.subr.bf16.mxu0 0
        %1125 = vmatpush1.bf16.xpose.msra.mxu0 0
        %1126 = vmatprep.subr.bf16.mxu0 0
        %1127 = vmatpush1.bf16.xpose.msra.mxu0 0
        %1128 = vmatprep.subr.bf16.mxu0 0
        %1129 = vmatpush1.bf16.xpose.msra.mxu0 0
        %1130 = vmatprep.subr.bf16.mxu0 0
        %1131 = vmatpush1.bf16.xpose.msra.mxu0 0
        %1132 = vmatprep.mubr.bf16.mxu0 0
        %1133 = vmatmul.mubr.bf16.gmra.mrb[0].mxu0 %v1095
        %v1134 = vpop.f32.mrb[0].mxu0
        %v1135 = vadd.f32 0.0, %v1134
        %v1136 = vpop.f32.mrb[0].mxu0
        %v1137 = vpop.f32.mrb[0].mxu0
        %v1138 = vpop.f32.mrb[0].mxu0
        %1139 = vdwg.mxu0
        %v1141 = vsel %vm1093, %v1086, 0
        %v1144 = vsel %vm1093, %v1090, 0
        %1146 = vmatprep.subr.bf16.mxu0 0
        %1147 = vmatpush1.bf16.xpose.msra.mxu0 %v1144
        %1148 = vmatprep.subr.bf16.mxu0 0
        %1149 = vmatpush1.bf16.xpose.msra.mxu0 0
        %1150 = vmatprep.subr.bf16.mxu0 0
        %1151 = vmatpush1.bf16.xpose.msra.mxu0 0
        %1152 = vmatprep.subr.bf16.mxu0 0
        %1153 = vmatpush1.bf16.xpose.msra.mxu0 0
        %1154 = vmatprep.subr.bf16.mxu0 0
        %1155 = vmatpush1.bf16.xpose.msra.mxu0 0
        %1156 = vmatprep.subr.bf16.mxu0 0
        %1157 = vmatpush1.bf16.xpose.msra.mxu0 0
        %1158 = vmatprep.subr.bf16.mxu0 0
        %1159 = vmatpush1.bf16.xpose.msra.mxu0 0
        %1160 = vmatprep.subr.bf16.mxu0 0
        %1161 = vmatpush1.bf16.xpose.msra.mxu0 0
        %1162 = vmatprep.subr.bf16.mxu0 0
        %1163 = vmatpush1.bf16.xpose.msra.mxu0 0
        %1164 = vmatprep.subr.bf16.mxu0 0
        %1165 = vmatpush1.bf16.xpose.msra.mxu0 0
        %1166 = vmatprep.subr.bf16.mxu0 0
        %1167 = vmatpush1.bf16.xpose.msra.mxu0 0
        %1168 = vmatprep.subr.bf16.mxu0 0
        %1169 = vmatpush1.bf16.xpose.msra.mxu0 0
        %1170 = vmatprep.subr.bf16.mxu0 0
        %1171 = vmatpush1.bf16.xpose.msra.mxu0 0
        %1172 = vmatprep.subr.bf16.mxu0 0
        %1173 = vmatpush1.bf16.xpose.msra.mxu0 0
        %1174 = vmatprep.subr.bf16.mxu0 0
        %1175 = vmatpush1.bf16.xpose.msra.mxu0 0
        %1176 = vmatprep.subr.bf16.mxu0 0
        %1177 = vmatpush1.bf16.xpose.msra.mxu0 0
        %1178 = vmatprep.mubr.bf16.mxu0 0
        %1179 = vmatmul.mubr.bf16.gmra.mrb[0].mxu0 %v1141
        %v1180 = vpop.f32.mrb[0].mxu0
        %v1181 = vadd.f32 0.0, %v1180
        %v1182 = vpop.f32.mrb[0].mxu0
        %v1183 = vpop.f32.mrb[0].mxu0
        %v1184 = vpop.f32.mrb[0].mxu0
        %1185 = vdwg.mxu0
        %v1187 = vsel %vm1093, %v1087, 0
        %v1190 = vsel %vm1093, %v1091, 0
        %1192 = vmatprep.subr.bf16.mxu0 0
        %1193 = vmatpush1.bf16.xpose.msra.mxu0 %v1190
        %1194 = vmatprep.subr.bf16.mxu0 0
        %1195 = vmatpush1.bf16.xpose.msra.mxu0 0
        %1196 = vmatprep.subr.bf16.mxu0 0
        %1197 = vmatpush1.bf16.xpose.msra.mxu0 0
        %1198 = vmatprep.subr.bf16.mxu0 0
        %1199 = vmatpush1.bf16.xpose.msra.mxu0 0
        %1200 = vmatprep.subr.bf16.mxu0 0
        %1201 = vmatpush1.bf16.xpose.msra.mxu0 0
        %1202 = vmatprep.subr.bf16.mxu0 0
        %1203 = vmatpush1.bf16.xpose.msra.mxu0 0
        %1204 = vmatprep.subr.bf16.mxu0 0
        %1205 = vmatpush1.bf16.xpose.msra.mxu0 0
        %1206 = vmatprep.subr.bf16.mxu0 0
        %1207 = vmatpush1.bf16.xpose.msra.mxu0 0
        %1208 = vmatprep.subr.bf16.mxu0 0
        %1209 = vmatpush1.bf16.xpose.msra.mxu0 0
        %1210 = vmatprep.subr.bf16.mxu0 0
        %1211 = vmatpush1.bf16.xpose.msra.mxu0 0
        %1212 = vmatprep.subr.bf16.mxu0 0
        %1213 = vmatpush1.bf16.xpose.msra.mxu0 0
        %1214 = vmatprep.subr.bf16.mxu0 0
        %1215 = vmatpush1.bf16.xpose.msra.mxu0 0
        %1216 = vmatprep.subr.bf16.mxu0 0
        %1217 = vmatpush1.bf16.xpose.msra.mxu0 0
        %1218 = vmatprep.subr.bf16.mxu0 0
        %1219 = vmatpush1.bf16.xpose.msra.mxu0 0
        %1220 = vmatprep.subr.bf16.mxu0 0
        %1221 = vmatpush1.bf16.xpose.msra.mxu0 0
        %1222 = vmatprep.subr.bf16.mxu0 0
        %1223 = vmatpush1.bf16.xpose.msra.mxu0 0
        %1224 = vmatprep.mubr.bf16.mxu0 0
        %1225 = vmatmul.mubr.bf16.gmra.mrb[0].mxu0 %v1187
        %v1226 = vpop.f32.mrb[0].mxu0
        %v1227 = vadd.f32 0.0, %v1226
        %v1228 = vpop.f32.mrb[0].mxu0
        %v1229 = vpop.f32.mrb[0].mxu0
        %v1230 = vpop.f32.mrb[0].mxu0
        %1231 = vdwg.mxu0
        %v1233 = vsel %vm1093, %v1088, 0
        %v1236 = vsel %vm1093, %v1092, 0
        %1238 = vmatprep.subr.bf16.mxu0 0
        %1239 = vmatpush1.bf16.xpose.msra.mxu0 %v1236
        %1240 = vmatprep.subr.bf16.mxu0 0
        %1241 = vmatpush1.bf16.xpose.msra.mxu0 0
        %1242 = vmatprep.subr.bf16.mxu0 0
        %1243 = vmatpush1.bf16.xpose.msra.mxu0 0
        %1244 = vmatprep.subr.bf16.mxu0 0
        %1245 = vmatpush1.bf16.xpose.msra.mxu0 0
        %1246 = vmatprep.subr.bf16.mxu0 0
        %1247 = vmatpush1.bf16.xpose.msra.mxu0 0
        %1248 = vmatprep.subr.bf16.mxu0 0
        %1249 = vmatpush1.bf16.xpose.msra.mxu0 0
        %1250 = vmatprep.subr.bf16.mxu0 0
        %1251 = vmatpush1.bf16.xpose.msra.mxu0 0
        %1252 = vmatprep.subr.bf16.mxu0 0
        %1253 = vmatpush1.bf16.xpose.msra.mxu0 0
        %1254 = vmatprep.subr.bf16.mxu0 0
        %1255 = vmatpush1.bf16.xpose.msra.mxu0 0
        %1256 = vmatprep.subr.bf16.mxu0 0
        %1257 = vmatpush1.bf16.xpose.msra.mxu0 0
        %1258 = vmatprep.subr.bf16.mxu0 0
        %1259 = vmatpush1.bf16.xpose.msra.mxu0 0
        %1260 = vmatprep.subr.bf16.mxu0 0
        %1261 = vmatpush1.bf16.xpose.msra.mxu0 0
        %1262 = vmatprep.subr.bf16.mxu0 0
        %1263 = vmatpush1.bf16.xpose.msra.mxu0 0
        %1264 = vmatprep.subr.bf16.mxu0 0
        %1265 = vmatpush1.bf16.xpose.msra.mxu0 0
        %1266 = vmatprep.subr.bf16.mxu0 0
        %1267 = vmatpush1.bf16.xpose.msra.mxu0 0
        %1268 = vmatprep.subr.bf16.mxu0 0
        %1269 = vmatpush1.bf16.xpose.msra.mxu0 0
        %1270 = vmatprep.mubr.bf16.mxu0 0
        %1271 = vmatmul.mubr.bf16.gmra.mrb[0].mxu0 %v1233
        %v1272 = vpop.f32.mrb[0].mxu0
        %v1273 = vadd.f32 0.0, %v1272
        %v1274 = vpop.f32.mrb[0].mxu0
        %v1275 = vpop.f32.mrb[0].mxu0
        %v1276 = vpop.f32.mrb[0].mxu0
        %1277 = vdwg.mxu0
        %v1278 = vsel %vm1093, %v1135, -inf
        %1279 = vmax.xlane.f32.xlu0 %v1278
        %v1280 = vpop.xlane.xlu0 %1279
        %v1281 = vsel %vm1093, %v1181, -inf
        %1282 = vmax.xlane.f32.xlu0 %v1281
        %v1283 = vpop.xlane.xlu0 %1282
        %v1284 = vsel %vm1093, %v1227, -inf
        %1285 = vmax.xlane.f32.xlu0 %v1284
        %v1286 = vpop.xlane.xlu0 %1285
        %v1287 = vsel %vm1093, %v1273, -inf
        %1288 = vmax.xlane.f32.xlu0 %v1287
        %v1289 = vpop.xlane.xlu0 %1288
        %v1290 = vsub.f32 %v1135, %v1280
        %v1291 = vsub.f32 %v1181, %v1283
        %v1292 = vsub.f32 %v1227, %v1286
        %v1293 = vsub.f32 %v1273, %v1289
        %v1294 = vmul.f32 %v1290, 1.442695
        %v1295 = vpow.pop %v1294
        %v1296 = vmul.f32 %v1291, 1.442695
        %v1297 = vpow.pop %v1296
        %v1298 = vmul.f32 %v1292, 1.442695
        %v1299 = vpow.pop %v1298
        %v1300 = vmul.f32 %v1293, 1.442695
        %v1301 = vpow.pop %v1300
        %v1302 = vsel %vm1093, %v1295, 0.0
        %1303 = vadd.xlane.f32.xlu0 %v1302
        %v1304 = vpop.xlane.xlu0 %1303
        %v1305 = vsel %vm1093, %v1297, 0.0
        %1306 = vadd.xlane.f32.xlu0 %v1305
        %v1307 = vpop.xlane.xlu0 %1306
        %v1308 = vsel %vm1093, %v1299, 0.0
        %1309 = vadd.xlane.f32.xlu0 %v1308
        %v1310 = vpop.xlane.xlu0 %1309
        %v1311 = vsel %vm1093, %v1301, 0.0
        %1312 = vadd.xlane.f32.xlu0 %v1311
        %v1313 = vpop.xlane.xlu0 %1312
        %v1314 = vrcp.pop %v1304
        %v1315 = vrcp.pop %v1307
        %v1316 = vrcp.pop %v1310
        %v1317 = vrcp.pop %v1313
        %v1318 = vmul.f32 %v1295, %v1314
        %v1319 = vmul.f32 %v1297, %v1315
        %v1320 = vmul.f32 %v1299, %v1316
        %v1321 = vmul.f32 %v1301, %v1317
        %v1322 = vpack.c.bf16 %v1318, %v1318
        %v1323 = vpack.c.bf16 %v1319, %v1319
        %v1324 = vpack.c.bf16 %v1320, %v1320
        %v1325 = vpack.c.bf16 %v1321, %v1321
        %v1326 = vpack.c.bf16 %v924, %v924
        %v1327 = vpack.c.bf16 %v976, %v976
        %v1328 = vpack.c.bf16 %v1028, %v1028
        %v1329 = vpack.c.bf16 %v1080, %v1080
        %v1331 = vsel %vm1093, %v1322, 0
        %vm1333 = vcmask 1043456
        %v1335 = vsel %vm1333, %v1326, 0
        %1337 = vmatprep.subr.bf16.mxu0 0
        %1338 = vmatpush1.bf16.msra.mxu0 %v1335
        %1339 = vmatprep.subr.bf16.mxu0 0
        %1340 = vmatpush1.bf16.msra.mxu0 0
        %1341 = vmatprep.subr.bf16.mxu0 0
        %1342 = vmatpush1.bf16.msra.mxu0 0
        %1343 = vmatprep.subr.bf16.mxu0 0
        %1344 = vmatpush1.bf16.msra.mxu0 0
        %1345 = vmatprep.subr.bf16.mxu0 0
        %1346 = vmatpush1.bf16.msra.mxu0 0
        %1347 = vmatprep.subr.bf16.mxu0 0
        %1348 = vmatpush1.bf16.msra.mxu0 0
        %1349 = vmatprep.subr.bf16.mxu0 0
        %1350 = vmatpush1.bf16.msra.mxu0 0
        %1351 = vmatprep.subr.bf16.mxu0 0
        %1352 = vmatpush1.bf16.msra.mxu0 0
        %1353 = vmatprep.subr.bf16.mxu0 0
        %1354 = vmatpush1.bf16.msra.mxu0 0
        %1355 = vmatprep.subr.bf16.mxu0 0
        %1356 = vmatpush1.bf16.msra.mxu0 0
        %1357 = vmatprep.subr.bf16.mxu0 0
        %1358 = vmatpush1.bf16.msra.mxu0 0
        %1359 = vmatprep.subr.bf16.mxu0 0
        %1360 = vmatpush1.bf16.msra.mxu0 0
        %1361 = vmatprep.subr.bf16.mxu0 0
        %1362 = vmatpush1.bf16.msra.mxu0 0
        %1363 = vmatprep.subr.bf16.mxu0 0
        %1364 = vmatpush1.bf16.msra.mxu0 0
        %1365 = vmatprep.subr.bf16.mxu0 0
        %1366 = vmatpush1.bf16.msra.mxu0 0
        %1367 = vmatprep.subr.bf16.mxu0 0
        %1368 = vmatpush1.bf16.msra.mxu0 0
        %1369 = vmatprep.mubr.bf16.mxu0 0
        %1370 = vmatmul.mubr.bf16.gmra.mrb[0].mxu0 %v1331
        %v1371 = vpop.f32.mrb[0].mxu0
        %v1372 = vadd.f32 0.0, %v1371
        %v1373 = vpop.f32.mrb[0].mxu0
        %v1374 = vpop.f32.mrb[0].mxu0
        %v1375 = vpop.f32.mrb[0].mxu0
        %1376 = vdwg.mxu0
        %v1378 = vsel %vm1093, %v1323, 0
        %v1381 = vsel %vm1333, %v1327, 0
        %1383 = vmatprep.subr.bf16.mxu0 0
        %1384 = vmatpush1.bf16.msra.mxu0 %v1381
        %1385 = vmatprep.subr.bf16.mxu0 0
        %1386 = vmatpush1.bf16.msra.mxu0 0
        %1387 = vmatprep.subr.bf16.mxu0 0
        %1388 = vmatpush1.bf16.msra.mxu0 0
        %1389 = vmatprep.subr.bf16.mxu0 0
        %1390 = vmatpush1.bf16.msra.mxu0 0
        %1391 = vmatprep.subr.bf16.mxu0 0
        %1392 = vmatpush1.bf16.msra.mxu0 0
        %1393 = vmatprep.subr.bf16.mxu0 0
        %1394 = vmatpush1.bf16.msra.mxu0 0
        %1395 = vmatprep.subr.bf16.mxu0 0
        %1396 = vmatpush1.bf16.msra.mxu0 0
        %1397 = vmatprep.subr.bf16.mxu0 0
        %1398 = vmatpush1.bf16.msra.mxu0 0
        %1399 = vmatprep.subr.bf16.mxu0 0
        %1400 = vmatpush1.bf16.msra.mxu0 0
        %1401 = vmatprep.subr.bf16.mxu0 0
        %1402 = vmatpush1.bf16.msra.mxu0 0
        %1403 = vmatprep.subr.bf16.mxu0 0
        %1404 = vmatpush1.bf16.msra.mxu0 0
        %1405 = vmatprep.subr.bf16.mxu0 0
        %1406 = vmatpush1.bf16.msra.mxu0 0
        %1407 = vmatprep.subr.bf16.mxu0 0
        %1408 = vmatpush1.bf16.msra.mxu0 0
        %1409 = vmatprep.subr.bf16.mxu0 0
        %1410 = vmatpush1.bf16.msra.mxu0 0
        %1411 = vmatprep.subr.bf16.mxu0 0
        %1412 = vmatpush1.bf16.msra.mxu0 0
        %1413 = vmatprep.subr.bf16.mxu0 0
        %1414 = vmatpush1.bf16.msra.mxu0 0
        %1415 = vmatprep.mubr.bf16.mxu0 0
        %1416 = vmatmul.mubr.bf16.gmra.mrb[0].mxu0 %v1378
        %v1417 = vpop.f32.mrb[0].mxu0
        %v1418 = vadd.f32 0.0, %v1417
        %v1419 = vpop.f32.mrb[0].mxu0
        %v1420 = vpop.f32.mrb[0].mxu0
        %v1421 = vpop.f32.mrb[0].mxu0
        %1422 = vdwg.mxu0
        %v1424 = vsel %vm1093, %v1324, 0
        %v1427 = vsel %vm1333, %v1328, 0
        %1429 = vmatprep.subr.bf16.mxu0 0
        %1430 = vmatpush1.bf16.msra.mxu0 %v1427
        %1431 = vmatprep.subr.bf16.mxu0 0
        %1432 = vmatpush1.bf16.msra.mxu0 0
        %1433 = vmatprep.subr.bf16.mxu0 0
        %1434 = vmatpush1.bf16.msra.mxu0 0
        %1435 = vmatprep.subr.bf16.mxu0 0
        %1436 = vmatpush1.bf16.msra.mxu0 0
        %1437 = vmatprep.subr.bf16.mxu0 0
        %1438 = vmatpush1.bf16.msra.mxu0 0
        %1439 = vmatprep.subr.bf16.mxu0 0
        %1440 = vmatpush1.bf16.msra.mxu0 0
        %1441 = vmatprep.subr.bf16.mxu0 0
        %1442 = vmatpush1.bf16.msra.mxu0 0
        %1443 = vmatprep.subr.bf16.mxu0 0
        %1444 = vmatpush1.bf16.msra.mxu0 0
        %1445 = vmatprep.subr.bf16.mxu0 0
        %1446 = vmatpush1.bf16.msra.mxu0 0
        %1447 = vmatprep.subr.bf16.mxu0 0
        %1448 = vmatpush1.bf16.msra.mxu0 0
        %1449 = vmatprep.subr.bf16.mxu0 0
        %1450 = vmatpush1.bf16.msra.mxu0 0
        %1451 = vmatprep.subr.bf16.mxu0 0
        %1452 = vmatpush1.bf16.msra.mxu0 0
        %1453 = vmatprep.subr.bf16.mxu0 0
        %1454 = vmatpush1.bf16.msra.mxu0 0
        %1455 = vmatprep.subr.bf16.mxu0 0
        %1456 = vmatpush1.bf16.msra.mxu0 0
        %1457 = vmatprep.subr.bf16.mxu0 0
        %1458 = vmatpush1.bf16.msra.mxu0 0
        %1459 = vmatprep.subr.bf16.mxu0 0
        %1460 = vmatpush1.bf16.msra.mxu0 0
        %1461 = vmatprep.mubr.bf16.mxu0 0
        %1462 = vmatmul.mubr.bf16.gmra.mrb[0].mxu0 %v1424
        %v1463 = vpop.f32.mrb[0].mxu0
        %v1464 = vadd.f32 0.0, %v1463
        %v1465 = vpop.f32.mrb[0].mxu0
        %v1466 = vpop.f32.mrb[0].mxu0
        %v1467 = vpop.f32.mrb[0].mxu0
        %1468 = vdwg.mxu0
        %v1470 = vsel %vm1093, %v1325, 0
        %v1473 = vsel %vm1333, %v1329, 0
        %1475 = vmatprep.subr.bf16.mxu0 0
        %1476 = vmatpush1.bf16.msra.mxu0 %v1473
        %1477 = vmatprep.subr.bf16.mxu0 0
        %1478 = vmatpush1.bf16.msra.mxu0 0
        %1479 = vmatprep.subr.bf16.mxu0 0
        %1480 = vmatpush1.bf16.msra.mxu0 0
        %1481 = vmatprep.subr.bf16.mxu0 0
        %1482 = vmatpush1.bf16.msra.mxu0 0
        %1483 = vmatprep.subr.bf16.mxu0 0
        %1484 = vmatpush1.bf16.msra.mxu0 0
        %1485 = vmatprep.subr.bf16.mxu0 0
        %1486 = vmatpush1.bf16.msra.mxu0 0
        %1487 = vmatprep.subr.bf16.mxu0 0
        %1488 = vmatpush1.bf16.msra.mxu0 0
        %1489 = vmatprep.subr.bf16.mxu0 0
        %1490 = vmatpush1.bf16.msra.mxu0 0
        %1491 = vmatprep.subr.bf16.mxu0 0
        %1492 = vmatpush1.bf16.msra.mxu0 0
        %1493 = vmatprep.subr.bf16.mxu0 0
        %1494 = vmatpush1.bf16.msra.mxu0 0
        %1495 = vmatprep.subr.bf16.mxu0 0
        %1496 = vmatpush1.bf16.msra.mxu0 0
        %1497 = vmatprep.subr.bf16.mxu0 0
        %1498 = vmatpush1.bf16.msra.mxu0 0
        %1499 = vmatprep.subr.bf16.mxu0 0
        %1500 = vmatpush1.bf16.msra.mxu0 0
        %1501 = vmatprep.subr.bf16.mxu0 0
        %1502 = vmatpush1.bf16.msra.mxu0 0
        %1503 = vmatprep.subr.bf16.mxu0 0
        %1504 = vmatpush1.bf16.msra.mxu0 0
        %1505 = vmatprep.subr.bf16.mxu0 0
        %1506 = vmatpush1.bf16.msra.mxu0 0
        %1507 = vmatprep.mubr.bf16.mxu0 0
        %1508 = vmatmul.mubr.bf16.gmra.mrb[0].mxu0 %v1470
        %v1509 = vpop.f32.mrb[0].mxu0
        %v1510 = vadd.f32 0.0, %v1509
        %v1511 = vpop.f32.mrb[0].mxu0
        %v1512 = vpop.f32.mrb[0].mxu0
        %v1513 = vpop.f32.mrb[0].mxu0
        %1514 = vdwg.mxu0
        %v1515 = vpack.c.bf16 %v1372, %v1372
        %v1516 = vpack.c.bf16 %v1418, %v1418
        %v1517 = vpack.c.bf16 %v1464, %v1464
        %v1518 = vpack.c.bf16 %v1510, %v1510
        %v1519 = vld [vmem:[%s5] sm:$0xf]
        %v1520 = vld [vmem:[%s5 + $0x4] sm:$0xf]
        %v1521 = vld [vmem:[%s5 + $0x8] sm:$0xf]
        %v1522 = vld [vmem:[%s5 + $0xc] sm:$0xf]
        %v1524 = vsel %vm1093, %v1515, 0
        %v1527 = vsel %vm1333, %v1519, 0
        %1529 = vmatprep.subr.bf16.mxu0 0
        %1530 = vmatpush1.bf16.msra.mxu0 %v1527
        %1531 = vmatprep.subr.bf16.mxu0 0
        %1532 = vmatpush1.bf16.msra.mxu0 0
        %1533 = vmatprep.subr.bf16.mxu0 0
        %1534 = vmatpush1.bf16.msra.mxu0 0
        %1535 = vmatprep.subr.bf16.mxu0 0
        %1536 = vmatpush1.bf16.msra.mxu0 0
        %1537 = vmatprep.subr.bf16.mxu0 0
        %1538 = vmatpush1.bf16.msra.mxu0 0
        %1539 = vmatprep.subr.bf16.mxu0 0
        %1540 = vmatpush1.bf16.msra.mxu0 0
        %1541 = vmatprep.subr.bf16.mxu0 0
        %1542 = vmatpush1.bf16.msra.mxu0 0
        %1543 = vmatprep.subr.bf16.mxu0 0
        %1544 = vmatpush1.bf16.msra.mxu0 0
        %1545 = vmatprep.subr.bf16.mxu0 0
        %1546 = vmatpush1.bf16.msra.mxu0 0
        %1547 = vmatprep.subr.bf16.mxu0 0
        %1548 = vmatpush1.bf16.msra.mxu0 0
        %1549 = vmatprep.subr.bf16.mxu0 0
        %1550 = vmatpush1.bf16.msra.mxu0 0
        %1551 = vmatprep.subr.bf16.mxu0 0
        %1552 = vmatpush1.bf16.msra.mxu0 0
        %1553 = vmatprep.subr.bf16.mxu0 0
        %1554 = vmatpush1.bf16.msra.mxu0 0
        %1555 = vmatprep.subr.bf16.mxu0 0
        %1556 = vmatpush1.bf16.msra.mxu0 0
        %1557 = vmatprep.subr.bf16.mxu0 0
        %1558 = vmatpush1.bf16.msra.mxu0 0
        %1559 = vmatprep.subr.bf16.mxu0 0
        %1560 = vmatpush1.bf16.msra.mxu0 0
        %1561 = vmatprep.mubr.bf16.mxu0 0
        %1562 = vmatmul.mubr.bf16.gmra.mrb[0].mxu0 %v1524
        %v1563 = vpop.f32.mrb[0].mxu0
        %v1564 = vadd.f32 0.0, %v1563
        %v1565 = vpop.f32.mrb[0].mxu0
        %v1566 = vpop.f32.mrb[0].mxu0
        %v1567 = vpop.f32.mrb[0].mxu0
        %1568 = vdwg.mxu0
        %v1570 = vsel %vm1093, %v1516, 0
        %v1573 = vsel %vm1333, %v1520, 0
        %1575 = vmatprep.subr.bf16.mxu0 0
        %1576 = vmatpush1.bf16.msra.mxu0 %v1573
        %1577 = vmatprep.subr.bf16.mxu0 0
        %1578 = vmatpush1.bf16.msra.mxu0 0
        %1579 = vmatprep.subr.bf16.mxu0 0
        %1580 = vmatpush1.bf16.msra.mxu0 0
        %1581 = vmatprep.subr.bf16.mxu0 0
        %1582 = vmatpush1.bf16.msra.mxu0 0
        %1583 = vmatprep.subr.bf16.mxu0 0
        %1584 = vmatpush1.bf16.msra.mxu0 0
        %1585 = vmatprep.subr.bf16.mxu0 0
        %1586 = vmatpush1.bf16.msra.mxu0 0
        %1587 = vmatprep.subr.bf16.mxu0 0
        %1588 = vmatpush1.bf16.msra.mxu0 0
        %1589 = vmatprep.subr.bf16.mxu0 0
        %1590 = vmatpush1.bf16.msra.mxu0 0
        %1591 = vmatprep.subr.bf16.mxu0 0
        %1592 = vmatpush1.bf16.msra.mxu0 0
        %1593 = vmatprep.subr.bf16.mxu0 0
        %1594 = vmatpush1.bf16.msra.mxu0 0
        %1595 = vmatprep.subr.bf16.mxu0 0
        %1596 = vmatpush1.bf16.msra.mxu0 0
        %1597 = vmatprep.subr.bf16.mxu0 0
        %1598 = vmatpush1.bf16.msra.mxu0 0
        %1599 = vmatprep.subr.bf16.mxu0 0
        %1600 = vmatpush1.bf16.msra.mxu0 0
        %1601 = vmatprep.subr.bf16.mxu0 0
        %1602 = vmatpush1.bf16.msra.mxu0 0
        %1603 = vmatprep.subr.bf16.mxu0 0
        %1604 = vmatpush1.bf16.msra.mxu0 0
        %1605 = vmatprep.subr.bf16.mxu0 0
        %1606 = vmatpush1.bf16.msra.mxu0 0
        %1607 = vmatprep.mubr.bf16.mxu0 0
        %1608 = vmatmul.mubr.bf16.gmra.mrb[0].mxu0 %v1570
        %v1609 = vpop.f32.mrb[0].mxu0
        %v1610 = vadd.f32 0.0, %v1609
        %v1611 = vpop.f32.mrb[0].mxu0
        %v1612 = vpop.f32.mrb[0].mxu0
        %v1613 = vpop.f32.mrb[0].mxu0
        %1614 = vdwg.mxu0
        %v1616 = vsel %vm1093, %v1517, 0
        %v1619 = vsel %vm1333, %v1521, 0
        %1621 = vmatprep.subr.bf16.mxu0 0
        %1622 = vmatpush1.bf16.msra.mxu0 %v1619
        %1623 = vmatprep.subr.bf16.mxu0 0
        %1624 = vmatpush1.bf16.msra.mxu0 0
        %1625 = vmatprep.subr.bf16.mxu0 0
        %1626 = vmatpush1.bf16.msra.mxu0 0
        %1627 = vmatprep.subr.bf16.mxu0 0
        %1628 = vmatpush1.bf16.msra.mxu0 0
        %1629 = vmatprep.subr.bf16.mxu0 0
        %1630 = vmatpush1.bf16.msra.mxu0 0
        %1631 = vmatprep.subr.bf16.mxu0 0
        %1632 = vmatpush1.bf16.msra.mxu0 0
        %1633 = vmatprep.subr.bf16.mxu0 0
        %1634 = vmatpush1.bf16.msra.mxu0 0
        %1635 = vmatprep.subr.bf16.mxu0 0
        %1636 = vmatpush1.bf16.msra.mxu0 0
        %1637 = vmatprep.subr.bf16.mxu0 0
        %1638 = vmatpush1.bf16.msra.mxu0 0
        %1639 = vmatprep.subr.bf16.mxu0 0
        %1640 = vmatpush1.bf16.msra.mxu0 0
        %1641 = vmatprep.subr.bf16.mxu0 0
        %1642 = vmatpush1.bf16.msra.mxu0 0
        %1643 = vmatprep.subr.bf16.mxu0 0
        %1644 = vmatpush1.bf16.msra.mxu0 0
        %1645 = vmatprep.subr.bf16.mxu0 0
        %1646 = vmatpush1.bf16.msra.mxu0 0
        %1647 = vmatprep.subr.bf16.mxu0 0
        %1648 = vmatpush1.bf16.msra.mxu0 0
        %1649 = vmatprep.subr.bf16.mxu0 0
        %1650 = vmatpush1.bf16.msra.mxu0 0
        %1651 = vmatprep.subr.bf16.mxu0 0
        %1652 = vmatpush1.bf16.msra.mxu0 0
        %1653 = vmatprep.mubr.bf16.mxu0 0
        %1654 = vmatmul.mubr.bf16.gmra.mrb[0].mxu0 %v1616
        %v1655 = vpop.f32.mrb[0].mxu0
        %v1656 = vadd.f32 0.0, %v1655
        %v1657 = vpop.f32.mrb[0].mxu0
        %v1658 = vpop.f32.mrb[0].mxu0
        %v1659 = vpop.f32.mrb[0].mxu0
        %1660 = vdwg.mxu0
        %v1662 = vsel %vm1093, %v1518, 0
        %v1665 = vsel %vm1333, %v1522, 0
        %1667 = vmatprep.subr.bf16.mxu0 0
        %1668 = vmatpush1.bf16.msra.mxu0 %v1665
        %1669 = vmatprep.subr.bf16.mxu0 0
        %1670 = vmatpush1.bf16.msra.mxu0 0
        %1671 = vmatprep.subr.bf16.mxu0 0
        %1672 = vmatpush1.bf16.msra.mxu0 0
        %1673 = vmatprep.subr.bf16.mxu0 0
        %1674 = vmatpush1.bf16.msra.mxu0 0
        %1675 = vmatprep.subr.bf16.mxu0 0
        %1676 = vmatpush1.bf16.msra.mxu0 0
        %1677 = vmatprep.subr.bf16.mxu0 0
        %1678 = vmatpush1.bf16.msra.mxu0 0
        %1679 = vmatprep.subr.bf16.mxu0 0
        %1680 = vmatpush1.bf16.msra.mxu0 0
        %1681 = vmatprep.subr.bf16.mxu0 0
        %1682 = vmatpush1.bf16.msra.mxu0 0
        %1683 = vmatprep.subr.bf16.mxu0 0
        %1684 = vmatpush1.bf16.msra.mxu0 0
        %1685 = vmatprep.subr.bf16.mxu0 0
        %1686 = vmatpush1.bf16.msra.mxu0 0
        %1687 = vmatprep.subr.bf16.mxu0 0
        %1688 = vmatpush1.bf16.msra.mxu0 0
        %1689 = vmatprep.subr.bf16.mxu0 0
        %1690 = vmatpush1.bf16.msra.mxu0 0
        %1691 = vmatprep.subr.bf16.mxu0 0
        %1692 = vmatpush1.bf16.msra.mxu0 0
        %1693 = vmatprep.subr.bf16.mxu0 0
        %1694 = vmatpush1.bf16.msra.mxu0 0
        %1695 = vmatprep.subr.bf16.mxu0 0
        %1696 = vmatpush1.bf16.msra.mxu0 0
        %1697 = vmatprep.subr.bf16.mxu0 0
        %1698 = vmatpush1.bf16.msra.mxu0 0
        %1699 = vmatprep.mubr.bf16.mxu0 0
        %1700 = vmatmul.mubr.bf16.gmra.mrb[0].mxu0 %v1662
        %v1701 = vpop.f32.mrb[0].mxu0
        %v1702 = vadd.f32 0.0, %v1701
        %v1703 = vpop.f32.mrb[0].mxu0
        %v1704 = vpop.f32.mrb[0].mxu0
        %v1705 = vpop.f32.mrb[0].mxu0
        %1706 = vdwg.mxu0
        %v1707 = vsel %vm367, %v1564, 0.0
        %v1708 = vsel %vm367, %v1610, 0.0
        %v1709 = vadd.f32 %v1707, %v1708
        %v1710 = vsel %vm367, %v1656, 0.0
        %v1711 = vadd.f32 %v1709, %v1710
        %v1712 = vsel %vm367, %v1702, 0.0
        %v1713 = vadd.f32 %v1711, %v1712
        %v1714 = vld [vmem:[%s6] sm:$0x1]
        %v1716 = vlaneseq
        %v1717 = vshrl.u32 %v1716, 7
        %v1718 = vsub.s32 0, %v1717
        %v1719 = vrot.slane %v1714, %v1718
        %v1721 = vadd.f32 %v1713, %v1719
        %1722 = vst.msk [vmem:[%s295] sm:$0xff] %vm367, %v1721
        %s1723 = sand.u32 %s191, 1
        %s1724 = scalar_lea.sflag [#allocation3], %s1723
        %s1725 = sand.u32 %s191, 1
        %s1726 = smul.addr %s1725, 8
        %s1727 = scalar_lea.vmem [#allocation2], %s1726
        // Predicated region
        $region49: #{tpu_custom_call.1} parent=47 // pred_check
          %p1728 = pneg %p201
        $region50: #{tpu_custom_call.1} parent=47 // pred_check_branch
          %1730 = sbr.rel (%p1728) target = $region52
        $region51: #{tpu_custom_call.1} parent=47 // pred_region
          %s1732 = ssub.s32 128, 128
          %1733 = vsyncadd %s1724, %s1732
          %s1734 = smul.addr %s21, 128
          %s1735 = scalar_lea.hbm %s7, %s1734
          %s1737 = sshll.u32 %s1727, 4
          %s1738 = int_to_ptr.vmem [resolvable:$true] %s1737
          %1740 = dma.vmem_to_hbm [thread:$0]  %s1738, 128, %s1735, %s1724
        $region52: #{tpu_custom_call.1} parent=47 // pred_fallthru
          _
      $region48: #{tpu_custom_call.1} parent=5 // pred_fallthru
        _
      %p1741 = scmp.le.s32.totalorder 2, %s16
      // Predicated region
      $region53: #{tpu_custom_call.1} parent=5 // pred_check
        %p1742 = pneg %p1741
      $region54: #{tpu_custom_call.1} parent=5 // pred_check_branch
        %1744 = sbr.rel (%p1742) target = $region56
      $region55: #{tpu_custom_call.1} parent=5 // pred_region
        %s1745 = ssub.s32 %s16, 2
        // Predicated region
        $region57: #{tpu_custom_call.1} parent=55 // pred_check
          %p1746 = pneg %p207
        $region58: #{tpu_custom_call.1} parent=55 // pred_check_branch
          %1748 = sbr.rel (%p1746) target = $region60
        $region59: #{tpu_custom_call.1} parent=55 // pred_region
          %s1749 = sand.u32 %s192, 1
          %s1750 = scalar_lea.sflag [#allocation3], %s1749
          %s1751 = sand.u32 %s192, 1
          %s1752 = smul.addr %s1751, 8
          %s1753 = scalar_lea.vmem [#allocation2], %s1752
          %1754 = dma.done %s1750, 128
        $region60: #{tpu_custom_call.1} parent=55 // pred_fallthru
          _
      $region56: #{tpu_custom_call.1} parent=5 // pred_fallthru
        _
    $region6: #{tpu_custom_call.1} parent=1 // loop_footer
      %s20 = sadd.s32 1, %s16
    $region7: #{tpu_custom_call.1} parent=1 // loop_footer_branch
      %15 = sbr.rel target = $region3
    $region8: #{tpu_custom_call.1} parent=1 // loop_exit
      _
    %1755 = vsyncpa [#allocation3], 1
    %s1756 = scalar_lea.sflag [#allocation3], 1
    %1757 = vsyncpa %s1756, 1

</llo_original>
